<compile_context>
chip_gen: v7x
topology: tpu7x:2x2x1
jax: 0.10.0
libtpu: 0.0.40
codegen_flags: <defaults>
</compile_context>

<pallas_src>
import functools
import math
import re

import jax
import jax.numpy as jnp
from jax import lax
from jax.experimental import pallas as pl
from jax.experimental.pallas import tpu as pltpu


# --------------------------------------------------------------------------- #
# Kernel: one grid step == Nb sequences; everything lives in VMEM.
# --------------------------------------------------------------------------- #
def _classifier_kernel(x_ref, pos_ref, we_ref, be_ref, wq_ref, wk_ref, wv_ref,
                       wo_ref, bo_ref, wc_ref, bc_ref, out_ref,
                       *, window_size, banded):
    f32, bf16 = jnp.float32, jnp.bfloat16
    R, _ = x_ref.shape                       # R = Nb * L rows (flattened slab)
    L, Ep = pos_ref.shape
    Nb = R // L
    w = window_size

    xb = x_ref[...].astype(bf16)                                      # (R, Fp)

    # feature_to_embed + bias + position embedding (pos stays (L, Ep); broadcast here).
    pos_flat = jnp.broadcast_to(pos_ref[...][None], (Nb, L, Ep)).reshape(R, Ep)
    h = jnp.dot(xb, we_ref[...], preferred_element_type=f32) + be_ref[...] + pos_flat
    hb = h.astype(bf16)

    # Q / K / V projections on the flattened slab (single head, no bias).  Kept in
    # f32: the banded attention below runs on the VPU/XLU (v5e has no bf16 VPU).
    q = jnp.dot(hb, wq_ref[...], preferred_element_type=f32).reshape(Nb, L, Ep)
    k = jnp.dot(hb, wk_ref[...], preferred_element_type=f32).reshape(Nb, L, Ep)
    v = jnp.dot(hb, wv_ref[...], preferred_element_type=f32).reshape(Nb, L, Ep)

    if banded:
        # Shift-based banded attention.  shift_l(t, o)[:, i] == t[:, i+o], zero rows
        # outside the sequence, so out-of-range window slots carry score exactly 0
        # (the PyTorch module's zero-filled attention_scores slots): they contribute
        # exp(0) terms to the softmax denominator but nothing to the output.
        def shift_l(t, o):
            if o == 0:
                return t
            if abs(o) >= L:
                return jnp.zeros_like(t)
            pad = jnp.zeros((Nb, abs(o), Ep), t.dtype)
            if o > 0:
                return jnp.concatenate([t[:, o:, :], pad], axis=1)
            return jnp.concatenate([pad, t[:, :L + o, :]], axis=1)

        offsets = list(range(-w, w + 1))
        scores = [jnp.sum(q * shift_l(k, o), axis=-1, keepdims=True)
                  for o in offsets]                                   # (Nb, L, 1) each
        m = scores[0]
        for s in scores[1:]:
            m = jnp.maximum(m, s)                                     # true row max
        ps = [jnp.exp(s - m) for s in scores]
        denom = ps[0]
        for p in ps[1:]:
            denom = denom + p                                         # >= 1 always
        inv = pl.reciprocal(denom, approx=True)
        ps = [p * inv for p in ps]                                    # scale (Nb,L,1), not (Nb,L,Ep)
        attn = ps[0] * shift_l(v, offsets[0])
        for p, o in zip(ps[1:], offsets[1:]):
            attn = attn + p * shift_l(v, o)                           # (Nb, L, Ep) f32
    else:
        # Dense (L, L) masked-softmax fallback (conservative lowering path).
        row = lax.broadcasted_iota(jnp.int32, (L, L), 0)
        col = lax.broadcasted_iota(jnp.int32, (L, L), 1)
        in_win = jnp.abs(col - row) <= w
        neg = jnp.where(in_win, 0.0, -1e30).astype(f32)               # (L, L)
        npad = (2.0 * w + 1.0) - jnp.sum(in_win.astype(f32), axis=1, keepdims=True)
        s = jnp.einsum('bqd,bkd->bqk', q.astype(bf16), k.astype(bf16),
                       preferred_element_type=f32) + neg[None]
        m0 = jnp.max(s, axis=-1, keepdims=True)
        # fold the zero-filled boundary slots into the max only where they exist
        m = jnp.where(npad[None] > 0, jnp.maximum(m0, 0.0), m0)
        p = jnp.exp(s - m)
        denom = jnp.sum(p, axis=-1, keepdims=True) + npad[None] * jnp.exp(-m)
        inv = pl.reciprocal(denom, approx=True)
        attn = jnp.einsum('bqk,bkd->bqd', (p * inv).astype(bf16), v.astype(bf16),
                          preferred_element_type=f32)                 # (Nb, L, Ep)

    # fc_out on the flattened slab.
    y = jnp.dot(attn.reshape(R, Ep).astype(bf16), wo_ref[...],
                preferred_element_type=f32) + bo_ref[...]             # (R, Ep) f32

    # Sequence mean as an f32 reduction (no zero-heavy averaging-matrix matmul).
    mean = jnp.mean(y.reshape(Nb, L, Ep), axis=1)                     # (Nb, Ep)

    # Classifier head; output lane-padded to Cp (multiple of 128) in the wrapper.
    logits = jnp.dot(mean.astype(bf16), wc_ref[...],
                     preferred_element_type=f32) + bc_ref[...]        # (Nb, Cp)
    out_ref[0] = logits.astype(out_ref.dtype)


# --------------------------------------------------------------------------- #
# Wrapper helpers
# --------------------------------------------------------------------------- #
def _round_up(a, b):
    return -(-a // b) * b


def _tpu_generation():
    try:
        kind = jax.devices()[0].device_kind.lower()
        m = re.search(r"(\d+)", kind)
        if m:
            return int(m.group(1))
    except Exception:
        pass
    return None


def _pick_batch_tile(N, L, e_pad, generation):
    """Sequences per grid step.

    v7x (or unknown): two TensorCores, 64 MiB VMEM -> ~512 rows/step with >=2
    (and even) grid steps so both cores get equal work.
    v5e/v6e: one TensorCore, 128 MiB VMEM -> fewer, fatter steps (amortize the
    ~0.35us/step pipeline overhead).  Rows/step additionally capped so the
    kernel's (rows, e_pad) f32 intermediate slabs fit comfortably.
    """
    big_vmem = generation in (5, 6)
    slab_budget = (48 if big_vmem else 20) << 20
    max_rows = max(8, slab_budget // (16 * e_pad * 4))
    if big_vmem:
        target_rows = min(2048, max_rows)
        nb = max(1, min(N, -(-target_rows // L)))
    else:
        target_rows = min(512, max_rows)
        n_steps = max(1, -(-(N * L) // target_rows))
        if N >= 2:
            n_steps = max(2, n_steps)
            if n_steps % 2:
                n_steps += 1                 # even split over the two TensorCores
        n_steps = min(n_steps, N)
        nb = -(-N // n_steps)
    # keep the flattened (Nb*L, Fp) x-block sublane-aligned
    mult = 8 // math.gcd(L, 8)
    nb = _round_up(nb, mult)
    return min(nb, _round_up(N, mult))


# --------------------------------------------------------------------------- #
# Wrapper
# --------------------------------------------------------------------------- #
def transformer_classifier_window(x, params, *, window_size, batch_tile=None):
    N, L, F = x.shape
    E = params["we"].shape[0]
    C = params["wc"].shape[0]
    f32, bf16 = jnp.float32, jnp.bfloat16

    Fp = _round_up(F, 128)
    Ep = _round_up(E, 128)
    Cp = _round_up(C, 128)

    gen = _tpu_generation()
    Nb = batch_tile if batch_tile is not None else _pick_batch_tile(N, L, Ep, gen)
    n_steps = -(-N // Nb)
    N_pad = n_steps * Nb
    vmem_limit = (100 << 20) if gen in (5, 6) else (48 << 20)

    # x: pad batch and feature dims, flatten to a lane-dense (N_pad*L, Fp) slab.
    x_p = jnp.zeros((N_pad, L, Fp), f32).at[:N, :, :F].set(x.astype(f32))
    x_flat = x_p.reshape(N_pad * L, Fp)

    # Grid-invariant constants/weights: zero-padded to lane-dense shapes,
    # pre-transposed to (in, out); matmul operands bf16, biases/pos f32.
    def pad2(a, rows, cols, dtype):
        return jnp.zeros((rows, cols), dtype).at[:a.shape[0], :a.shape[1]].set(a.astype(dtype))

    consts = (
        pad2(params["pos"][0, :L, :], L, Ep, f32),     # pos
        pad2(params["we"].T, Fp, Ep, bf16),            # we_t
        pad2(params["be"], 1, Ep, f32),                # be
        pad2(params["wq"].T, Ep, Ep, bf16),            # wq_t
        pad2(params["wk"].T, Ep, Ep, bf16),            # wk_t
        pad2(params["wv"].T, Ep, Ep, bf16),            # wv_t
        pad2(params["wo"].T, Ep, Ep, bf16),            # wo_t
        pad2(params["bo"], 1, Ep, f32),                # bo
        pad2(params["wc"].T, Ep, Cp, bf16),            # wc_t
        pad2(params["bc"], 1, Cp, f32),                # bc
    )

    def run(banded, single_buffer_consts):
        kernel = functools.partial(_classifier_kernel,
                                   window_size=window_size, banded=banded)

        def const_spec(shape):
            nd = len(shape)
            idx = lambda n, _nd=nd: (0,) * _nd
            if single_buffer_consts:
                # constants are DMA'd once; a single buffer halves their VMEM footprint
                return pl.BlockSpec(shape, idx, pipeline_mode=pl.Buffered(1))
            return pl.BlockSpec(shape, idx)

        in_specs = [pl.BlockSpec((Nb * L, Fp), lambda n: (n, 0))]
        in_specs += [const_spec(c.shape) for c in consts]
        out_spec = pl.BlockSpec((1, Nb, Cp), lambda n: (n, 0, 0))

        out = pl.pallas_call(
            kernel,
            out_shape=jax.ShapeDtypeStruct((n_steps, Nb, Cp), f32),
            grid_spec=pltpu.PrefetchScalarGridSpec(
                num_scalar_prefetch=0,
                grid=(n_steps,),
                in_specs=in_specs,
                out_specs=out_spec,
            ),
            compiler_params=pltpu.CompilerParams(
                dimension_semantics=("parallel",),
                vmem_limit_bytes=vmem_limit,
            ),
        )(x_flat, *consts)
        return jax.block_until_ready(out)

    # Preferred config first; fall back to progressively more conservative
    # lowering paths (default double-buffering, then dense masked softmax) so a
    # Mosaic-version quirk can never turn into a hard failure.
    last_err = None
    out = None
    for banded, single_buf in ((True, True), (True, False), (False, False)):
        try:
            out = run(banded, single_buf)
            break
        except Exception as e:                      # noqa: BLE001
            last_err = e
    if out is None:
        raise last_err

    return out.reshape(N_pad, Cp)[:N, :C]


# --------------------------------------------------------------------------- #
# Deterministic parameter init (PyTorch-like uniform(+-1/sqrt(fan_in)) / randn)
# --------------------------------------------------------------------------- #
def init_params(key, feature_dim, embed_dim, num_classes, max_seq_len):
    ks = jax.random.split(key, 10)

    def lin_w(k, out_d, in_d):
        b = 1.0 / math.sqrt(in_d)
        return jax.random.uniform(k, (out_d, in_d), jnp.float32, -b, b)

    def lin_b(k, out_d, in_d):
        b = 1.0 / math.sqrt(in_d)
        return jax.random.uniform(k, (1, out_d), jnp.float32, -b, b)

    return dict(
        we=lin_w(ks[0], embed_dim, feature_dim),
        be=lin_b(ks[1], embed_dim, feature_dim),
        pos=jax.random.normal(ks[2], (1, max_seq_len, embed_dim), jnp.float32),
        wq=lin_w(ks[3], embed_dim, embed_dim),
        wk=lin_w(ks[4], embed_dim, embed_dim),
        wv=lin_w(ks[5], embed_dim, embed_dim),
        wo=lin_w(ks[6], embed_dim, embed_dim),
        bo=lin_b(ks[7], embed_dim, embed_dim),
        wc=lin_w(ks[8], num_classes, embed_dim),
        bc=lin_b(ks[9], num_classes, embed_dim),
    )


# --------------------------------------------------------------------------- #
# Pure-JAX f32 reference (mirrors the PyTorch per-query window loop literally)
# --------------------------------------------------------------------------- #
def reference(x, params, window_size):
    N, L, F = x.shape
    h = x @ params["we"].T + params["be"] + params["pos"][:, :L, :]
    q = h @ params["wq"].T
    k = h @ params["wk"].T
    v = h @ params["wv"].T
    W = 2 * window_size + 1
    scores = jnp.zeros((N, L, W), jnp.float32)
    for i in range(L):
        start = max(0, i - window_size)
        end = min(L, i + window_size + 1)
        sc = jnp.einsum("nd,nkd->nk", q[:, i, :], k[:, start:end, :])
        scores = scores.at[:, i, start - i + window_size:end - i + window_size].set(sc)
    attn = jax.nn.softmax(scores, axis=-1)
    out = jnp.zeros((N, L, h.shape[-1]), jnp.float32)
    for i in range(L):
        start = max(0, i - window_size)
        end = min(L, i + window_size + 1)
        a = attn[:, i, start - i + window_size:end - i + window_size]
        out = out.at[:, i, :].set(jnp.einsum("nk,nkd->nd", a, v[:, start:end, :]))
    y = out @ params["wo"].T + params["bo"]
    mean = y.mean(axis=1)
    return mean @ params["wc"].T + params["bc"]


if __name__ == "__main__":
    feature_dim, embed_dim, num_classes = 16, 32, 8
    max_seq_len, window_size = 16, 2
    N, L = 2, 8

    key = jax.random.PRNGKey(0)
    kp, kx = jax.random.split(key)
    params = init_params(kp, feature_dim, embed_dim, num_classes, max_seq_len)
    x = jax.random.normal(kx, (N, L, feature_dim), jnp.float32)

    out = transformer_classifier_window(x, params, window_size=window_size)
    out = jax.block_until_ready(out)

    ref = reference(x, params, window_size)
    assert out.shape == (N, num_classes), out.shape
    # Tolerance is loosened vs. the f32 reference because projection matmul
    # operands are bf16 (softmax, attention aggregation, mean and all
    # accumulations are f32).
    err = jnp.max(jnp.abs(out - ref))
    assert jnp.allclose(out, ref, atol=5e-2, rtol=5e-2), (err, out, ref)
    print("KERNEL_OK")
</pallas_src>

<mosaic_0001>
module attributes {stable_mosaic.version = 11 : i64} {
  func.func @_classifier_kernel(%arg0: i32, %arg1: memref<8x128xf32, #tpu.memory_space<vmem>>, %arg2: memref<8x128xf32, #tpu.memory_space<vmem>>, %arg3: memref<128x128xbf16, #tpu.memory_space<vmem>>, %arg4: memref<1x128xf32, #tpu.memory_space<vmem>>, %arg5: memref<128x128xbf16, #tpu.memory_space<vmem>>, %arg6: memref<128x128xbf16, #tpu.memory_space<vmem>>, %arg7: memref<128x128xbf16, #tpu.memory_space<vmem>>, %arg8: memref<128x128xbf16, #tpu.memory_space<vmem>>, %arg9: memref<1x128xf32, #tpu.memory_space<vmem>>, %arg10: memref<128x128xbf16, #tpu.memory_space<vmem>>, %arg11: memref<1x128xf32, #tpu.memory_space<vmem>>, %arg12: memref<1x1x128xf32, #tpu.memory_space<vmem>>) attributes {dimension_semantics = [#tpu.dimension_semantics<parallel>], iteration_bounds = array<i64: 2>, scalar_prefetch = 0 : i64, scratch_operands = 0 : i64, tpu.core_type = #tpu.core_type<tc>, window_params = [{transform_indices = @transform_0, window_bounds = array<i64: 8, 128>}, {pipeline_mode = #tpu.pipeline_mode<synchronous>, transform_indices = @transform_1, window_bounds = array<i64: 8, 128>}, {pipeline_mode = #tpu.pipeline_mode<synchronous>, transform_indices = @transform_2, window_bounds = array<i64: 128, 128>}, {pipeline_mode = #tpu.pipeline_mode<synchronous>, transform_indices = @transform_3, window_bounds = array<i64: 1, 128>}, {pipeline_mode = #tpu.pipeline_mode<synchronous>, transform_indices = @transform_4, window_bounds = array<i64: 128, 128>}, {pipeline_mode = #tpu.pipeline_mode<synchronous>, transform_indices = @transform_5, window_bounds = array<i64: 128, 128>}, {pipeline_mode = #tpu.pipeline_mode<synchronous>, transform_indices = @transform_6, window_bounds = array<i64: 128, 128>}, {pipeline_mode = #tpu.pipeline_mode<synchronous>, transform_indices = @transform_7, window_bounds = array<i64: 128, 128>}, {pipeline_mode = #tpu.pipeline_mode<synchronous>, transform_indices = @transform_8, window_bounds = array<i64: 1, 128>}, {pipeline_mode = #tpu.pipeline_mode<synchronous>, transform_indices = @transform_9, window_bounds = array<i64: 128, 128>}, {pipeline_mode = #tpu.pipeline_mode<synchronous>, transform_indices = @transform_10, window_bounds = array<i64: 1, 128>}, {transform_indices = @transform_11, window_bounds = array<i64: 1, 1, 128>}]} {
    %c0 = arith.constant 0 : index
    %c0_0 = arith.constant 0 : index
    %0 = vector.load %arg1[%c0, %c0_0] : memref<8x128xf32, #tpu.memory_space<vmem>>, vector<8x128xf32>
    %1 = arith.truncf %0 : vector<8x128xf32> to vector<8x128xbf16>
    %c0_1 = arith.constant 0 : index
    %c0_2 = arith.constant 0 : index
    %2 = vector.load %arg2[%c0_1, %c0_2] : memref<8x128xf32, #tpu.memory_space<vmem>>, vector<8x128xf32>
    %3 = vector.shape_cast %2 : vector<8x128xf32> to vector<1x8x128xf32>
    %4 = vector.shape_cast %3 : vector<1x8x128xf32> to vector<8x128xf32>
    %c0_3 = arith.constant 0 : index
    %c0_4 = arith.constant 0 : index
    %5 = vector.load %arg3[%c0_3, %c0_4] : memref<128x128xbf16, #tpu.memory_space<vmem>>, vector<128x128xbf16>
    %cst = arith.constant dense<0.000000e+00> : vector<8x128xf32>
    %6 = tpu.matmul %1, %5, %cst {dimension_numbers = #tpu.dot_dimension_numbers<[1], [0], [0], [1], [0, 0, 1, 1], [], []>} : vector<8x128xbf16>, vector<128x128xbf16>, vector<8x128xf32> -> vector<8x128xf32>
    %c0_5 = arith.constant 0 : index
    %c0_6 = arith.constant 0 : index
    %7 = vector.load %arg4[%c0_5, %c0_6] : memref<1x128xf32, #tpu.memory_space<vmem>>, vector<1x128xf32>
    %8 = vector.broadcast %7 : vector<1x128xf32> to vector<8x128xf32>
    %9 = arith.addf %6, %8 : vector<8x128xf32>
    %10 = arith.addf %9, %4 : vector<8x128xf32>
    %11 = arith.truncf %10 : vector<8x128xf32> to vector<8x128xbf16>
    %c0_7 = arith.constant 0 : index
    %c0_8 = arith.constant 0 : index
    %12 = vector.load %arg5[%c0_7, %c0_8] : memref<128x128xbf16, #tpu.memory_space<vmem>>, vector<128x128xbf16>
    %cst_9 = arith.constant dense<0.000000e+00> : vector<8x128xf32>
    %13 = tpu.matmul %11, %12, %cst_9 {dimension_numbers = #tpu.dot_dimension_numbers<[1], [0], [0], [1], [0, 0, 1, 1], [], []>} : vector<8x128xbf16>, vector<128x128xbf16>, vector<8x128xf32> -> vector<8x128xf32>
    %14 = vector.shape_cast %13 : vector<8x128xf32> to vector<1x8x128xf32>
    %c0_10 = arith.constant 0 : index
    %c0_11 = arith.constant 0 : index
    %15 = vector.load %arg6[%c0_10, %c0_11] : memref<128x128xbf16, #tpu.memory_space<vmem>>, vector<128x128xbf16>
    %cst_12 = arith.constant dense<0.000000e+00> : vector<8x128xf32>
    %16 = tpu.matmul %11, %15, %cst_12 {dimension_numbers = #tpu.dot_dimension_numbers<[1], [0], [0], [1], [0, 0, 1, 1], [], []>} : vector<8x128xbf16>, vector<128x128xbf16>, vector<8x128xf32> -> vector<8x128xf32>
    %17 = vector.shape_cast %16 : vector<8x128xf32> to vector<1x8x128xf32>
    %c0_13 = arith.constant 0 : index
    %c0_14 = arith.constant 0 : index
    %18 = vector.load %arg7[%c0_13, %c0_14] : memref<128x128xbf16, #tpu.memory_space<vmem>>, vector<128x128xbf16>
    %cst_15 = arith.constant dense<0.000000e+00> : vector<8x128xf32>
    %19 = tpu.matmul %11, %18, %cst_15 {dimension_numbers = #tpu.dot_dimension_numbers<[1], [0], [0], [1], [0, 0, 1, 1], [], []>} : vector<8x128xbf16>, vector<128x128xbf16>, vector<8x128xf32> -> vector<8x128xf32>
    %20 = vector.shape_cast %19 : vector<8x128xf32> to vector<1x8x128xf32>
    %cst_16 = arith.constant 0.000000e+00 : f32
    %21 = vector.broadcast %cst_16 : f32 to vector<1x2x128xf32>
    %22 = vector.extract_strided_slice %17 {offsets = [0, 0, 0], sizes = [1, 6, 128], strides = [1, 1, 1]} : vector<1x8x128xf32> to vector<1x6x128xf32>
    %23 = tpu.concatenate %21, %22 in 1 : vector<1x2x128xf32>, vector<1x6x128xf32> -> vector<1x8x128xf32>
    %24 = arith.mulf %14, %23 : vector<1x8x128xf32>
    %cst_17 = arith.constant dense<0.000000e+00> : vector<1x8xf32>
    %25 = vector.multi_reduction <add>, %24, %cst_17 [2] : vector<1x8x128xf32> to vector<1x8xf32>
    %26 = vector.shape_cast %25 : vector<1x8xf32> to vector<1x8x1xf32>
    %cst_18 = arith.constant 0.000000e+00 : f32
    %27 = vector.broadcast %cst_18 : f32 to vector<1x1x128xf32>
    %28 = vector.extract_strided_slice %17 {offsets = [0, 0, 0], sizes = [1, 7, 128], strides = [1, 1, 1]} : vector<1x8x128xf32> to vector<1x7x128xf32>
    %29 = tpu.concatenate %27, %28 in 1 : vector<1x1x128xf32>, vector<1x7x128xf32> -> vector<1x8x128xf32>
    %30 = arith.mulf %14, %29 : vector<1x8x128xf32>
    %cst_19 = arith.constant dense<0.000000e+00> : vector<1x8xf32>
    %31 = vector.multi_reduction <add>, %30, %cst_19 [2] : vector<1x8x128xf32> to vector<1x8xf32>
    %32 = vector.shape_cast %31 : vector<1x8xf32> to vector<1x8x1xf32>
    %33 = arith.mulf %14, %17 : vector<1x8x128xf32>
    %cst_20 = arith.constant dense<0.000000e+00> : vector<1x8xf32>
    %34 = vector.multi_reduction <add>, %33, %cst_20 [2] : vector<1x8x128xf32> to vector<1x8xf32>
    %35 = vector.shape_cast %34 : vector<1x8xf32> to vector<1x8x1xf32>
    %cst_21 = arith.constant 0.000000e+00 : f32
    %36 = vector.broadcast %cst_21 : f32 to vector<1x1x128xf32>
    %37 = vector.extract_strided_slice %17 {offsets = [0, 1, 0], sizes = [1, 7, 128], strides = [1, 1, 1]} : vector<1x8x128xf32> to vector<1x7x128xf32>
    %38 = tpu.concatenate %37, %36 in 1 : vector<1x7x128xf32>, vector<1x1x128xf32> -> vector<1x8x128xf32>
    %39 = arith.mulf %14, %38 : vector<1x8x128xf32>
    %cst_22 = arith.constant dense<0.000000e+00> : vector<1x8xf32>
    %40 = vector.multi_reduction <add>, %39, %cst_22 [2] : vector<1x8x128xf32> to vector<1x8xf32>
    %41 = vector.shape_cast %40 : vector<1x8xf32> to vector<1x8x1xf32>
    %cst_23 = arith.constant 0.000000e+00 : f32
    %42 = vector.broadcast %cst_23 : f32 to vector<1x2x128xf32>
    %43 = vector.extract_strided_slice %17 {offsets = [0, 2, 0], sizes = [1, 6, 128], strides = [1, 1, 1]} : vector<1x8x128xf32> to vector<1x6x128xf32>
    %44 = tpu.concatenate %43, %42 in 1 : vector<1x6x128xf32>, vector<1x2x128xf32> -> vector<1x8x128xf32>
    %45 = arith.mulf %14, %44 : vector<1x8x128xf32>
    %cst_24 = arith.constant dense<0.000000e+00> : vector<1x8xf32>
    %46 = vector.multi_reduction <add>, %45, %cst_24 [2] : vector<1x8x128xf32> to vector<1x8xf32>
    %47 = vector.shape_cast %46 : vector<1x8xf32> to vector<1x8x1xf32>
    %48 = arith.maximumf %26, %32 : vector<1x8x1xf32>
    %49 = arith.maximumf %48, %35 : vector<1x8x1xf32>
    %50 = arith.maximumf %49, %41 : vector<1x8x1xf32>
    %51 = arith.maximumf %50, %47 : vector<1x8x1xf32>
    %52 = arith.subf %26, %51 : vector<1x8x1xf32>
    %53 = math.exp %52 : vector<1x8x1xf32>
    %54 = arith.subf %32, %51 : vector<1x8x1xf32>
    %55 = math.exp %54 : vector<1x8x1xf32>
    %56 = arith.subf %35, %51 : vector<1x8x1xf32>
    %57 = math.exp %56 : vector<1x8x1xf32>
    %58 = arith.subf %41, %51 : vector<1x8x1xf32>
    %59 = math.exp %58 : vector<1x8x1xf32>
    %60 = arith.subf %47, %51 : vector<1x8x1xf32>
    %61 = math.exp %60 : vector<1x8x1xf32>
    %62 = arith.addf %53, %55 : vector<1x8x1xf32>
    %63 = arith.addf %62, %57 : vector<1x8x1xf32>
    %64 = arith.addf %63, %59 : vector<1x8x1xf32>
    %65 = arith.addf %64, %61 : vector<1x8x1xf32>
    %66 = tpu.reciprocal %65 {approx = true} : vector<1x8x1xf32> -> vector<1x8x1xf32>
    %67 = arith.mulf %53, %66 : vector<1x8x1xf32>
    %68 = arith.mulf %55, %66 : vector<1x8x1xf32>
    %69 = arith.mulf %57, %66 : vector<1x8x1xf32>
    %70 = arith.mulf %59, %66 : vector<1x8x1xf32>
    %71 = arith.mulf %61, %66 : vector<1x8x1xf32>
    %cst_25 = arith.constant 0.000000e+00 : f32
    %72 = vector.broadcast %cst_25 : f32 to vector<1x2x128xf32>
    %73 = vector.extract_strided_slice %20 {offsets = [0, 0, 0], sizes = [1, 6, 128], strides = [1, 1, 1]} : vector<1x8x128xf32> to vector<1x6x128xf32>
    %74 = tpu.concatenate %72, %73 in 1 : vector<1x2x128xf32>, vector<1x6x128xf32> -> vector<1x8x128xf32>
    %75 = vector.broadcast %67 : vector<1x8x1xf32> to vector<1x8x128xf32>
    %76 = arith.mulf %75, %74 : vector<1x8x128xf32>
    %cst_26 = arith.constant 0.000000e+00 : f32
    %77 = vector.broadcast %cst_26 : f32 to vector<1x1x128xf32>
    %78 = vector.extract_strided_slice %20 {offsets = [0, 0, 0], sizes = [1, 7, 128], strides = [1, 1, 1]} : vector<1x8x128xf32> to vector<1x7x128xf32>
    %79 = tpu.concatenate %77, %78 in 1 : vector<1x1x128xf32>, vector<1x7x128xf32> -> vector<1x8x128xf32>
    %80 = vector.broadcast %68 : vector<1x8x1xf32> to vector<1x8x128xf32>
    %81 = arith.mulf %80, %79 : vector<1x8x128xf32>
    %82 = arith.addf %76, %81 : vector<1x8x128xf32>
    %83 = vector.broadcast %69 : vector<1x8x1xf32> to vector<1x8x128xf32>
    %84 = arith.mulf %83, %20 : vector<1x8x128xf32>
    %85 = arith.addf %82, %84 : vector<1x8x128xf32>
    %cst_27 = arith.constant 0.000000e+00 : f32
    %86 = vector.broadcast %cst_27 : f32 to vector<1x1x128xf32>
    %87 = vector.extract_strided_slice %20 {offsets = [0, 1, 0], sizes = [1, 7, 128], strides = [1, 1, 1]} : vector<1x8x128xf32> to vector<1x7x128xf32>
    %88 = tpu.concatenate %87, %86 in 1 : vector<1x7x128xf32>, vector<1x1x128xf32> -> vector<1x8x128xf32>
    %89 = vector.broadcast %70 : vector<1x8x1xf32> to vector<1x8x128xf32>
    %90 = arith.mulf %89, %88 : vector<1x8x128xf32>
    %91 = arith.addf %85, %90 : vector<1x8x128xf32>
    %cst_28 = arith.constant 0.000000e+00 : f32
    %92 = vector.broadcast %cst_28 : f32 to vector<1x2x128xf32>
    %93 = vector.extract_strided_slice %20 {offsets = [0, 2, 0], sizes = [1, 6, 128], strides = [1, 1, 1]} : vector<1x8x128xf32> to vector<1x6x128xf32>
    %94 = tpu.concatenate %93, %92 in 1 : vector<1x6x128xf32>, vector<1x2x128xf32> -> vector<1x8x128xf32>
    %95 = vector.broadcast %71 : vector<1x8x1xf32> to vector<1x8x128xf32>
    %96 = arith.mulf %95, %94 : vector<1x8x128xf32>
    %97 = arith.addf %91, %96 : vector<1x8x128xf32>
    %98 = vector.shape_cast %97 : vector<1x8x128xf32> to vector<8x128xf32>
    %99 = arith.truncf %98 : vector<8x128xf32> to vector<8x128xbf16>
    %c0_29 = arith.constant 0 : index
    %c0_30 = arith.constant 0 : index
    %100 = vector.load %arg8[%c0_29, %c0_30] : memref<128x128xbf16, #tpu.memory_space<vmem>>, vector<128x128xbf16>
    %cst_31 = arith.constant dense<0.000000e+00> : vector<8x128xf32>
    %101 = tpu.matmul %99, %100, %cst_31 {dimension_numbers = #tpu.dot_dimension_numbers<[1], [0], [0], [1], [0, 0, 1, 1], [], []>} : vector<8x128xbf16>, vector<128x128xbf16>, vector<8x128xf32> -> vector<8x128xf32>
    %c0_32 = arith.constant 0 : index
    %c0_33 = arith.constant 0 : index
    %102 = vector.load %arg9[%c0_32, %c0_33] : memref<1x128xf32, #tpu.memory_space<vmem>>, vector<1x128xf32>
    %103 = vector.broadcast %102 : vector<1x128xf32> to vector<8x128xf32>
    %104 = arith.addf %101, %103 : vector<8x128xf32>
    %105 = vector.shape_cast %104 : vector<8x128xf32> to vector<1x8x128xf32>
    %cst_34 = arith.constant dense<0.000000e+00> : vector<1x128xf32>
    %106 = vector.multi_reduction <add>, %105, %cst_34 [1] : vector<1x8x128xf32> to vector<1x128xf32>
    %cst_35 = arith.constant 8.000000e+00 : f32
    %107 = vector.broadcast %cst_35 : f32 to vector<1x128xf32>
    %108 = arith.divf %106, %107 : vector<1x128xf32>
    %109 = arith.truncf %108 : vector<1x128xf32> to vector<1x128xbf16>
    %c0_36 = arith.constant 0 : index
    %c0_37 = arith.constant 0 : index
    %110 = vector.load %arg10[%c0_36, %c0_37] : memref<128x128xbf16, #tpu.memory_space<vmem>>, vector<128x128xbf16>
    %cst_38 = arith.constant dense<0.000000e+00> : vector<1x128xf32>
    %111 = tpu.matmul %109, %110, %cst_38 {dimension_numbers = #tpu.dot_dimension_numbers<[1], [0], [0], [1], [0, 0, 1, 1], [], []>} : vector<1x128xbf16>, vector<128x128xbf16>, vector<1x128xf32> -> vector<1x128xf32>
    %c0_39 = arith.constant 0 : index
    %c0_40 = arith.constant 0 : index
    %112 = vector.load %arg11[%c0_39, %c0_40] : memref<1x128xf32, #tpu.memory_space<vmem>>, vector<1x128xf32>
    %113 = arith.addf %111, %112 : vector<1x128xf32>
    %c0_41 = arith.constant 0 : index
    %c0_42 = arith.constant 0 : index
    %c0_43 = arith.constant 0 : index
    %114 = vector.load %arg12[%c0_41, %c0_42, %c0_43] : memref<1x1x128xf32, #tpu.memory_space<vmem>>, vector<1x1x128xf32>
    %115 = vector.shape_cast %114 : vector<1x1x128xf32> to vector<1x128xf32>
    %116 = vector.shape_cast %113 : vector<1x128xf32> to vector<1x1x128xf32>
    tpu.vector_store %arg12[%c0_41, %c0_42, %c0_43], %116 {strides = array<i32>} : memref<1x1x128xf32, #tpu.memory_space<vmem>>, vector<1x1x128xf32>,
    return
  }
  func.func @transform_0(%arg0: i32) -> (i32, i32) {
    %c0_i32 = arith.constant 0 : i32
    %c0_i32_0 = arith.constant 0 : i32
    return %arg0, %c0_i32 : i32, i32
  }
  func.func @transform_1(%arg0: i32) -> (i32, i32) {
    %c0_i32 = arith.constant 0 : i32
    %c0_i32_0 = arith.constant 0 : i32
    %c0_i32_1 = arith.constant 0 : i32
    return %c0_i32, %c0_i32_0 : i32, i32
  }
  func.func @transform_2(%arg0: i32) -> (i32, i32) {
    %c0_i32 = arith.constant 0 : i32
    %c0_i32_0 = arith.constant 0 : i32
    %c0_i32_1 = arith.constant 0 : i32
    return %c0_i32, %c0_i32_0 : i32, i32
  }
  func.func @transform_3(%arg0: i32) -> (i32, i32) {
    %c0_i32 = arith.constant 0 : i32
    %c0_i32_0 = arith.constant 0 : i32
    %c0_i32_1 = arith.constant 0 : i32
    return %c0_i32, %c0_i32_0 : i32, i32
  }
  func.func @transform_4(%arg0: i32) -> (i32, i32) {
    %c0_i32 = arith.constant 0 : i32
    %c0_i32_0 = arith.constant 0 : i32
    %c0_i32_1 = arith.constant 0 : i32
    return %c0_i32, %c0_i32_0 : i32, i32
  }
  func.func @transform_5(%arg0: i32) -> (i32, i32) {
    %c0_i32 = arith.constant 0 : i32
    %c0_i32_0 = arith.constant 0 : i32
    %c0_i32_1 = arith.constant 0 : i32
    return %c0_i32, %c0_i32_0 : i32, i32
  }
  func.func @transform_6(%arg0: i32) -> (i32, i32) {
    %c0_i32 = arith.constant 0 : i32
    %c0_i32_0 = arith.constant 0 : i32
    %c0_i32_1 = arith.constant 0 : i32
    return %c0_i32, %c0_i32_0 : i32, i32
  }
  func.func @transform_7(%arg0: i32) -> (i32, i32) {
    %c0_i32 = arith.constant 0 : i32
    %c0_i32_0 = arith.constant 0 : i32
    %c0_i32_1 = arith.constant 0 : i32
    return %c0_i32, %c0_i32_0 : i32, i32
  }
  func.func @transform_8(%arg0: i32) -> (i32, i32) {
    %c0_i32 = arith.constant 0 : i32
    %c0_i32_0 = arith.constant 0 : i32
    %c0_i32_1 = arith.constant 0 : i32
    return %c0_i32, %c0_i32_0 : i32, i32
  }
  func.func @transform_9(%arg0: i32) -> (i32, i32) {
    %c0_i32 = arith.constant 0 : i32
    %c0_i32_0 = arith.constant 0 : i32
    %c0_i32_1 = arith.constant 0 : i32
    return %c0_i32, %c0_i32_0 : i32, i32
  }
  func.func @transform_10(%arg0: i32) -> (i32, i32) {
    %c0_i32 = arith.constant 0 : i32
    %c0_i32_0 = arith.constant 0 : i32
    %c0_i32_1 = arith.constant 0 : i32
    return %c0_i32, %c0_i32_0 : i32, i32
  }
  func.func @transform_11(%arg0: i32) -> (i32, i32, i32) {
    %c0_i32 = arith.constant 0 : i32
    %c0_i32_0 = arith.constant 0 : i32
    %c0_i32_1 = arith.constant 0 : i32
    return %arg0, %c0_i32, %c0_i32_0 : i32, i32, i32
  }
}

module attributes {stable_mosaic.version = 11 : i64} {
  func.func @_classifier_kernel(%arg0: i32, %arg1: memref<8x128xf32, #tpu.memory_space<vmem>>, %arg2: memref<8x128xf32, #tpu.memory_space<vmem>>, %arg3: memref<128x128xbf16, #tpu.memory_space<vmem>>, %arg4: memref<1x128xf32, #tpu.memory_space<vmem>>, %arg5: memref<128x128xbf16, #tpu.memory_space<vmem>>, %arg6: memref<128x128xbf16, #tpu.memory_space<vmem>>, %arg7: memref<128x128xbf16, #tpu.memory_space<vmem>>, %arg8: memref<128x128xbf16, #tpu.memory_space<vmem>>, %arg9: memref<1x128xf32, #tpu.memory_space<vmem>>, %arg10: memref<128x128xbf16, #tpu.memory_space<vmem>>, %arg11: memref<1x128xf32, #tpu.memory_space<vmem>>, %arg12: memref<1x1x128xf32, #tpu.memory_space<vmem>>) attributes {dimension_semantics = [#tpu.dimension_semantics<parallel>], iteration_bounds = array<i64: 2>, scalar_prefetch = 0 : i64, scratch_operands = 0 : i64, tpu.core_type = #tpu.core_type<tc>, window_params = [{transform_indices = @transform_0, window_bounds = array<i64: 8, 128>}, {pipeline_mode = #tpu.pipeline_mode<synchronous>, transform_indices = @transform_1, window_bounds = array<i64: 8, 128>}, {pipeline_mode = #tpu.pipeline_mode<synchronous>, transform_indices = @transform_2, window_bounds = array<i64: 128, 128>}, {pipeline_mode = #tpu.pipeline_mode<synchronous>, transform_indices = @transform_3, window_bounds = array<i64: 1, 128>}, {pipeline_mode = #tpu.pipeline_mode<synchronous>, transform_indices = @transform_4, window_bounds = array<i64: 128, 128>}, {pipeline_mode = #tpu.pipeline_mode<synchronous>, transform_indices = @transform_5, window_bounds = array<i64: 128, 128>}, {pipeline_mode = #tpu.pipeline_mode<synchronous>, transform_indices = @transform_6, window_bounds = array<i64: 128, 128>}, {pipeline_mode = #tpu.pipeline_mode<synchronous>, transform_indices = @transform_7, window_bounds = array<i64: 128, 128>}, {pipeline_mode = #tpu.pipeline_mode<synchronous>, transform_indices = @transform_8, window_bounds = array<i64: 1, 128>}, {pipeline_mode = #tpu.pipeline_mode<synchronous>, transform_indices = @transform_9, window_bounds = array<i64: 128, 128>}, {pipeline_mode = #tpu.pipeline_mode<synchronous>, transform_indices = @transform_10, window_bounds = array<i64: 1, 128>}, {transform_indices = @transform_11, window_bounds = array<i64: 1, 1, 128>}]} {
    %c0 = arith.constant 0 : index
    %c0_0 = arith.constant 0 : index
    %0 = vector.load %arg1[%c0, %c0_0] : memref<8x128xf32, #tpu.memory_space<vmem>>, vector<8x128xf32>
    %1 = arith.truncf %0 : vector<8x128xf32> to vector<8x128xbf16>
    %c0_1 = arith.constant 0 : index
    %c0_2 = arith.constant 0 : index
    %2 = vector.load %arg2[%c0_1, %c0_2] : memref<8x128xf32, #tpu.memory_space<vmem>>, vector<8x128xf32>
    %3 = vector.shape_cast %2 : vector<8x128xf32> to vector<1x8x128xf32>
    %4 = vector.shape_cast %3 : vector<1x8x128xf32> to vector<8x128xf32>
    %c0_3 = arith.constant 0 : index
    %c0_4 = arith.constant 0 : index
    %5 = vector.load %arg3[%c0_3, %c0_4] : memref<128x128xbf16, #tpu.memory_space<vmem>>, vector<128x128xbf16>
    %cst = arith.constant dense<0.000000e+00> : vector<8x128xf32>
    %6 = tpu.matmul %1, %5, %cst {dimension_numbers = #tpu.dot_dimension_numbers<[1], [0], [0], [1], [0, 0, 1, 1], [], []>} : vector<8x128xbf16>, vector<128x128xbf16>, vector<8x128xf32> -> vector<8x128xf32>
    %c0_5 = arith.constant 0 : index
    %c0_6 = arith.constant 0 : index
    %7 = vector.load %arg4[%c0_5, %c0_6] : memref<1x128xf32, #tpu.memory_space<vmem>>, vector<1x128xf32>
    %8 = vector.broadcast %7 : vector<1x128xf32> to vector<8x128xf32>
    %9 = arith.addf %6, %8 : vector<8x128xf32>
    %10 = arith.addf %9, %4 : vector<8x128xf32>
    %11 = arith.truncf %10 : vector<8x128xf32> to vector<8x128xbf16>
    %c0_7 = arith.constant 0 : index
    %c0_8 = arith.constant 0 : index
    %12 = vector.load %arg5[%c0_7, %c0_8] : memref<128x128xbf16, #tpu.memory_space<vmem>>, vector<128x128xbf16>
    %cst_9 = arith.constant dense<0.000000e+00> : vector<8x128xf32>
    %13 = tpu.matmul %11, %12, %cst_9 {dimension_numbers = #tpu.dot_dimension_numbers<[1], [0], [0], [1], [0, 0, 1, 1], [], []>} : vector<8x128xbf16>, vector<128x128xbf16>, vector<8x128xf32> -> vector<8x128xf32>
    %14 = vector.shape_cast %13 : vector<8x128xf32> to vector<1x8x128xf32>
    %c0_10 = arith.constant 0 : index
    %c0_11 = arith.constant 0 : index
    %15 = vector.load %arg6[%c0_10, %c0_11] : memref<128x128xbf16, #tpu.memory_space<vmem>>, vector<128x128xbf16>
    %cst_12 = arith.constant dense<0.000000e+00> : vector<8x128xf32>
    %16 = tpu.matmul %11, %15, %cst_12 {dimension_numbers = #tpu.dot_dimension_numbers<[1], [0], [0], [1], [0, 0, 1, 1], [], []>} : vector<8x128xbf16>, vector<128x128xbf16>, vector<8x128xf32> -> vector<8x128xf32>
    %17 = vector.shape_cast %16 : vector<8x128xf32> to vector<1x8x128xf32>
    %c0_13 = arith.constant 0 : index
    %c0_14 = arith.constant 0 : index
    %18 = vector.load %arg7[%c0_13, %c0_14] : memref<128x128xbf16, #tpu.memory_space<vmem>>, vector<128x128xbf16>
    %cst_15 = arith.constant dense<0.000000e+00> : vector<8x128xf32>
    %19 = tpu.matmul %11, %18, %cst_15 {dimension_numbers = #tpu.dot_dimension_numbers<[1], [0], [0], [1], [0, 0, 1, 1], [], []>} : vector<8x128xbf16>, vector<128x128xbf16>, vector<8x128xf32> -> vector<8x128xf32>
    %20 = vector.shape_cast %19 : vector<8x128xf32> to vector<1x8x128xf32>
    %cst_16 = arith.constant 0.000000e+00 : f32
    %21 = vector.broadcast %cst_16 : f32 to vector<1x2x128xf32>
    %22 = vector.extract_strided_slice %17 {offsets = [0, 0, 0], sizes = [1, 6, 128], strides = [1, 1, 1]} : vector<1x8x128xf32> to vector<1x6x128xf32>
    %23 = tpu.concatenate %21, %22 in 1 : vector<1x2x128xf32>, vector<1x6x128xf32> -> vector<1x8x128xf32>
    %24 = arith.mulf %14, %23 : vector<1x8x128xf32>
    %cst_17 = arith.constant dense<0.000000e+00> : vector<1x8xf32>
    %25 = vector.multi_reduction <add>, %24, %cst_17 [2] : vector<1x8x128xf32> to vector<1x8xf32>
    %26 = vector.shape_cast %25 : vector<1x8xf32> to vector<1x8x1xf32>
    %cst_18 = arith.constant 0.000000e+00 : f32
    %27 = vector.broadcast %cst_18 : f32 to vector<1x1x128xf32>
    %28 = vector.extract_strided_slice %17 {offsets = [0, 0, 0], sizes = [1, 7, 128], strides = [1, 1, 1]} : vector<1x8x128xf32> to vector<1x7x128xf32>
    %29 = tpu.concatenate %27, %28 in 1 : vector<1x1x128xf32>, vector<1x7x128xf32> -> vector<1x8x128xf32>
    %30 = arith.mulf %14, %29 : vector<1x8x128xf32>
    %cst_19 = arith.constant dense<0.000000e+00> : vector<1x8xf32>
    %31 = vector.multi_reduction <add>, %30, %cst_19 [2] : vector<1x8x128xf32> to vector<1x8xf32>
    %32 = vector.shape_cast %31 : vector<1x8xf32> to vector<1x8x1xf32>
    %33 = arith.mulf %14, %17 : vector<1x8x128xf32>
    %cst_20 = arith.constant dense<0.000000e+00> : vector<1x8xf32>
    %34 = vector.multi_reduction <add>, %33, %cst_20 [2] : vector<1x8x128xf32> to vector<1x8xf32>
    %35 = vector.shape_cast %34 : vector<1x8xf32> to vector<1x8x1xf32>
    %cst_21 = arith.constant 0.000000e+00 : f32
    %36 = vector.broadcast %cst_21 : f32 to vector<1x1x128xf32>
    %37 = vector.extract_strided_slice %17 {offsets = [0, 1, 0], sizes = [1, 7, 128], strides = [1, 1, 1]} : vector<1x8x128xf32> to vector<1x7x128xf32>
    %38 = tpu.concatenate %37, %36 in 1 : vector<1x7x128xf32>, vector<1x1x128xf32> -> vector<1x8x128xf32>
    %39 = arith.mulf %14, %38 : vector<1x8x128xf32>
    %cst_22 = arith.constant dense<0.000000e+00> : vector<1x8xf32>
    %40 = vector.multi_reduction <add>, %39, %cst_22 [2] : vector<1x8x128xf32> to vector<1x8xf32>
    %41 = vector.shape_cast %40 : vector<1x8xf32> to vector<1x8x1xf32>
    %cst_23 = arith.constant 0.000000e+00 : f32
    %42 = vector.broadcast %cst_23 : f32 to vector<1x2x128xf32>
    %43 = vector.extract_strided_slice %17 {offsets = [0, 2, 0], sizes = [1, 6, 128], strides = [1, 1, 1]} : vector<1x8x128xf32> to vector<1x6x128xf32>
    %44 = tpu.concatenate %43, %42 in 1 : vector<1x6x128xf32>, vector<1x2x128xf32> -> vector<1x8x128xf32>
    %45 = arith.mulf %14, %44 : vector<1x8x128xf32>
    %cst_24 = arith.constant dense<0.000000e+00> : vector<1x8xf32>
    %46 = vector.multi_reduction <add>, %45, %cst_24 [2] : vector<1x8x128xf32> to vector<1x8xf32>
    %47 = vector.shape_cast %46 : vector<1x8xf32> to vector<1x8x1xf32>
    %48 = arith.maximumf %26, %32 : vector<1x8x1xf32>
    %49 = arith.maximumf %48, %35 : vector<1x8x1xf32>
    %50 = arith.maximumf %49, %41 : vector<1x8x1xf32>
    %51 = arith.maximumf %50, %47 : vector<1x8x1xf32>
    %52 = arith.subf %26, %51 : vector<1x8x1xf32>
    %53 = math.exp %52 : vector<1x8x1xf32>
    %54 = arith.subf %32, %51 : vector<1x8x1xf32>
    %55 = math.exp %54 : vector<1x8x1xf32>
    %56 = arith.subf %35, %51 : vector<1x8x1xf32>
    %57 = math.exp %56 : vector<1x8x1xf32>
    %58 = arith.subf %41, %51 : vector<1x8x1xf32>
    %59 = math.exp %58 : vector<1x8x1xf32>
    %60 = arith.subf %47, %51 : vector<1x8x1xf32>
    %61 = math.exp %60 : vector<1x8x1xf32>
    %62 = arith.addf %53, %55 : vector<1x8x1xf32>
    %63 = arith.addf %62, %57 : vector<1x8x1xf32>
    %64 = arith.addf %63, %59 : vector<1x8x1xf32>
    %65 = arith.addf %64, %61 : vector<1x8x1xf32>
    %66 = tpu.reciprocal %65 {approx = true} : vector<1x8x1xf32> -> vector<1x8x1xf32>
    %67 = arith.mulf %53, %66 : vector<1x8x1xf32>
    %68 = arith.mulf %55, %66 : vector<1x8x1xf32>
    %69 = arith.mulf %57, %66 : vector<1x8x1xf32>
    %70 = arith.mulf %59, %66 : vector<1x8x1xf32>
    %71 = arith.mulf %61, %66 : vector<1x8x1xf32>
    %cst_25 = arith.constant 0.000000e+00 : f32
    %72 = vector.broadcast %cst_25 : f32 to vector<1x2x128xf32>
    %73 = vector.extract_strided_slice %20 {offsets = [0, 0, 0], sizes = [1, 6, 128], strides = [1, 1, 1]} : vector<1x8x128xf32> to vector<1x6x128xf32>
    %74 = tpu.concatenate %72, %73 in 1 : vector<1x2x128xf32>, vector<1x6x128xf32> -> vector<1x8x128xf32>
    %75 = vector.broadcast %67 : vector<1x8x1xf32> to vector<1x8x128xf32>
    %76 = arith.mulf %75, %74 : vector<1x8x128xf32>
    %cst_26 = arith.constant 0.000000e+00 : f32
    %77 = vector.broadcast %cst_26 : f32 to vector<1x1x128xf32>
    %78 = vector.extract_strided_slice %20 {offsets = [0, 0, 0], sizes = [1, 7, 128], strides = [1, 1, 1]} : vector<1x8x128xf32> to vector<1x7x128xf32>
    %79 = tpu.concatenate %77, %78 in 1 : vector<1x1x128xf32>, vector<1x7x128xf32> -> vector<1x8x128xf32>
    %80 = vector.broadcast %68 : vector<1x8x1xf32> to vector<1x8x128xf32>
    %81 = arith.mulf %80, %79 : vector<1x8x128xf32>
    %82 = arith.addf %76, %81 : vector<1x8x128xf32>
    %83 = vector.broadcast %69 : vector<1x8x1xf32> to vector<1x8x128xf32>
    %84 = arith.mulf %83, %20 : vector<1x8x128xf32>
    %85 = arith.addf %82, %84 : vector<1x8x128xf32>
    %cst_27 = arith.constant 0.000000e+00 : f32
    %86 = vector.broadcast %cst_27 : f32 to vector<1x1x128xf32>
    %87 = vector.extract_strided_slice %20 {offsets = [0, 1, 0], sizes = [1, 7, 128], strides = [1, 1, 1]} : vector<1x8x128xf32> to vector<1x7x128xf32>
    %88 = tpu.concatenate %87, %86 in 1 : vector<1x7x128xf32>, vector<1x1x128xf32> -> vector<1x8x128xf32>
    %89 = vector.broadcast %70 : vector<1x8x1xf32> to vector<1x8x128xf32>
    %90 = arith.mulf %89, %88 : vector<1x8x128xf32>
    %91 = arith.addf %85, %90 : vector<1x8x128xf32>
    %cst_28 = arith.constant 0.000000e+00 : f32
    %92 = vector.broadcast %cst_28 : f32 to vector<1x2x128xf32>
    %93 = vector.extract_strided_slice %20 {offsets = [0, 2, 0], sizes = [1, 6, 128], strides = [1, 1, 1]} : vector<1x8x128xf32> to vector<1x6x128xf32>
    %94 = tpu.concatenate %93, %92 in 1 : vector<1x6x128xf32>, vector<1x2x128xf32> -> vector<1x8x128xf32>
    %95 = vector.broadcast %71 : vector<1x8x1xf32> to vector<1x8x128xf32>
    %96 = arith.mulf %95, %94 : vector<1x8x128xf32>
    %97 = arith.addf %91, %96 : vector<1x8x128xf32>
    %98 = vector.shape_cast %97 : vector<1x8x128xf32> to vector<8x128xf32>
    %99 = arith.truncf %98 : vector<8x128xf32> to vector<8x128xbf16>
    %c0_29 = arith.constant 0 : index
    %c0_30 = arith.constant 0 : index
    %100 = vector.load %arg8[%c0_29, %c0_30] : memref<128x128xbf16, #tpu.memory_space<vmem>>, vector<128x128xbf16>
    %cst_31 = arith.constant dense<0.000000e+00> : vector<8x128xf32>
    %101 = tpu.matmul %99, %100, %cst_31 {dimension_numbers = #tpu.dot_dimension_numbers<[1], [0], [0], [1], [0, 0, 1, 1], [], []>} : vector<8x128xbf16>, vector<128x128xbf16>, vector<8x128xf32> -> vector<8x128xf32>
    %c0_32 = arith.constant 0 : index
    %c0_33 = arith.constant 0 : index
    %102 = vector.load %arg9[%c0_32, %c0_33] : memref<1x128xf32, #tpu.memory_space<vmem>>, vector<1x128xf32>
    %103 = vector.broadcast %102 : vector<1x128xf32> to vector<8x128xf32>
    %104 = arith.addf %101, %103 : vector<8x128xf32>
    %105 = vector.shape_cast %104 : vector<8x128xf32> to vector<1x8x128xf32>
    %cst_34 = arith.constant dense<0.000000e+00> : vector<1x128xf32>
    %106 = vector.multi_reduction <add>, %105, %cst_34 [1] : vector<1x8x128xf32> to vector<1x128xf32>
    %cst_35 = arith.constant 8.000000e+00 : f32
    %107 = vector.broadcast %cst_35 : f32 to vector<1x128xf32>
    %108 = arith.divf %106, %107 : vector<1x128xf32>
    %109 = arith.truncf %108 : vector<1x128xf32> to vector<1x128xbf16>
    %c0_36 = arith.constant 0 : index
    %c0_37 = arith.constant 0 : index
    %110 = vector.load %arg10[%c0_36, %c0_37] : memref<128x128xbf16, #tpu.memory_space<vmem>>, vector<128x128xbf16>
    %cst_38 = arith.constant dense<0.000000e+00> : vector<1x128xf32>
    %111 = tpu.matmul %109, %110, %cst_38 {dimension_numbers = #tpu.dot_dimension_numbers<[1], [0], [0], [1], [0, 0, 1, 1], [], []>} : vector<1x128xbf16>, vector<128x128xbf16>, vector<1x128xf32> -> vector<1x128xf32>
    %c0_39 = arith.constant 0 : index
    %c0_40 = arith.constant 0 : index
    %112 = vector.load %arg11[%c0_39, %c0_40] : memref<1x128xf32, #tpu.memory_space<vmem>>, vector<1x128xf32>
    %113 = arith.addf %111, %112 : vector<1x128xf32>
    %c0_41 = arith.constant 0 : index
    %c0_42 = arith.constant 0 : index
    %c0_43 = arith.constant 0 : index
    %114 = vector.load %arg12[%c0_41, %c0_42, %c0_43] : memref<1x1x128xf32, #tpu.memory_space<vmem>>, vector<1x1x128xf32>
    %115 = vector.shape_cast %114 : vector<1x1x128xf32> to vector<1x128xf32>
    %116 = vector.shape_cast %113 : vector<1x128xf32> to vector<1x1x128xf32>
    tpu.vector_store %arg12[%c0_41, %c0_42, %c0_43], %116 {strides = array<i32>} : memref<1x1x128xf32, #tpu.memory_space<vmem>>, vector<1x1x128xf32>,
    return
  }
  func.func @transform_0(%arg0: i32) -> (i32, i32) {
    %c0_i32 = arith.constant 0 : i32
    %c0_i32_0 = arith.constant 0 : i32
    return %arg0, %c0_i32 : i32, i32
  }
  func.func @transform_1(%arg0: i32) -> (i32, i32) {
    %c0_i32 = arith.constant 0 : i32
    %c0_i32_0 = arith.constant 0 : i32
    %c0_i32_1 = arith.constant 0 : i32
    return %c0_i32, %c0_i32_0 : i32, i32
  }
  func.func @transform_2(%arg0: i32) -> (i32, i32) {
    %c0_i32 = arith.constant 0 : i32
    %c0_i32_0 = arith.constant 0 : i32
    %c0_i32_1 = arith.constant 0 : i32
    return %c0_i32, %c0_i32_0 : i32, i32
  }
  func.func @transform_3(%arg0: i32) -> (i32, i32) {
    %c0_i32 = arith.constant 0 : i32
    %c0_i32_0 = arith.constant 0 : i32
    %c0_i32_1 = arith.constant 0 : i32
    return %c0_i32, %c0_i32_0 : i32, i32
  }
  func.func @transform_4(%arg0: i32) -> (i32, i32) {
    %c0_i32 = arith.constant 0 : i32
    %c0_i32_0 = arith.constant 0 : i32
    %c0_i32_1 = arith.constant 0 : i32
    return %c0_i32, %c0_i32_0 : i32, i32
  }
  func.func @transform_5(%arg0: i32) -> (i32, i32) {
    %c0_i32 = arith.constant 0 : i32
    %c0_i32_0 = arith.constant 0 : i32
    %c0_i32_1 = arith.constant 0 : i32
    return %c0_i32, %c0_i32_0 : i32, i32
  }
  func.func @transform_6(%arg0: i32) -> (i32, i32) {
    %c0_i32 = arith.constant 0 : i32
    %c0_i32_0 = arith.constant 0 : i32
    %c0_i32_1 = arith.constant 0 : i32
    return %c0_i32, %c0_i32_0 : i32, i32
  }
  func.func @transform_7(%arg0: i32) -> (i32, i32) {
    %c0_i32 = arith.constant 0 : i32
    %c0_i32_0 = arith.constant 0 : i32
    %c0_i32_1 = arith.constant 0 : i32
    return %c0_i32, %c0_i32_0 : i32, i32
  }
  func.func @transform_8(%arg0: i32) -> (i32, i32) {
    %c0_i32 = arith.constant 0 : i32
    %c0_i32_0 = arith.constant 0 : i32
    %c0_i32_1 = arith.constant 0 : i32
    return %c0_i32, %c0_i32_0 : i32, i32
  }
  func.func @transform_9(%arg0: i32) -> (i32, i32) {
    %c0_i32 = arith.constant 0 : i32
    %c0_i32_0 = arith.constant 0 : i32
    %c0_i32_1 = arith.constant 0 : i32
    return %c0_i32, %c0_i32_0 : i32, i32
  }
  func.func @transform_10(%arg0: i32) -> (i32, i32) {
    %c0_i32 = arith.constant 0 : i32
    %c0_i32_0 = arith.constant 0 : i32
    %c0_i32_1 = arith.constant 0 : i32
    return %c0_i32, %c0_i32_0 : i32, i32
  }
  func.func @transform_11(%arg0: i32) -> (i32, i32, i32) {
    %c0_i32 = arith.constant 0 : i32
    %c0_i32_0 = arith.constant 0 : i32
    %c0_i32_1 = arith.constant 0 : i32
    return %arg0, %c0_i32, %c0_i32_0 : i32, i32, i32
  }
}

module attributes {stable_mosaic.version = 11 : i64} {
  func.func @_classifier_kernel(%arg0: i32, %arg1: memref<8x128xf32, #tpu.memory_space<vmem>>, %arg2: memref<8x128xf32, #tpu.memory_space<vmem>>, %arg3: memref<128x128xbf16, #tpu.memory_space<vmem>>, %arg4: memref<1x128xf32, #tpu.memory_space<vmem>>, %arg5: memref<128x128xbf16, #tpu.memory_space<vmem>>, %arg6: memref<128x128xbf16, #tpu.memory_space<vmem>>, %arg7: memref<128x128xbf16, #tpu.memory_space<vmem>>, %arg8: memref<128x128xbf16, #tpu.memory_space<vmem>>, %arg9: memref<1x128xf32, #tpu.memory_space<vmem>>, %arg10: memref<128x128xbf16, #tpu.memory_space<vmem>>, %arg11: memref<1x128xf32, #tpu.memory_space<vmem>>, %arg12: memref<1x1x128xf32, #tpu.memory_space<vmem>>) attributes {dimension_semantics = [#tpu.dimension_semantics<parallel>], iteration_bounds = array<i64: 2>, scalar_prefetch = 0 : i64, scratch_operands = 0 : i64, tpu.core_type = #tpu.core_type<tc>, window_params = [{transform_indices = @transform_0, window_bounds = array<i64: 8, 128>}, {pipeline_mode = #tpu.pipeline_mode<synchronous>, transform_indices = @transform_1, window_bounds = array<i64: 8, 128>}, {pipeline_mode = #tpu.pipeline_mode<synchronous>, transform_indices = @transform_2, window_bounds = array<i64: 128, 128>}, {pipeline_mode = #tpu.pipeline_mode<synchronous>, transform_indices = @transform_3, window_bounds = array<i64: 1, 128>}, {pipeline_mode = #tpu.pipeline_mode<synchronous>, transform_indices = @transform_4, window_bounds = array<i64: 128, 128>}, {pipeline_mode = #tpu.pipeline_mode<synchronous>, transform_indices = @transform_5, window_bounds = array<i64: 128, 128>}, {pipeline_mode = #tpu.pipeline_mode<synchronous>, transform_indices = @transform_6, window_bounds = array<i64: 128, 128>}, {pipeline_mode = #tpu.pipeline_mode<synchronous>, transform_indices = @transform_7, window_bounds = array<i64: 128, 128>}, {pipeline_mode = #tpu.pipeline_mode<synchronous>, transform_indices = @transform_8, window_bounds = array<i64: 1, 128>}, {pipeline_mode = #tpu.pipeline_mode<synchronous>, transform_indices = @transform_9, window_bounds = array<i64: 128, 128>}, {pipeline_mode = #tpu.pipeline_mode<synchronous>, transform_indices = @transform_10, window_bounds = array<i64: 1, 128>}, {transform_indices = @transform_11, window_bounds = array<i64: 1, 1, 128>}]} {
    %c0 = arith.constant 0 : index
    %c0_0 = arith.constant 0 : index
    %0 = vector.load %arg1[%c0, %c0_0] : memref<8x128xf32, #tpu.memory_space<vmem>>, vector<8x128xf32>
    %1 = arith.truncf %0 : vector<8x128xf32> to vector<8x128xbf16>
    %c0_1 = arith.constant 0 : index
    %c0_2 = arith.constant 0 : index
    %2 = vector.load %arg2[%c0_1, %c0_2] : memref<8x128xf32, #tpu.memory_space<vmem>>, vector<8x128xf32>
    %3 = vector.shape_cast %2 : vector<8x128xf32> to vector<1x8x128xf32>
    %4 = vector.shape_cast %3 : vector<1x8x128xf32> to vector<8x128xf32>
    %c0_3 = arith.constant 0 : index
    %c0_4 = arith.constant 0 : index
    %5 = vector.load %arg3[%c0_3, %c0_4] : memref<128x128xbf16, #tpu.memory_space<vmem>>, vector<128x128xbf16>
    %cst = arith.constant dense<0.000000e+00> : vector<8x128xf32>
    %6 = tpu.matmul %1, %5, %cst {dimension_numbers = #tpu.dot_dimension_numbers<[1], [0], [0], [1], [0, 0, 1, 1], [], []>} : vector<8x128xbf16>, vector<128x128xbf16>, vector<8x128xf32> -> vector<8x128xf32>
    %c0_5 = arith.constant 0 : index
    %c0_6 = arith.constant 0 : index
    %7 = vector.load %arg4[%c0_5, %c0_6] : memref<1x128xf32, #tpu.memory_space<vmem>>, vector<1x128xf32>
    %8 = vector.broadcast %7 : vector<1x128xf32> to vector<8x128xf32>
    %9 = arith.addf %6, %8 : vector<8x128xf32>
    %10 = arith.addf %9, %4 : vector<8x128xf32>
    %11 = arith.truncf %10 : vector<8x128xf32> to vector<8x128xbf16>
    %c0_7 = arith.constant 0 : index
    %c0_8 = arith.constant 0 : index
    %12 = vector.load %arg5[%c0_7, %c0_8] : memref<128x128xbf16, #tpu.memory_space<vmem>>, vector<128x128xbf16>
    %cst_9 = arith.constant dense<0.000000e+00> : vector<8x128xf32>
    %13 = tpu.matmul %11, %12, %cst_9 {dimension_numbers = #tpu.dot_dimension_numbers<[1], [0], [0], [1], [0, 0, 1, 1], [], []>} : vector<8x128xbf16>, vector<128x128xbf16>, vector<8x128xf32> -> vector<8x128xf32>
    %14 = vector.shape_cast %13 : vector<8x128xf32> to vector<1x8x128xf32>
    %c0_10 = arith.constant 0 : index
    %c0_11 = arith.constant 0 : index
    %15 = vector.load %arg6[%c0_10, %c0_11] : memref<128x128xbf16, #tpu.memory_space<vmem>>, vector<128x128xbf16>
    %cst_12 = arith.constant dense<0.000000e+00> : vector<8x128xf32>
    %16 = tpu.matmul %11, %15, %cst_12 {dimension_numbers = #tpu.dot_dimension_numbers<[1], [0], [0], [1], [0, 0, 1, 1], [], []>} : vector<8x128xbf16>, vector<128x128xbf16>, vector<8x128xf32> -> vector<8x128xf32>
    %17 = vector.shape_cast %16 : vector<8x128xf32> to vector<1x8x128xf32>
    %c0_13 = arith.constant 0 : index
    %c0_14 = arith.constant 0 : index
    %18 = vector.load %arg7[%c0_13, %c0_14] : memref<128x128xbf16, #tpu.memory_space<vmem>>, vector<128x128xbf16>
    %cst_15 = arith.constant dense<0.000000e+00> : vector<8x128xf32>
    %19 = tpu.matmul %11, %18, %cst_15 {dimension_numbers = #tpu.dot_dimension_numbers<[1], [0], [0], [1], [0, 0, 1, 1], [], []>} : vector<8x128xbf16>, vector<128x128xbf16>, vector<8x128xf32> -> vector<8x128xf32>
    %20 = vector.shape_cast %19 : vector<8x128xf32> to vector<1x8x128xf32>
    %21 = tpu.iota {dimensions = array<i32: 0>} : vector<8x8xi32>
    %22 = tpu.iota {dimensions = array<i32: 1>} : vector<8x8xi32>
    %23 = arith.subi %22, %21 : vector<8x8xi32>
    %24 = math.absi %23 : vector<8x8xi32>
    %c2_i32 = arith.constant 2 : i32
    %25 = vector.broadcast %c2_i32 : i32 to vector<8x8xi32>
    %26 = arith.cmpi sle, %24, %25 : vector<8x8xi32>
    %cst_16 = arith.constant 0.000000e+00 : f32
    %cst_17 = arith.constant -1.000000e+30 : f32
    %27 = vector.broadcast %cst_16 : f32 to vector<8x8xf32>
    %28 = vector.broadcast %cst_17 : f32 to vector<8x8xf32>
    %29 = arith.select %26, %27, %28 : vector<8x8xi1>, vector<8x8xf32>
    %30 = arith.extui %26 : vector<8x8xi1> to vector<8x8xi32>
    %31 = arith.sitofp %30 : vector<8x8xi32> to vector<8x8xf32>
    %cst_18 = arith.constant dense<0.000000e+00> : vector<8xf32>
    %32 = vector.multi_reduction <add>, %31, %cst_18 [1] : vector<8x8xf32> to vector<8xf32>
    %33 = vector.shape_cast %32 : vector<8xf32> to vector<8x1xf32>
    %cst_19 = arith.constant 5.000000e+00 : f32
    %34 = vector.broadcast %cst_19 : f32 to vector<8x1xf32>
    %35 = arith.subf %34, %33 : vector<8x1xf32>
    %36 = arith.truncf %14 : vector<1x8x128xf32> to vector<1x8x128xbf16>
    %37 = arith.truncf %17 : vector<1x8x128xf32> to vector<1x8x128xbf16>
    "tpu.trace_start"() <{level = 10 : i32, message = "bqd,bkd->bqk"}> : () -> ()
    %cst_20 = arith.constant dense<0.000000e+00> : vector<1x8x8xf32>
    %38 = tpu.matmul %36, %37, %cst_20 {dimension_numbers = #tpu.dot_dimension_numbers<[2], [2], [1], [1], [0, 0, 0, 1, 1, 1], [0], [0]>} : vector<1x8x128xbf16>, vector<1x8x128xbf16>, vector<1x8x8xf32> -> vector<1x8x8xf32>
    "tpu.trace_stop"() : () -> ()
    %39 = vector.shape_cast %29 : vector<8x8xf32> to vector<1x8x8xf32>
    %40 = arith.addf %38, %39 : vector<1x8x8xf32>
    %cst_21 = arith.constant dense<0xFF800000> : vector<1x8xf32>
    %41 = vector.multi_reduction <maximumf>, %40, %cst_21 [2] : vector<1x8x8xf32> to vector<1x8xf32>
    %42 = vector.shape_cast %41 : vector<1x8xf32> to vector<1x8x1xf32>
    %43 = vector.shape_cast %35 : vector<8x1xf32> to vector<1x8x1xf32>
    %cst_22 = arith.constant 0.000000e+00 : f32
    %44 = vector.broadcast %cst_22 : f32 to vector<1x8x1xf32>
    %45 = arith.cmpf ogt, %43, %44 : vector<1x8x1xf32>
    %cst_23 = arith.constant 0.000000e+00 : f32
    %46 = vector.broadcast %cst_23 : f32 to vector<1x8x1xf32>
    %47 = arith.maximumf %42, %46 : vector<1x8x1xf32>
    %48 = arith.select %45, %47, %42 : vector<1x8x1xi1>, vector<1x8x1xf32>
    %49 = vector.broadcast %48 : vector<1x8x1xf32> to vector<1x8x8xf32>
    %50 = arith.subf %40, %49 : vector<1x8x8xf32>
    %51 = math.exp %50 : vector<1x8x8xf32>
    %cst_24 = arith.constant dense<0.000000e+00> : vector<1x8xf32>
    %52 = vector.multi_reduction <add>, %51, %cst_24 [2] : vector<1x8x8xf32> to vector<1x8xf32>
    %53 = vector.shape_cast %52 : vector<1x8xf32> to vector<1x8x1xf32>
    %54 = vector.shape_cast %35 : vector<8x1xf32> to vector<1x8x1xf32>
    %cst_25 = arith.constant 0.000000e+00 : f32
    %55 = vector.broadcast %cst_25 : f32 to vector<1x8x1xf32>
    %56 = arith.subf %55, %48 : vector<1x8x1xf32>
    %57 = math.exp %56 : vector<1x8x1xf32>
    %58 = arith.mulf %54, %57 : vector<1x8x1xf32>
    %59 = arith.addf %53, %58 : vector<1x8x1xf32>
    %60 = tpu.reciprocal %59 {approx = true} : vector<1x8x1xf32> -> vector<1x8x1xf32>
    %61 = vector.broadcast %60 : vector<1x8x1xf32> to vector<1x8x8xf32>
    %62 = arith.mulf %51, %61 : vector<1x8x8xf32>
    %63 = arith.truncf %62 : vector<1x8x8xf32> to vector<1x8x8xbf16>
    %64 = arith.truncf %20 : vector<1x8x128xf32> to vector<1x8x128xbf16>
    "tpu.trace_start"() <{level = 10 : i32, message = "bqk,bkd->bqd"}> : () -> ()
    %cst_26 = arith.constant dense<0.000000e+00> : vector<1x8x128xf32>
    %65 = tpu.matmul %63, %64, %cst_26 {dimension_numbers = #tpu.dot_dimension_numbers<[2], [1], [1], [2], [0, 0, 0, 1, 1, 2], [0], [0]>} : vector<1x8x8xbf16>, vector<1x8x128xbf16>, vector<1x8x128xf32> -> vector<1x8x128xf32>
    "tpu.trace_stop"() : () -> ()
    %66 = vector.shape_cast %65 : vector<1x8x128xf32> to vector<8x128xf32>
    %67 = arith.truncf %66 : vector<8x128xf32> to vector<8x128xbf16>
    %c0_27 = arith.constant 0 : index
    %c0_28 = arith.constant 0 : index
    %68 = vector.load %arg8[%c0_27, %c0_28] : memref<128x128xbf16, #tpu.memory_space<vmem>>, vector<128x128xbf16>
    %cst_29 = arith.constant dense<0.000000e+00> : vector<8x128xf32>
    %69 = tpu.matmul %67, %68, %cst_29 {dimension_numbers = #tpu.dot_dimension_numbers<[1], [0], [0], [1], [0, 0, 1, 1], [], []>} : vector<8x128xbf16>, vector<128x128xbf16>, vector<8x128xf32> -> vector<8x128xf32>
    %c0_30 = arith.constant 0 : index
    %c0_31 = arith.constant 0 : index
    %70 = vector.load %arg9[%c0_30, %c0_31] : memref<1x128xf32, #tpu.memory_space<vmem>>, vector<1x128xf32>
    %71 = vector.broadcast %70 : vector<1x128xf32> to vector<8x128xf32>
    %72 = arith.addf %69, %71 : vector<8x128xf32>
    %73 = vector.shape_cast %72 : vector<8x128xf32> to vector<1x8x128xf32>
    %cst_32 = arith.constant dense<0.000000e+00> : vector<1x128xf32>
    %74 = vector.multi_reduction <add>, %73, %cst_32 [1] : vector<1x8x128xf32> to vector<1x128xf32>
    %cst_33 = arith.constant 8.000000e+00 : f32
    %75 = vector.broadcast %cst_33 : f32 to vector<1x128xf32>
    %76 = arith.divf %74, %75 : vector<1x128xf32>
    %77 = arith.truncf %76 : vector<1x128xf32> to vector<1x128xbf16>
    %c0_34 = arith.constant 0 : index
    %c0_35 = arith.constant 0 : index
    %78 = vector.load %arg10[%c0_34, %c0_35] : memref<128x128xbf16, #tpu.memory_space<vmem>>, vector<128x128xbf16>
    %cst_36 = arith.constant dense<0.000000e+00> : vector<1x128xf32>
    %79 = tpu.matmul %77, %78, %cst_36 {dimension_numbers = #tpu.dot_dimension_numbers<[1], [0], [0], [1], [0, 0, 1, 1], [], []>} : vector<1x128xbf16>, vector<128x128xbf16>, vector<1x128xf32> -> vector<1x128xf32>
    %c0_37 = arith.constant 0 : index
    %c0_38 = arith.constant 0 : index
    %80 = vector.load %arg11[%c0_37, %c0_38] : memref<1x128xf32, #tpu.memory_space<vmem>>, vector<1x128xf32>
    %81 = arith.addf %79, %80 : vector<1x128xf32>
    %c0_39 = arith.constant 0 : index
    %c0_40 = arith.constant 0 : index
    %c0_41 = arith.constant 0 : index
    %82 = vector.load %arg12[%c0_39, %c0_40, %c0_41] : memref<1x1x128xf32, #tpu.memory_space<vmem>>, vector<1x1x128xf32>
    %83 = vector.shape_cast %82 : vector<1x1x128xf32> to vector<1x128xf32>
    %84 = vector.shape_cast %81 : vector<1x128xf32> to vector<1x1x128xf32>
    tpu.vector_store %arg12[%c0_39, %c0_40, %c0_41], %84 {strides = array<i32>} : memref<1x1x128xf32, #tpu.memory_space<vmem>>, vector<1x1x128xf32>,
    return
  }
  func.func @transform_0(%arg0: i32) -> (i32, i32) {
    %c0_i32 = arith.constant 0 : i32
    %c0_i32_0 = arith.constant 0 : i32
    return %arg0, %c0_i32 : i32, i32
  }
  func.func @transform_1(%arg0: i32) -> (i32, i32) {
    %c0_i32 = arith.constant 0 : i32
    %c0_i32_0 = arith.constant 0 : i32
    %c0_i32_1 = arith.constant 0 : i32
    return %c0_i32, %c0_i32_0 : i32, i32
  }
  func.func @transform_2(%arg0: i32) -> (i32, i32) {
    %c0_i32 = arith.constant 0 : i32
    %c0_i32_0 = arith.constant 0 : i32
    %c0_i32_1 = arith.constant 0 : i32
    return %c0_i32, %c0_i32_0 : i32, i32
  }
  func.func @transform_3(%arg0: i32) -> (i32, i32) {
    %c0_i32 = arith.constant 0 : i32
    %c0_i32_0 = arith.constant 0 : i32
    %c0_i32_1 = arith.constant 0 : i32
    return %c0_i32, %c0_i32_0 : i32, i32
  }
  func.func @transform_4(%arg0: i32) -> (i32, i32) {
    %c0_i32 = arith.constant 0 : i32
    %c0_i32_0 = arith.constant 0 : i32
    %c0_i32_1 = arith.constant 0 : i32
    return %c0_i32, %c0_i32_0 : i32, i32
  }
  func.func @transform_5(%arg0: i32) -> (i32, i32) {
    %c0_i32 = arith.constant 0 : i32
    %c0_i32_0 = arith.constant 0 : i32
    %c0_i32_1 = arith.constant 0 : i32
    return %c0_i32, %c0_i32_0 : i32, i32
  }
  func.func @transform_6(%arg0: i32) -> (i32, i32) {
    %c0_i32 = arith.constant 0 : i32
    %c0_i32_0 = arith.constant 0 : i32
    %c0_i32_1 = arith.constant 0 : i32
    return %c0_i32, %c0_i32_0 : i32, i32
  }
  func.func @transform_7(%arg0: i32) -> (i32, i32) {
    %c0_i32 = arith.constant 0 : i32
    %c0_i32_0 = arith.constant 0 : i32
    %c0_i32_1 = arith.constant 0 : i32
    return %c0_i32, %c0_i32_0 : i32, i32
  }
  func.func @transform_8(%arg0: i32) -> (i32, i32) {
    %c0_i32 = arith.constant 0 : i32
    %c0_i32_0 = arith.constant 0 : i32
    %c0_i32_1 = arith.constant 0 : i32
    return %c0_i32, %c0_i32_0 : i32, i32
  }
  func.func @transform_9(%arg0: i32) -> (i32, i32) {
    %c0_i32 = arith.constant 0 : i32
    %c0_i32_0 = arith.constant 0 : i32
    %c0_i32_1 = arith.constant 0 : i32
    return %c0_i32, %c0_i32_0 : i32, i32
  }
  func.func @transform_10(%arg0: i32) -> (i32, i32) {
    %c0_i32 = arith.constant 0 : i32
    %c0_i32_0 = arith.constant 0 : i32
    %c0_i32_1 = arith.constant 0 : i32
    return %c0_i32, %c0_i32_0 : i32, i32
  }
  func.func @transform_11(%arg0: i32) -> (i32, i32, i32) {
    %c0_i32 = arith.constant 0 : i32
    %c0_i32_0 = arith.constant 0 : i32
    %c0_i32_1 = arith.constant 0 : i32
    return %arg0, %c0_i32, %c0_i32_0 : i32, i32, i32
  }
}

</mosaic_0001>

<llo_original>
// kernel: tpu_custom_call.1
$region0: #{tpu_custom_call.1}
  #allocation0 [shape = 'u32[]', space=smem, size = 0x4, offset = 0x4, fixed_abs, tag = 'smem constant byte address 0x4 - core index']
  #allocation1 [shape = 'u32[144,128]{1,0:T(1,128)}', space=vmem, size = 0x12000, scoped, tag = 'internal scratch']
  %s0 = inlined_call_operand.hbm [shape: f32[16,128], index: 0, kind: input, shape index: {}]
  %s1 = inlined_call_operand.hbm [shape: f32[8,128], index: 1, kind: input, shape index: {}]
  %s2 = inlined_call_operand.hbm [shape: bf16[128,128], index: 2, kind: input, shape index: {}]
  %s3 = inlined_call_operand.vmem [shape: f32[1,128], index: 3, kind: input, shape index: {}]
  %s4 = inlined_call_operand.hbm [shape: bf16[128,128], index: 4, kind: input, shape index: {}]
  %s5 = inlined_call_operand.hbm [shape: bf16[128,128], index: 5, kind: input, shape index: {}]
  %s6 = inlined_call_operand.hbm [shape: bf16[128,128], index: 6, kind: input, shape index: {}]
  %s7 = inlined_call_operand.hbm [shape: bf16[128,128], index: 7, kind: input, shape index: {}]
  %s8 = inlined_call_operand.vmem [shape: f32[1,128], index: 8, kind: input, shape index: {}]
  %s9 = inlined_call_operand.hbm [shape: bf16[128,128], index: 9, kind: input, shape index: {}]
  %s10 = inlined_call_operand.vmem [shape: f32[1,128], index: 10, kind: input, shape index: {}]
  %s11 = inlined_call_operand.hbm [shape: f32[2,1,128], index: 11, kind: output, shape index: {}]
  %s12 = sld [smem:[#allocation0]]
  $region109: #{tpu_custom_call.1} parent=0
    _
  %s14 = ssub.s32 1, %s12
  %s15 = scalar_select 0, %s14, %s12
  $region1: #{tpu_custom_call.1} parent=0
    #allocation2 [shape = 'u8[8192]{0}', space=vmem, size = 0x2000, scoped, tag = 'input window, operand 0']
    #allocation3 [shape = 's32[2]{0}', space=sflag, size = 0x8, scoped, tag = 'scoped memory for tpu_custom_call.1']
    #allocation4 [shape = 's32[2]{0}', space=sflag, size = 0x8, scoped, tag = 'scoped memory for tpu_custom_call.1']
    #allocation5 [shape = 'u8[4096]{0}', space=vmem, size = 0x1000, scoped, tag = 'input window, operand 1, single buffered']
    #allocation6 [shape = 's32[1]{0}', space=sflag, size = 0x4, scoped, tag = 'scoped memory for tpu_custom_call.1']
    #allocation7 [shape = 'u8[32768]{0}', space=vmem, size = 0x8000, scoped, tag = 'input window, operand 2, single buffered']
    #allocation8 [shape = 'u8[32768]{0}', space=vmem, size = 0x8000, scoped, tag = 'input window, operand 4, single buffered']
    #allocation9 [shape = 's32[1]{0}', space=sflag, size = 0x4, scoped, tag = 'scoped memory for tpu_custom_call.1']
    #allocation10 [shape = 'u8[32768]{0}', space=vmem, size = 0x8000, scoped, tag = 'input window, operand 5, single buffered']
    #allocation11 [shape = 'u8[32768]{0}', space=vmem, size = 0x8000, scoped, tag = 'input window, operand 6, single buffered']
    #allocation12 [shape = 's32[1]{0}', space=sflag, size = 0x4, scoped, tag = 'scoped memory for tpu_custom_call.1']
    #allocation13 [shape = 'u8[32768]{0}', space=vmem, size = 0x8000, scoped, tag = 'input window, operand 7, single buffered']
    #allocation14 [shape = 'u8[32768]{0}', space=vmem, size = 0x8000, scoped, tag = 'input window, operand 9, single buffered']
    #allocation15 [shape = 's32[1]{0}', space=sflag, size = 0x4, scoped, tag = 'scoped memory for tpu_custom_call.1']
    #allocation16 [shape = 'u8[1024]{0}', space=vmem, size = 0x400, scoped, tag = 'output window, operand 0']
    %16 = vsyncpa [#allocation3], 0
    %s17 = scalar_lea.sflag [#allocation3], 1
    %18 = vsyncpa %s17, 0
    %19 = vsyncpa [#allocation6], 0
    %20 = vsyncpa [#allocation9], 0
    %21 = vsyncpa [#allocation12], 0
    %22 = vsyncpa [#allocation15], 0
    %23 = vsyncpa [#allocation4], 0
    %s24 = scalar_lea.sflag [#allocation4], 1
    %25 = vsyncpa %s24, 0
    loop: start=0, step=1, limit=4
    $region2: #{tpu_custom_call.1} parent=1 // loop_pre_header
      _
    $region3: #{tpu_custom_call.1} parent=1 // loop_header
      %s27 = sphi 0, %s31
      %p28 = scmp.ge.s32.totalorder %s27, 4
      %s37 = sphi 0, %s39
      %s40 = sphi 0, %s37
      %s41 = sphi 0, %s40
      %s57 = sphi 0, %s41
      %s61 = sphi 0, %s61
      %s63 = sphi 0, %s61
      %s64 = sphi 0, %s63
      %s78 = sphi 0, %s64
      %s82 = sphi 0, %s82
      %s84 = sphi 0, %s82
      %s85 = sphi 0, %s84
      %s99 = sphi 0, %s85
      %s103 = sphi 0, %s103
      %s105 = sphi 0, %s103
      %s106 = sphi 0, %s105
      %s120 = sphi 0, %s106
      %s124 = sphi 0, %s124
      %s126 = sphi 0, %s124
      %s127 = sphi 0, %s126
      %s141 = sphi 0, %s127
      %s145 = sphi 0, %s145
      %s147 = sphi 0, %s145
      %s148 = sphi 0, %s147
      %s162 = sphi 0, %s148
      %s166 = sphi 0, %s166
      %s168 = sphi 0, %s166
      %s169 = sphi 0, %s168
      %s183 = sphi 0, %s169
      %s187 = sphi 0, %s187
      %s189 = sphi 0, %s187
      %s190 = sphi 0, %s189
      %s204 = sphi 0, %s190
      %s208 = sphi 0, %s208
      %s210 = sphi 0, %s208
      %s211 = sphi 0, %s210
      %s225 = sphi 0, %s211
      %s229 = sphi 0, %s229
      %s231 = sphi 0, %s229
      %s232 = sphi 0, %s231
      %s246 = sphi 0, %s232
      %s250 = sphi 0, %s250
      %s252 = sphi 0, %s250
      %s253 = sphi 0, %s252
      %s267 = sphi 0, %s253
      %s273 = sphi 0, %s275
      %s276 = sphi 0, %s273
      %s277 = sphi 0, %s276
      %s293 = sphi 0, %s277
    $region4: #{tpu_custom_call.1} parent=1 // loop_header_branch
      %30 = sbr.rel (%p28) target = $region8
    $region5: #{tpu_custom_call.1} parent=1 // loop_body
      %s32 = ssub.s32 %s27, 1
      %s33 = ssub.s32 %s27, 2
      %s34 = sadd.s32 %s27, 1
      %s35 = ssub.s32 %s27, %s34
      %p36 = scmp.eq.s32.totalorder %s35, 0
      %s38 = sadd.s32 %s37, 1
      %s39 = scalar_select %p36, %s37, %s38
      %p42 = pneg %p36
      %p43 = scmp.eq.s32.totalorder %s27, 1
      %p44 = por %p42, %p43
      %p45 = scmp.ne.s32.totalorder %s37, %s40
      %p46 = scmp.eq.s32.totalorder %s27, 0
      %p47 = por %p45, %p46
      %p48 = scmp.ne.s32.totalorder %s37, %s40
      %p49 = scmp.eq.s32.totalorder %s32, 1
      %p50 = por %p48, %p49
      %p51 = scmp.ne.s32.totalorder %s40, %s41
      %p52 = scmp.eq.s32.totalorder %s32, 0
      %p53 = por %p51, %p52
      %p54 = scmp.ne.s32.totalorder %s40, %s41
      %p55 = scmp.eq.s32.totalorder %s33, 1
      %p56 = por %p54, %p55
      %p58 = scmp.ne.s32.totalorder %s41, %s57
      %p59 = scmp.eq.s32.totalorder %s33, 0
      %p60 = por %p58, %p59
      %s62 = sadd.s32 %s61, 1
      %p65 = scmp.eq.s32.totalorder %s27, 1
      %p66 = scmp.ne.s32.totalorder %s61, %s63
      %p67 = scmp.eq.s32.totalorder %s27, 0
      %p68 = por %p66, %p67
      %p69 = scmp.ne.s32.totalorder %s61, %s63
      %p70 = scmp.eq.s32.totalorder %s32, 1
      %p71 = por %p69, %p70
      %p72 = scmp.ne.s32.totalorder %s63, %s64
      %p73 = scmp.eq.s32.totalorder %s32, 0
      %p74 = por %p72, %p73
      %p75 = scmp.ne.s32.totalorder %s63, %s64
      %p76 = scmp.eq.s32.totalorder %s33, 1
      %p77 = por %p75, %p76
      %p79 = scmp.ne.s32.totalorder %s64, %s78
      %p80 = scmp.eq.s32.totalorder %s33, 0
      %p81 = por %p79, %p80
      %s83 = sadd.s32 %s82, 1
      %p86 = scmp.eq.s32.totalorder %s27, 1
      %p87 = scmp.ne.s32.totalorder %s82, %s84
      %p88 = scmp.eq.s32.totalorder %s27, 0
      %p89 = por %p87, %p88
      %p90 = scmp.ne.s32.totalorder %s82, %s84
      %p91 = scmp.eq.s32.totalorder %s32, 1
      %p92 = por %p90, %p91
      %p93 = scmp.ne.s32.totalorder %s84, %s85
      %p94 = scmp.eq.s32.totalorder %s32, 0
      %p95 = por %p93, %p94
      %p96 = scmp.ne.s32.totalorder %s84, %s85
      %p97 = scmp.eq.s32.totalorder %s33, 1
      %p98 = por %p96, %p97
      %p100 = scmp.ne.s32.totalorder %s85, %s99
      %p101 = scmp.eq.s32.totalorder %s33, 0
      %p102 = por %p100, %p101
      %s104 = sadd.s32 %s103, 1
      %p107 = scmp.eq.s32.totalorder %s27, 1
      %p108 = scmp.ne.s32.totalorder %s103, %s105
      %p109 = scmp.eq.s32.totalorder %s27, 0
      %p110 = por %p108, %p109
      %p111 = scmp.ne.s32.totalorder %s103, %s105
      %p112 = scmp.eq.s32.totalorder %s32, 1
      %p113 = por %p111, %p112
      %p114 = scmp.ne.s32.totalorder %s105, %s106
      %p115 = scmp.eq.s32.totalorder %s32, 0
      %p116 = por %p114, %p115
      %p117 = scmp.ne.s32.totalorder %s105, %s106
      %p118 = scmp.eq.s32.totalorder %s33, 1
      %p119 = por %p117, %p118
      %p121 = scmp.ne.s32.totalorder %s106, %s120
      %p122 = scmp.eq.s32.totalorder %s33, 0
      %p123 = por %p121, %p122
      %s125 = sadd.s32 %s124, 1
      %p128 = scmp.eq.s32.totalorder %s27, 1
      %p129 = scmp.ne.s32.totalorder %s124, %s126
      %p130 = scmp.eq.s32.totalorder %s27, 0
      %p131 = por %p129, %p130
      %p132 = scmp.ne.s32.totalorder %s124, %s126
      %p133 = scmp.eq.s32.totalorder %s32, 1
      %p134 = por %p132, %p133
      %p135 = scmp.ne.s32.totalorder %s126, %s127
      %p136 = scmp.eq.s32.totalorder %s32, 0
      %p137 = por %p135, %p136
      %p138 = scmp.ne.s32.totalorder %s126, %s127
      %p139 = scmp.eq.s32.totalorder %s33, 1
      %p140 = por %p138, %p139
      %p142 = scmp.ne.s32.totalorder %s127, %s141
      %p143 = scmp.eq.s32.totalorder %s33, 0
      %p144 = por %p142, %p143
      %s146 = sadd.s32 %s145, 1
      %p149 = scmp.eq.s32.totalorder %s27, 1
      %p150 = scmp.ne.s32.totalorder %s145, %s147
      %p151 = scmp.eq.s32.totalorder %s27, 0
      %p152 = por %p150, %p151
      %p153 = scmp.ne.s32.totalorder %s145, %s147
      %p154 = scmp.eq.s32.totalorder %s32, 1
      %p155 = por %p153, %p154
      %p156 = scmp.ne.s32.totalorder %s147, %s148
      %p157 = scmp.eq.s32.totalorder %s32, 0
      %p158 = por %p156, %p157
      %p159 = scmp.ne.s32.totalorder %s147, %s148
      %p160 = scmp.eq.s32.totalorder %s33, 1
      %p161 = por %p159, %p160
      %p163 = scmp.ne.s32.totalorder %s148, %s162
      %p164 = scmp.eq.s32.totalorder %s33, 0
      %p165 = por %p163, %p164
      %s167 = sadd.s32 %s166, 1
      %p170 = scmp.eq.s32.totalorder %s27, 1
      %p171 = scmp.ne.s32.totalorder %s166, %s168
      %p172 = scmp.eq.s32.totalorder %s27, 0
      %p173 = por %p171, %p172
      %p174 = scmp.ne.s32.totalorder %s166, %s168
      %p175 = scmp.eq.s32.totalorder %s32, 1
      %p176 = por %p174, %p175
      %p177 = scmp.ne.s32.totalorder %s168, %s169
      %p178 = scmp.eq.s32.totalorder %s32, 0
      %p179 = por %p177, %p178
      %p180 = scmp.ne.s32.totalorder %s168, %s169
      %p181 = scmp.eq.s32.totalorder %s33, 1
      %p182 = por %p180, %p181
      %p184 = scmp.ne.s32.totalorder %s169, %s183
      %p185 = scmp.eq.s32.totalorder %s33, 0
      %p186 = por %p184, %p185
      %s188 = sadd.s32 %s187, 1
      %p191 = scmp.eq.s32.totalorder %s27, 1
      %p192 = scmp.ne.s32.totalorder %s187, %s189
      %p193 = scmp.eq.s32.totalorder %s27, 0
      %p194 = por %p192, %p193
      %p195 = scmp.ne.s32.totalorder %s187, %s189
      %p196 = scmp.eq.s32.totalorder %s32, 1
      %p197 = por %p195, %p196
      %p198 = scmp.ne.s32.totalorder %s189, %s190
      %p199 = scmp.eq.s32.totalorder %s32, 0
      %p200 = por %p198, %p199
      %p201 = scmp.ne.s32.totalorder %s189, %s190
      %p202 = scmp.eq.s32.totalorder %s33, 1
      %p203 = por %p201, %p202
      %p205 = scmp.ne.s32.totalorder %s190, %s204
      %p206 = scmp.eq.s32.totalorder %s33, 0
      %p207 = por %p205, %p206
      %s209 = sadd.s32 %s208, 1
      %p212 = scmp.eq.s32.totalorder %s27, 1
      %p213 = scmp.ne.s32.totalorder %s208, %s210
      %p214 = scmp.eq.s32.totalorder %s27, 0
      %p215 = por %p213, %p214
      %p216 = scmp.ne.s32.totalorder %s208, %s210
      %p217 = scmp.eq.s32.totalorder %s32, 1
      %p218 = por %p216, %p217
      %p219 = scmp.ne.s32.totalorder %s210, %s211
      %p220 = scmp.eq.s32.totalorder %s32, 0
      %p221 = por %p219, %p220
      %p222 = scmp.ne.s32.totalorder %s210, %s211
      %p223 = scmp.eq.s32.totalorder %s33, 1
      %p224 = por %p222, %p223
      %p226 = scmp.ne.s32.totalorder %s211, %s225
      %p227 = scmp.eq.s32.totalorder %s33, 0
      %p228 = por %p226, %p227
      %s230 = sadd.s32 %s229, 1
      %p233 = scmp.eq.s32.totalorder %s27, 1
      %p234 = scmp.ne.s32.totalorder %s229, %s231
      %p235 = scmp.eq.s32.totalorder %s27, 0
      %p236 = por %p234, %p235
      %p237 = scmp.ne.s32.totalorder %s229, %s231
      %p238 = scmp.eq.s32.totalorder %s32, 1
      %p239 = por %p237, %p238
      %p240 = scmp.ne.s32.totalorder %s231, %s232
      %p241 = scmp.eq.s32.totalorder %s32, 0
      %p242 = por %p240, %p241
      %p243 = scmp.ne.s32.totalorder %s231, %s232
      %p244 = scmp.eq.s32.totalorder %s33, 1
      %p245 = por %p243, %p244
      %p247 = scmp.ne.s32.totalorder %s232, %s246
      %p248 = scmp.eq.s32.totalorder %s33, 0
      %p249 = por %p247, %p248
      %s251 = sadd.s32 %s250, 1
      %p254 = scmp.eq.s32.totalorder %s27, 1
      %p255 = scmp.ne.s32.totalorder %s250, %s252
      %p256 = scmp.eq.s32.totalorder %s27, 0
      %p257 = por %p255, %p256
      %p258 = scmp.ne.s32.totalorder %s250, %s252
      %p259 = scmp.eq.s32.totalorder %s32, 1
      %p260 = por %p258, %p259
      %p261 = scmp.ne.s32.totalorder %s252, %s253
      %p262 = scmp.eq.s32.totalorder %s32, 0
      %p263 = por %p261, %p262
      %p264 = scmp.ne.s32.totalorder %s252, %s253
      %p265 = scmp.eq.s32.totalorder %s33, 1
      %p266 = por %p264, %p265
      %p268 = scmp.ne.s32.totalorder %s253, %s267
      %p269 = scmp.eq.s32.totalorder %s33, 0
      %p270 = por %p268, %p269
      %s271 = ssub.s32 %s27, %s34
      %p272 = scmp.eq.s32.totalorder %s271, 0
      %s274 = sadd.s32 %s273, 1
      %s275 = scalar_select %p272, %s273, %s274
      %p278 = pneg %p272
      %p279 = scmp.eq.s32.totalorder %s27, 1
      %p280 = por %p278, %p279
      %p281 = scmp.ne.s32.totalorder %s273, %s276
      %p282 = scmp.eq.s32.totalorder %s27, 0
      %p283 = por %p281, %p282
      %p284 = scmp.ne.s32.totalorder %s273, %s276
      %p285 = scmp.eq.s32.totalorder %s32, 1
      %p286 = por %p284, %p285
      %p287 = scmp.ne.s32.totalorder %s276, %s277
      %p288 = scmp.eq.s32.totalorder %s32, 0
      %p289 = por %p287, %p288
      %p290 = scmp.ne.s32.totalorder %s276, %s277
      %p291 = scmp.eq.s32.totalorder %s33, 1
      %p292 = por %p290, %p291
      %p294 = scmp.ne.s32.totalorder %s277, %s293
      %p295 = scmp.eq.s32.totalorder %s33, 0
      %p296 = por %p294, %p295
      %p297 = scmp.le.s32.totalorder 1, %s27
      %p298 = scmp.lt.s32.totalorder %s27, 3
      %p299 = pnand %p297, %p298
      %p300 = pneg %p299
      // Predicated region
      $region9: #{tpu_custom_call.1} parent=5 // pred_check
        _
      $region10: #{tpu_custom_call.1} parent=5 // pred_check_branch
        %302 = sbr.rel (%p299) target = $region12
      $region11: #{tpu_custom_call.1} parent=5 // pred_region
        %s303 = ssub.s32 %s27, 1
        // Predicated region
        $region13: #{tpu_custom_call.1} parent=11 // pred_check
          %p304 = pneg %p74
        $region14: #{tpu_custom_call.1} parent=11 // pred_check_branch
          %306 = sbr.rel (%p304) target = $region16
        $region15: #{tpu_custom_call.1} parent=11 // pred_region
          %s308 = ssub.s32 128, 128
          %309 = vsyncadd [#allocation6], %s308
          %s311 = sshll.u32 [#allocation5], 4
          %s312 = int_to_ptr.vmem [resolvable:$true] %s311
          %314 = dma.hbm_to_vmem [thread:$0]  %s1, 128, %s312, [#allocation6]
        $region16: #{tpu_custom_call.1} parent=11 // pred_fallthru
          _
        // Predicated region
        $region17: #{tpu_custom_call.1} parent=11 // pred_check
          %p315 = pneg %p95
        $region18: #{tpu_custom_call.1} parent=11 // pred_check_branch
          %317 = sbr.rel (%p315) target = $region20
        $region19: #{tpu_custom_call.1} parent=11 // pred_region
          %s319 = ssub.s32 1024, 1024
          %320 = vsyncadd [#allocation6], %s319
          %s321 = sshll.u32 [#allocation7], 4
          %s322 = int_to_ptr.vmem [resolvable:$true] %s321
          %327 = dma.hbm_to_vmem [thread:$0]  %s2, 1024, %s322, [#allocation6], 64, 64, 4
        $region20: #{tpu_custom_call.1} parent=11 // pred_fallthru
          _
        // Predicated region
        $region21: #{tpu_custom_call.1} parent=11 // pred_check
          %p328 = pneg %p116
        $region22: #{tpu_custom_call.1} parent=11 // pred_check_branch
          %330 = sbr.rel (%p328) target = $region24
        $region23: #{tpu_custom_call.1} parent=11 // pred_region
          _
        $region24: #{tpu_custom_call.1} parent=11 // pred_fallthru
          _
        // Predicated region
        $region25: #{tpu_custom_call.1} parent=11 // pred_check
          %p331 = pneg %p137
        $region26: #{tpu_custom_call.1} parent=11 // pred_check_branch
          %333 = sbr.rel (%p331) target = $region28
        $region27: #{tpu_custom_call.1} parent=11 // pred_region
          %s335 = ssub.s32 1024, 1024
          %336 = vsyncadd [#allocation9], %s335
          %s337 = sshll.u32 [#allocation8], 4
          %s338 = int_to_ptr.vmem [resolvable:$true] %s337
          %343 = dma.hbm_to_vmem [thread:$0]  %s4, 1024, %s338, [#allocation9], 64, 64, 4
        $region28: #{tpu_custom_call.1} parent=11 // pred_fallthru
          _
        // Predicated region
        $region29: #{tpu_custom_call.1} parent=11 // pred_check
          %p344 = pneg %p158
        $region30: #{tpu_custom_call.1} parent=11 // pred_check_branch
          %346 = sbr.rel (%p344) target = $region32
        $region31: #{tpu_custom_call.1} parent=11 // pred_region
          %s348 = ssub.s32 1024, 1024
          %349 = vsyncadd [#allocation9], %s348
          %s350 = sshll.u32 [#allocation10], 4
          %s351 = int_to_ptr.vmem [resolvable:$true] %s350
          %356 = dma.hbm_to_vmem [thread:$0]  %s5, 1024, %s351, [#allocation9], 64, 64, 4
        $region32: #{tpu_custom_call.1} parent=11 // pred_fallthru
          _
        // Predicated region
        $region33: #{tpu_custom_call.1} parent=11 // pred_check
          %p357 = pneg %p179
        $region34: #{tpu_custom_call.1} parent=11 // pred_check_branch
          %359 = sbr.rel (%p357) target = $region36
        $region35: #{tpu_custom_call.1} parent=11 // pred_region
          %s361 = ssub.s32 1024, 1024
          %362 = vsyncadd [#allocation12], %s361
          %s363 = sshll.u32 [#allocation11], 4
          %s364 = int_to_ptr.vmem [resolvable:$true] %s363
          %369 = dma.hbm_to_vmem [thread:$0]  %s6, 1024, %s364, [#allocation12], 64, 64, 4
        $region36: #{tpu_custom_call.1} parent=11 // pred_fallthru
          _
        // Predicated region
        $region37: #{tpu_custom_call.1} parent=11 // pred_check
          %p370 = pneg %p200
        $region38: #{tpu_custom_call.1} parent=11 // pred_check_branch
          %372 = sbr.rel (%p370) target = $region40
        $region39: #{tpu_custom_call.1} parent=11 // pred_region
          %s374 = ssub.s32 1024, 1024
          %375 = vsyncadd [#allocation12], %s374
          %s376 = sshll.u32 [#allocation13], 4
          %s377 = int_to_ptr.vmem [resolvable:$true] %s376
          %382 = dma.hbm_to_vmem [thread:$0]  %s7, 1024, %s377, [#allocation12], 64, 64, 4
        $region40: #{tpu_custom_call.1} parent=11 // pred_fallthru
          _
        // Predicated region
        $region41: #{tpu_custom_call.1} parent=11 // pred_check
          %p383 = pneg %p221
        $region42: #{tpu_custom_call.1} parent=11 // pred_check_branch
          %385 = sbr.rel (%p383) target = $region44
        $region43: #{tpu_custom_call.1} parent=11 // pred_region
          _
        $region44: #{tpu_custom_call.1} parent=11 // pred_fallthru
          _
        // Predicated region
        $region45: #{tpu_custom_call.1} parent=11 // pred_check
          %p386 = pneg %p242
        $region46: #{tpu_custom_call.1} parent=11 // pred_check_branch
          %388 = sbr.rel (%p386) target = $region48
        $region47: #{tpu_custom_call.1} parent=11 // pred_region
          %s390 = ssub.s32 1024, 1024
          %391 = vsyncadd [#allocation15], %s390
          %s392 = sshll.u32 [#allocation14], 4
          %s393 = int_to_ptr.vmem [resolvable:$true] %s392
          %398 = dma.hbm_to_vmem [thread:$0]  %s9, 1024, %s393, [#allocation15], 64, 64, 4
        $region48: #{tpu_custom_call.1} parent=11 // pred_fallthru
          _
        // Predicated region
        $region49: #{tpu_custom_call.1} parent=11 // pred_check
          %p399 = pneg %p263
        $region50: #{tpu_custom_call.1} parent=11 // pred_check_branch
          %401 = sbr.rel (%p399) target = $region52
        $region51: #{tpu_custom_call.1} parent=11 // pred_region
          _
        $region52: #{tpu_custom_call.1} parent=11 // pred_fallthru
          _
      $region12: #{tpu_custom_call.1} parent=5 // pred_fallthru
        _
      %p402 = scmp.lt.s32.totalorder %s27, 2
      // Predicated region
      $region53: #{tpu_custom_call.1} parent=5 // pred_check
        %p403 = pneg %p402
      $region54: #{tpu_custom_call.1} parent=5 // pred_check_branch
        %405 = sbr.rel (%p403) target = $region56
      $region55: #{tpu_custom_call.1} parent=5 // pred_region
        // Predicated region
        $region57: #{tpu_custom_call.1} parent=55 // pred_check
          %p406 = pneg %p47
        $region58: #{tpu_custom_call.1} parent=55 // pred_check_branch
          %408 = sbr.rel (%p406) target = $region60
        $region59: #{tpu_custom_call.1} parent=55 // pred_region
          %s409 = sand.u32 %s37, 1
          %s410 = scalar_lea.sflag [#allocation3], %s409
          %s411 = sand.u32 %s37, 1
          %s412 = smul.addr %s411, 8
          %s413 = scalar_lea.vmem [#allocation2], %s412
          %s415 = ssub.s32 128, 128
          %416 = vsyncadd %s410, %s415
          %s417 = smul.addr %s27, 128
          %s418 = scalar_lea.hbm %s0, %s417
          %s420 = sshll.u32 %s413, 4
          %s421 = int_to_ptr.vmem [resolvable:$true] %s420
          %423 = dma.hbm_to_vmem [thread:$0]  %s418, 128, %s421, %s410
        $region60: #{tpu_custom_call.1} parent=55 // pred_fallthru
          _
      $region56: #{tpu_custom_call.1} parent=5 // pred_fallthru
        _
      %p424 = scmp.le.s32.totalorder 1, %s27
      %p425 = scmp.lt.s32.totalorder %s27, 3
      %p426 = pnand %p424, %p425
      %p427 = pneg %p426
      // Predicated region
      $region61: #{tpu_custom_call.1} parent=5 // pred_check
        _
      $region62: #{tpu_custom_call.1} parent=5 // pred_check_branch
        %429 = sbr.rel (%p426) target = $region64
      $region63: #{tpu_custom_call.1} parent=5 // pred_region
        %s430 = ssub.s32 %s27, 1
        %s431 = sand.u32 %s40, 1
        %s432 = scalar_lea.sflag [#allocation3], %s431
        %s433 = sand.u32 %s40, 1
        %s434 = smul.addr %s433, 8
        %s435 = scalar_lea.vmem [#allocation2], %s434
        // Predicated region
        $region65: #{tpu_custom_call.1} parent=63 // pred_check
          %p436 = pneg %p53
        $region66: #{tpu_custom_call.1} parent=63 // pred_check_branch
          %438 = sbr.rel (%p436) target = $region68
        $region67: #{tpu_custom_call.1} parent=63 // pred_region
          %439 = dma.done %s432, 128
        $region68: #{tpu_custom_call.1} parent=63 // pred_fallthru
          _
        // Predicated region
        $region69: #{tpu_custom_call.1} parent=63 // pred_check
          %p440 = pneg %p74
        $region70: #{tpu_custom_call.1} parent=63 // pred_check_branch
          %442 = sbr.rel (%p440) target = $region72
        $region71: #{tpu_custom_call.1} parent=63 // pred_region
          %443 = dma.done [#allocation6], 128
        $region72: #{tpu_custom_call.1} parent=63 // pred_fallthru
          _
        // Predicated region
        $region73: #{tpu_custom_call.1} parent=63 // pred_check
          %p444 = pneg %p95
        $region74: #{tpu_custom_call.1} parent=63 // pred_check_branch
          %446 = sbr.rel (%p444) target = $region76
        $region75: #{tpu_custom_call.1} parent=63 // pred_region
          %447 = dma.done [#allocation6], 1024
        $region76: #{tpu_custom_call.1} parent=63 // pred_fallthru
          _
        // Predicated region
        $region77: #{tpu_custom_call.1} parent=63 // pred_check
          %p448 = pneg %p137
        $region78: #{tpu_custom_call.1} parent=63 // pred_check_branch
          %450 = sbr.rel (%p448) target = $region80
        $region79: #{tpu_custom_call.1} parent=63 // pred_region
          %451 = dma.done [#allocation9], 1024
        $region80: #{tpu_custom_call.1} parent=63 // pred_fallthru
          _
        // Predicated region
        $region81: #{tpu_custom_call.1} parent=63 // pred_check
          %p452 = pneg %p158
        $region82: #{tpu_custom_call.1} parent=63 // pred_check_branch
          %454 = sbr.rel (%p452) target = $region84
        $region83: #{tpu_custom_call.1} parent=63 // pred_region
          %455 = dma.done [#allocation9], 1024
        $region84: #{tpu_custom_call.1} parent=63 // pred_fallthru
          _
        // Predicated region
        $region85: #{tpu_custom_call.1} parent=63 // pred_check
          %p456 = pneg %p179
        $region86: #{tpu_custom_call.1} parent=63 // pred_check_branch
          %458 = sbr.rel (%p456) target = $region88
        $region87: #{tpu_custom_call.1} parent=63 // pred_region
          %459 = dma.done [#allocation12], 1024
        $region88: #{tpu_custom_call.1} parent=63 // pred_fallthru
          _
        // Predicated region
        $region89: #{tpu_custom_call.1} parent=63 // pred_check
          %p460 = pneg %p200
        $region90: #{tpu_custom_call.1} parent=63 // pred_check_branch
          %462 = sbr.rel (%p460) target = $region92
        $region91: #{tpu_custom_call.1} parent=63 // pred_region
          %463 = dma.done [#allocation12], 1024
        $region92: #{tpu_custom_call.1} parent=63 // pred_fallthru
          _
        // Predicated region
        $region93: #{tpu_custom_call.1} parent=63 // pred_check
          %p464 = pneg %p242
        $region94: #{tpu_custom_call.1} parent=63 // pred_check_branch
          %466 = sbr.rel (%p464) target = $region96
        $region95: #{tpu_custom_call.1} parent=63 // pred_region
          %467 = dma.done [#allocation15], 1024
        $region96: #{tpu_custom_call.1} parent=63 // pred_fallthru
          _
        %s468 = sand.u32 %s40, 1
        %s469 = scalar_lea.sflag [#allocation3], %s468
        %s470 = sand.u32 %s40, 1
        %s471 = smul.addr %s470, 8
        %s472 = scalar_lea.vmem [#allocation2], %s471
        %p473 = pneg %p53
        %p474 = pneg %p50
        %p475 = pneg %p74
        %p476 = pneg %p71
        %p477 = pneg %p95
        %p478 = pneg %p92
        %p479 = pneg %p116
        %p480 = pneg %p113
        %p481 = pneg %p137
        %p482 = pneg %p134
        %p483 = pneg %p158
        %p484 = pneg %p155
        %p485 = pneg %p179
        %p486 = pneg %p176
        %p487 = pneg %p200
        %p488 = pneg %p197
        %p489 = pneg %p221
        %p490 = pneg %p218
        %p491 = pneg %p242
        %p492 = pneg %p239
        %p493 = pneg %p263
        %p494 = pneg %p260
        %p495 = pneg %p289
        %p496 = pneg %p286
        %s497 = sand.u32 %s276, 1
        %s498 = scalar_lea.sflag [#allocation4], %s497
        %s499 = sand.u32 %s276, 1
        %s500 = scalar_lea.vmem [#allocation16], %s499
        %v502 = vld [vmem:[%s435] sm:$0xff]
        %v503 = vpack.c.bf16 %v502, %v502
        %v504 = vld [vmem:[#allocation5] sm:$0xff]
        %v505 = vld [vmem:[#allocation7] sm:$0xf]
        %v506 = vld [vmem:[#allocation7 + $0x4] sm:$0xf]
        %v507 = vld [vmem:[#allocation7 + $0x8] sm:$0xf]
        %v508 = vld [vmem:[#allocation7 + $0xc] sm:$0xf]
        %v509 = vld [vmem:[#allocation7 + $0x10] sm:$0xf]
        %v510 = vld [vmem:[#allocation7 + $0x14] sm:$0xf]
        %v511 = vld [vmem:[#allocation7 + $0x18] sm:$0xf]
        %v512 = vld [vmem:[#allocation7 + $0x1c] sm:$0xf]
        %v513 = vld [vmem:[#allocation7 + $0x20] sm:$0xf]
        %v514 = vld [vmem:[#allocation7 + $0x24] sm:$0xf]
        %v515 = vld [vmem:[#allocation7 + $0x28] sm:$0xf]
        %v516 = vld [vmem:[#allocation7 + $0x2c] sm:$0xf]
        %v517 = vld [vmem:[#allocation7 + $0x30] sm:$0xf]
        %v518 = vld [vmem:[#allocation7 + $0x34] sm:$0xf]
        %v519 = vld [vmem:[#allocation7 + $0x38] sm:$0xf]
        %v520 = vld [vmem:[#allocation7 + $0x3c] sm:$0xf]
        %v521 = vld [vmem:[%s3] sm:$0x1]
        %v523 = vlaneseq
        %v524 = vshrl.u32 %v523, 7
        %v525 = vsub.s32 0, %v524
        %v526 = vrot.slane %v521, %v525
        %v544 = vunpack.c.l.b16 %v505
        %v545 = vunpack.c.l.b16 %v506
        %v546 = vunpack.c.l.b16 %v507
        %v547 = vunpack.c.l.b16 %v508
        %v548 = vunpack.c.l.b16 %v509
        %v549 = vunpack.c.l.b16 %v510
        %v550 = vunpack.c.l.b16 %v511
        %v551 = vunpack.c.l.b16 %v512
        %v552 = vunpack.c.l.b16 %v513
        %v553 = vunpack.c.l.b16 %v514
        %v554 = vunpack.c.l.b16 %v515
        %v555 = vunpack.c.l.b16 %v516
        %v556 = vunpack.c.l.b16 %v517
        %v557 = vunpack.c.l.b16 %v518
        %v558 = vunpack.c.l.b16 %v519
        %v559 = vunpack.c.l.b16 %v520
        %v560 = vpack.c.b16 %v545, %v544
        %v561 = vpack.c.b16 %v547, %v546
        %v562 = vpack.c.b16 %v549, %v548
        %v563 = vpack.c.b16 %v551, %v550
        %v564 = vpack.c.b16 %v553, %v552
        %v565 = vpack.c.b16 %v555, %v554
        %v566 = vpack.c.b16 %v557, %v556
        %v567 = vpack.c.b16 %v559, %v558
        %576 = vmatprep.subr.bf16.mxu0 0
        %577 = vmatpush1.bf16.msra.mxu0 %v560
        %578 = vmatprep.subr.bf16.mxu0 0
        %579 = vmatpush1.bf16.msra.mxu0 %v561
        %580 = vmatprep.subr.bf16.mxu0 0
        %581 = vmatpush1.bf16.msra.mxu0 %v562
        %582 = vmatprep.subr.bf16.mxu0 0
        %583 = vmatpush1.bf16.msra.mxu0 %v563
        %584 = vmatprep.subr.bf16.mxu0 0
        %585 = vmatpush1.bf16.msra.mxu0 %v564
        %586 = vmatprep.subr.bf16.mxu0 0
        %587 = vmatpush1.bf16.msra.mxu0 %v565
        %588 = vmatprep.subr.bf16.mxu0 0
        %589 = vmatpush1.bf16.msra.mxu0 %v566
        %590 = vmatprep.subr.bf16.mxu0 0
        %591 = vmatpush1.bf16.msra.mxu0 %v567
        %592 = vmatprep.subr.bf16.mxu0 0
        %593 = vmatpush1.bf16.msra.mxu0 0
        %594 = vmatprep.subr.bf16.mxu0 0
        %595 = vmatpush1.bf16.msra.mxu0 0
        %596 = vmatprep.subr.bf16.mxu0 0
        %597 = vmatpush1.bf16.msra.mxu0 0
        %598 = vmatprep.subr.bf16.mxu0 0
        %599 = vmatpush1.bf16.msra.mxu0 0
        %600 = vmatprep.subr.bf16.mxu0 0
        %601 = vmatpush1.bf16.msra.mxu0 0
        %602 = vmatprep.subr.bf16.mxu0 0
        %603 = vmatpush1.bf16.msra.mxu0 0
        %604 = vmatprep.subr.bf16.mxu0 0
        %605 = vmatpush1.bf16.msra.mxu0 0
        %606 = vmatprep.subr.bf16.mxu0 0
        %607 = vmatpush1.bf16.msra.mxu0 0
        %608 = vmatprep.mubr.bf16.mxu0 0
        %609 = vmatmul.mubr.bf16.gmra.mrb[0].mxu0 %v503
        %v610 = vpop.f32.mrb[0].mxu0
        %v611 = vadd.f32 %v526, %v610
        %v612 = vpop.f32.mrb[0].mxu0
        %v613 = vpop.f32.mrb[0].mxu0
        %v614 = vpop.f32.mrb[0].mxu0
        %615 = vdwg.mxu0
        %v616 = vadd.f32 %v611, %v504
        %v617 = vpack.c.bf16 %v616, %v616
        %v618 = vld [vmem:[#allocation8] sm:$0xf]
        %v619 = vld [vmem:[#allocation8 + $0x4] sm:$0xf]
        %v620 = vld [vmem:[#allocation8 + $0x8] sm:$0xf]
        %v621 = vld [vmem:[#allocation8 + $0xc] sm:$0xf]
        %v622 = vld [vmem:[#allocation8 + $0x10] sm:$0xf]
        %v623 = vld [vmem:[#allocation8 + $0x14] sm:$0xf]
        %v624 = vld [vmem:[#allocation8 + $0x18] sm:$0xf]
        %v625 = vld [vmem:[#allocation8 + $0x1c] sm:$0xf]
        %v626 = vld [vmem:[#allocation8 + $0x20] sm:$0xf]
        %v627 = vld [vmem:[#allocation8 + $0x24] sm:$0xf]
        %v628 = vld [vmem:[#allocation8 + $0x28] sm:$0xf]
        %v629 = vld [vmem:[#allocation8 + $0x2c] sm:$0xf]
        %v630 = vld [vmem:[#allocation8 + $0x30] sm:$0xf]
        %v631 = vld [vmem:[#allocation8 + $0x34] sm:$0xf]
        %v632 = vld [vmem:[#allocation8 + $0x38] sm:$0xf]
        %v633 = vld [vmem:[#allocation8 + $0x3c] sm:$0xf]
        %v650 = vunpack.c.l.b16 %v618
        %v651 = vunpack.c.l.b16 %v619
        %v652 = vunpack.c.l.b16 %v620
        %v653 = vunpack.c.l.b16 %v621
        %v654 = vunpack.c.l.b16 %v622
        %v655 = vunpack.c.l.b16 %v623
        %v656 = vunpack.c.l.b16 %v624
        %v657 = vunpack.c.l.b16 %v625
        %v658 = vunpack.c.l.b16 %v626
        %v659 = vunpack.c.l.b16 %v627
        %v660 = vunpack.c.l.b16 %v628
        %v661 = vunpack.c.l.b16 %v629
        %v662 = vunpack.c.l.b16 %v630
        %v663 = vunpack.c.l.b16 %v631
        %v664 = vunpack.c.l.b16 %v632
        %v665 = vunpack.c.l.b16 %v633
        %v666 = vpack.c.b16 %v651, %v650
        %v667 = vpack.c.b16 %v653, %v652
        %v668 = vpack.c.b16 %v655, %v654
        %v669 = vpack.c.b16 %v657, %v656
        %v670 = vpack.c.b16 %v659, %v658
        %v671 = vpack.c.b16 %v661, %v660
        %v672 = vpack.c.b16 %v663, %v662
        %v673 = vpack.c.b16 %v665, %v664
        %682 = vmatprep.subr.bf16.mxu0 0
        %683 = vmatpush1.bf16.msra.mxu0 %v666
        %684 = vmatprep.subr.bf16.mxu0 0
        %685 = vmatpush1.bf16.msra.mxu0 %v667
        %686 = vmatprep.subr.bf16.mxu0 0
        %687 = vmatpush1.bf16.msra.mxu0 %v668
        %688 = vmatprep.subr.bf16.mxu0 0
        %689 = vmatpush1.bf16.msra.mxu0 %v669
        %690 = vmatprep.subr.bf16.mxu0 0
        %691 = vmatpush1.bf16.msra.mxu0 %v670
        %692 = vmatprep.subr.bf16.mxu0 0
        %693 = vmatpush1.bf16.msra.mxu0 %v671
        %694 = vmatprep.subr.bf16.mxu0 0
        %695 = vmatpush1.bf16.msra.mxu0 %v672
        %696 = vmatprep.subr.bf16.mxu0 0
        %697 = vmatpush1.bf16.msra.mxu0 %v673
        %698 = vmatprep.subr.bf16.mxu0 0
        %699 = vmatpush1.bf16.msra.mxu0 0
        %700 = vmatprep.subr.bf16.mxu0 0
        %701 = vmatpush1.bf16.msra.mxu0 0
        %702 = vmatprep.subr.bf16.mxu0 0
        %703 = vmatpush1.bf16.msra.mxu0 0
        %704 = vmatprep.subr.bf16.mxu0 0
        %705 = vmatpush1.bf16.msra.mxu0 0
        %706 = vmatprep.subr.bf16.mxu0 0
        %707 = vmatpush1.bf16.msra.mxu0 0
        %708 = vmatprep.subr.bf16.mxu0 0
        %709 = vmatpush1.bf16.msra.mxu0 0
        %710 = vmatprep.subr.bf16.mxu0 0
        %711 = vmatpush1.bf16.msra.mxu0 0
        %712 = vmatprep.subr.bf16.mxu0 0
        %713 = vmatpush1.bf16.msra.mxu0 0
        %714 = vmatprep.mubr.bf16.mxu0 0
        %715 = vmatmul.mubr.bf16.gmra.mrb[0].mxu0 %v617
        %v716 = vpop.f32.mrb[0].mxu0
        %v717 = vadd.f32 0.0, %v716
        %v718 = vpop.f32.mrb[0].mxu0
        %v719 = vpop.f32.mrb[0].mxu0
        %v720 = vpop.f32.mrb[0].mxu0
        %721 = vdwg.mxu0
        %v722 = vld [vmem:[#allocation10] sm:$0xf]
        %v723 = vld [vmem:[#allocation10 + $0x4] sm:$0xf]
        %v724 = vld [vmem:[#allocation10 + $0x8] sm:$0xf]
        %v725 = vld [vmem:[#allocation10 + $0xc] sm:$0xf]
        %v726 = vld [vmem:[#allocation10 + $0x10] sm:$0xf]
        %v727 = vld [vmem:[#allocation10 + $0x14] sm:$0xf]
        %v728 = vld [vmem:[#allocation10 + $0x18] sm:$0xf]
        %v729 = vld [vmem:[#allocation10 + $0x1c] sm:$0xf]
        %v730 = vld [vmem:[#allocation10 + $0x20] sm:$0xf]
        %v731 = vld [vmem:[#allocation10 + $0x24] sm:$0xf]
        %v732 = vld [vmem:[#allocation10 + $0x28] sm:$0xf]
        %v733 = vld [vmem:[#allocation10 + $0x2c] sm:$0xf]
        %v734 = vld [vmem:[#allocation10 + $0x30] sm:$0xf]
        %v735 = vld [vmem:[#allocation10 + $0x34] sm:$0xf]
        %v736 = vld [vmem:[#allocation10 + $0x38] sm:$0xf]
        %v737 = vld [vmem:[#allocation10 + $0x3c] sm:$0xf]
        %v754 = vunpack.c.l.b16 %v722
        %v755 = vunpack.c.l.b16 %v723
        %v756 = vunpack.c.l.b16 %v724
        %v757 = vunpack.c.l.b16 %v725
        %v758 = vunpack.c.l.b16 %v726
        %v759 = vunpack.c.l.b16 %v727
        %v760 = vunpack.c.l.b16 %v728
        %v761 = vunpack.c.l.b16 %v729
        %v762 = vunpack.c.l.b16 %v730
        %v763 = vunpack.c.l.b16 %v731
        %v764 = vunpack.c.l.b16 %v732
        %v765 = vunpack.c.l.b16 %v733
        %v766 = vunpack.c.l.b16 %v734
        %v767 = vunpack.c.l.b16 %v735
        %v768 = vunpack.c.l.b16 %v736
        %v769 = vunpack.c.l.b16 %v737
        %v770 = vpack.c.b16 %v755, %v754
        %v771 = vpack.c.b16 %v757, %v756
        %v772 = vpack.c.b16 %v759, %v758
        %v773 = vpack.c.b16 %v761, %v760
        %v774 = vpack.c.b16 %v763, %v762
        %v775 = vpack.c.b16 %v765, %v764
        %v776 = vpack.c.b16 %v767, %v766
        %v777 = vpack.c.b16 %v769, %v768
        %786 = vmatprep.subr.bf16.mxu0 0
        %787 = vmatpush1.bf16.msra.mxu0 %v770
        %788 = vmatprep.subr.bf16.mxu0 0
        %789 = vmatpush1.bf16.msra.mxu0 %v771
        %790 = vmatprep.subr.bf16.mxu0 0
        %791 = vmatpush1.bf16.msra.mxu0 %v772
        %792 = vmatprep.subr.bf16.mxu0 0
        %793 = vmatpush1.bf16.msra.mxu0 %v773
        %794 = vmatprep.subr.bf16.mxu0 0
        %795 = vmatpush1.bf16.msra.mxu0 %v774
        %796 = vmatprep.subr.bf16.mxu0 0
        %797 = vmatpush1.bf16.msra.mxu0 %v775
        %798 = vmatprep.subr.bf16.mxu0 0
        %799 = vmatpush1.bf16.msra.mxu0 %v776
        %800 = vmatprep.subr.bf16.mxu0 0
        %801 = vmatpush1.bf16.msra.mxu0 %v777
        %802 = vmatprep.subr.bf16.mxu0 0
        %803 = vmatpush1.bf16.msra.mxu0 0
        %804 = vmatprep.subr.bf16.mxu0 0
        %805 = vmatpush1.bf16.msra.mxu0 0
        %806 = vmatprep.subr.bf16.mxu0 0
        %807 = vmatpush1.bf16.msra.mxu0 0
        %808 = vmatprep.subr.bf16.mxu0 0
        %809 = vmatpush1.bf16.msra.mxu0 0
        %810 = vmatprep.subr.bf16.mxu0 0
        %811 = vmatpush1.bf16.msra.mxu0 0
        %812 = vmatprep.subr.bf16.mxu0 0
        %813 = vmatpush1.bf16.msra.mxu0 0
        %814 = vmatprep.subr.bf16.mxu0 0
        %815 = vmatpush1.bf16.msra.mxu0 0
        %816 = vmatprep.subr.bf16.mxu0 0
        %817 = vmatpush1.bf16.msra.mxu0 0
        %818 = vmatprep.mubr.bf16.mxu0 0
        %819 = vmatmul.mubr.bf16.gmra.mrb[0].mxu0 %v617
        %v820 = vpop.f32.mrb[0].mxu0
        %v821 = vadd.f32 0.0, %v820
        %v822 = vpop.f32.mrb[0].mxu0
        %v823 = vpop.f32.mrb[0].mxu0
        %v824 = vpop.f32.mrb[0].mxu0
        %825 = vdwg.mxu0
        %v826 = vld [vmem:[#allocation11] sm:$0xf]
        %v827 = vld [vmem:[#allocation11 + $0x4] sm:$0xf]
        %v828 = vld [vmem:[#allocation11 + $0x8] sm:$0xf]
        %v829 = vld [vmem:[#allocation11 + $0xc] sm:$0xf]
        %v830 = vld [vmem:[#allocation11 + $0x10] sm:$0xf]
        %v831 = vld [vmem:[#allocation11 + $0x14] sm:$0xf]
        %v832 = vld [vmem:[#allocation11 + $0x18] sm:$0xf]
        %v833 = vld [vmem:[#allocation11 + $0x1c] sm:$0xf]
        %v834 = vld [vmem:[#allocation11 + $0x20] sm:$0xf]
        %v835 = vld [vmem:[#allocation11 + $0x24] sm:$0xf]
        %v836 = vld [vmem:[#allocation11 + $0x28] sm:$0xf]
        %v837 = vld [vmem:[#allocation11 + $0x2c] sm:$0xf]
        %v838 = vld [vmem:[#allocation11 + $0x30] sm:$0xf]
        %v839 = vld [vmem:[#allocation11 + $0x34] sm:$0xf]
        %v840 = vld [vmem:[#allocation11 + $0x38] sm:$0xf]
        %v841 = vld [vmem:[#allocation11 + $0x3c] sm:$0xf]
        %v858 = vunpack.c.l.b16 %v826
        %v859 = vunpack.c.l.b16 %v827
        %v860 = vunpack.c.l.b16 %v828
        %v861 = vunpack.c.l.b16 %v829
        %v862 = vunpack.c.l.b16 %v830
        %v863 = vunpack.c.l.b16 %v831
        %v864 = vunpack.c.l.b16 %v832
        %v865 = vunpack.c.l.b16 %v833
        %v866 = vunpack.c.l.b16 %v834
        %v867 = vunpack.c.l.b16 %v835
        %v868 = vunpack.c.l.b16 %v836
        %v869 = vunpack.c.l.b16 %v837
        %v870 = vunpack.c.l.b16 %v838
        %v871 = vunpack.c.l.b16 %v839
        %v872 = vunpack.c.l.b16 %v840
        %v873 = vunpack.c.l.b16 %v841
        %v874 = vpack.c.b16 %v859, %v858
        %v875 = vpack.c.b16 %v861, %v860
        %v876 = vpack.c.b16 %v863, %v862
        %v877 = vpack.c.b16 %v865, %v864
        %v878 = vpack.c.b16 %v867, %v866
        %v879 = vpack.c.b16 %v869, %v868
        %v880 = vpack.c.b16 %v871, %v870
        %v881 = vpack.c.b16 %v873, %v872
        %890 = vmatprep.subr.bf16.mxu0 0
        %891 = vmatpush1.bf16.msra.mxu0 %v874
        %892 = vmatprep.subr.bf16.mxu0 0
        %893 = vmatpush1.bf16.msra.mxu0 %v875
        %894 = vmatprep.subr.bf16.mxu0 0
        %895 = vmatpush1.bf16.msra.mxu0 %v876
        %896 = vmatprep.subr.bf16.mxu0 0
        %897 = vmatpush1.bf16.msra.mxu0 %v877
        %898 = vmatprep.subr.bf16.mxu0 0
        %899 = vmatpush1.bf16.msra.mxu0 %v878
        %900 = vmatprep.subr.bf16.mxu0 0
        %901 = vmatpush1.bf16.msra.mxu0 %v879
        %902 = vmatprep.subr.bf16.mxu0 0
        %903 = vmatpush1.bf16.msra.mxu0 %v880
        %904 = vmatprep.subr.bf16.mxu0 0
        %905 = vmatpush1.bf16.msra.mxu0 %v881
        %906 = vmatprep.subr.bf16.mxu0 0
        %907 = vmatpush1.bf16.msra.mxu0 0
        %908 = vmatprep.subr.bf16.mxu0 0
        %909 = vmatpush1.bf16.msra.mxu0 0
        %910 = vmatprep.subr.bf16.mxu0 0
        %911 = vmatpush1.bf16.msra.mxu0 0
        %912 = vmatprep.subr.bf16.mxu0 0
        %913 = vmatpush1.bf16.msra.mxu0 0
        %914 = vmatprep.subr.bf16.mxu0 0
        %915 = vmatpush1.bf16.msra.mxu0 0
        %916 = vmatprep.subr.bf16.mxu0 0
        %917 = vmatpush1.bf16.msra.mxu0 0
        %918 = vmatprep.subr.bf16.mxu0 0
        %919 = vmatpush1.bf16.msra.mxu0 0
        %920 = vmatprep.subr.bf16.mxu0 0
        %921 = vmatpush1.bf16.msra.mxu0 0
        %922 = vmatprep.mubr.bf16.mxu0 0
        %923 = vmatmul.mubr.bf16.gmra.mrb[0].mxu0 %v617
        %v924 = vpop.f32.mrb[0].mxu0
        %v925 = vadd.f32 0.0, %v924
        %v926 = vpop.f32.mrb[0].mxu0
        %v927 = vpop.f32.mrb[0].mxu0
        %v928 = vpop.f32.mrb[0].mxu0
        %929 = vdwg.mxu0
        %v931 = vrot.slane %v821, 6
        %vm933 = vcmask 1041408
        %v934 = vsel %vm933, 0.0, %v931
        %v935 = vmul.f32 %v717, %v934
        %936 = vadd.xlane.f32.xlu0 %v935
        %v937 = vpop.xlane.xlu0 %936
        %v938 = vrot.slane %v821, 7
        %vm940 = vcmask 1040384
        %v941 = vsel %vm940, 0.0, %v938
        %v942 = vmul.f32 %v717, %v941
        %943 = vadd.xlane.f32.xlu0 %v942
        %v944 = vpop.xlane.xlu0 %943
        %v945 = vmul.f32 %v717, %v821
        %946 = vadd.xlane.f32.xlu0 %v945
        %v947 = vpop.xlane.xlu0 %946
        %v948 = vrot.slane %v821, 1
        %vm950 = vcmask 1046528
        %v951 = vsel %vm950, %v948, 0.0
        %v952 = vmul.f32 %v717, %v951
        %953 = vadd.xlane.f32.xlu0 %v952
        %v954 = vpop.xlane.xlu0 %953
        %v955 = vrot.slane %v821, 2
        %vm957 = vcmask 1045504
        %v958 = vsel %vm957, %v955, 0.0
        %v959 = vmul.f32 %v717, %v958
        %960 = vadd.xlane.f32.xlu0 %v959
        %v961 = vpop.xlane.xlu0 %960
        %v962 = vmax.f32 %v937, %v944
        %v963 = vmax.f32 %v962, %v947
        %v964 = vmax.f32 %v963, %v954
        %v965 = vmax.f32 %v964, %v961
        %v966 = vsub.f32 %v937, %v965
        %v967 = vmul.f32 %v966, 1.442695
        %v968 = vpow.pop %v967
        %v969 = vsub.f32 %v944, %v965
        %v970 = vmul.f32 %v969, 1.442695
        %v971 = vpow.pop %v970
        %v972 = vsub.f32 %v947, %v965
        %v973 = vmul.f32 %v972, 1.442695
        %v974 = vpow.pop %v973
        %v975 = vsub.f32 %v954, %v965
        %v976 = vmul.f32 %v975, 1.442695
        %v977 = vpow.pop %v976
        %v978 = vsub.f32 %v961, %v965
        %v979 = vmul.f32 %v978, 1.442695
        %v980 = vpow.pop %v979
        %v981 = vadd.f32 %v968, %v971
        %v982 = vadd.f32 %v981, %v974
        %v983 = vadd.f32 %v982, %v977
        %v984 = vadd.f32 %v983, %v980
        %v985 = vrcp.pop %v984
        %v986 = vmul.f32 %v968, %v985
        %v987 = vmul.f32 %v971, %v985
        %v988 = vmul.f32 %v974, %v985
        %v989 = vmul.f32 %v977, %v985
        %v990 = vmul.f32 %v980, %v985
        %v992 = vrot.slane %v925, 6
        %v994 = vsel %vm933, 0.0, %v992
        %v995 = vmul.f32 %v986, %v994
        %v996 = vrot.slane %v925, 7
        %v998 = vsel %vm940, 0.0, %v996
        %v999 = vmul.f32 %v987, %v998
        %v1000 = vadd.f32 %v995, %v999
        %v1001 = vmul.f32 %v988, %v925
        %v1002 = vadd.f32 %v1000, %v1001
        %v1003 = vrot.slane %v925, 1
        %v1005 = vsel %vm950, %v1003, 0.0
        %v1006 = vmul.f32 %v989, %v1005
        %v1007 = vadd.f32 %v1002, %v1006
        %v1008 = vrot.slane %v925, 2
        %v1010 = vsel %vm957, %v1008, 0.0
        %v1011 = vmul.f32 %v990, %v1010
        %v1012 = vadd.f32 %v1007, %v1011
        %v1013 = vpack.c.bf16 %v1012, %v1012
        %v1014 = vld [vmem:[#allocation13] sm:$0xf]
        %v1015 = vld [vmem:[#allocation13 + $0x4] sm:$0xf]
        %v1016 = vld [vmem:[#allocation13 + $0x8] sm:$0xf]
        %v1017 = vld [vmem:[#allocation13 + $0xc] sm:$0xf]
        %v1018 = vld [vmem:[#allocation13 + $0x10] sm:$0xf]
        %v1019 = vld [vmem:[#allocation13 + $0x14] sm:$0xf]
        %v1020 = vld [vmem:[#allocation13 + $0x18] sm:$0xf]
        %v1021 = vld [vmem:[#allocation13 + $0x1c] sm:$0xf]
        %v1022 = vld [vmem:[#allocation13 + $0x20] sm:$0xf]
        %v1023 = vld [vmem:[#allocation13 + $0x24] sm:$0xf]
        %v1024 = vld [vmem:[#allocation13 + $0x28] sm:$0xf]
        %v1025 = vld [vmem:[#allocation13 + $0x2c] sm:$0xf]
        %v1026 = vld [vmem:[#allocation13 + $0x30] sm:$0xf]
        %v1027 = vld [vmem:[#allocation13 + $0x34] sm:$0xf]
        %v1028 = vld [vmem:[#allocation13 + $0x38] sm:$0xf]
        %v1029 = vld [vmem:[#allocation13 + $0x3c] sm:$0xf]
        %v1030 = vld [vmem:[%s8] sm:$0x1]
        %v1032 = vlaneseq
        %v1033 = vshrl.u32 %v1032, 7
        %v1034 = vsub.s32 0, %v1033
        %v1035 = vrot.slane %v1030, %v1034
        %v1053 = vunpack.c.l.b16 %v1014
        %v1054 = vunpack.c.l.b16 %v1015
        %v1055 = vunpack.c.l.b16 %v1016
        %v1056 = vunpack.c.l.b16 %v1017
        %v1057 = vunpack.c.l.b16 %v1018
        %v1058 = vunpack.c.l.b16 %v1019
        %v1059 = vunpack.c.l.b16 %v1020
        %v1060 = vunpack.c.l.b16 %v1021
        %v1061 = vunpack.c.l.b16 %v1022
        %v1062 = vunpack.c.l.b16 %v1023
        %v1063 = vunpack.c.l.b16 %v1024
        %v1064 = vunpack.c.l.b16 %v1025
        %v1065 = vunpack.c.l.b16 %v1026
        %v1066 = vunpack.c.l.b16 %v1027
        %v1067 = vunpack.c.l.b16 %v1028
        %v1068 = vunpack.c.l.b16 %v1029
        %v1069 = vpack.c.b16 %v1054, %v1053
        %v1070 = vpack.c.b16 %v1056, %v1055
        %v1071 = vpack.c.b16 %v1058, %v1057
        %v1072 = vpack.c.b16 %v1060, %v1059
        %v1073 = vpack.c.b16 %v1062, %v1061
        %v1074 = vpack.c.b16 %v1064, %v1063
        %v1075 = vpack.c.b16 %v1066, %v1065
        %v1076 = vpack.c.b16 %v1068, %v1067
        %1085 = vmatprep.subr.bf16.mxu0 0
        %1086 = vmatpush1.bf16.msra.mxu0 %v1069
        %1087 = vmatprep.subr.bf16.mxu0 0
        %1088 = vmatpush1.bf16.msra.mxu0 %v1070
        %1089 = vmatprep.subr.bf16.mxu0 0
        %1090 = vmatpush1.bf16.msra.mxu0 %v1071
        %1091 = vmatprep.subr.bf16.mxu0 0
        %1092 = vmatpush1.bf16.msra.mxu0 %v1072
        %1093 = vmatprep.subr.bf16.mxu0 0
        %1094 = vmatpush1.bf16.msra.mxu0 %v1073
        %1095 = vmatprep.subr.bf16.mxu0 0
        %1096 = vmatpush1.bf16.msra.mxu0 %v1074
        %1097 = vmatprep.subr.bf16.mxu0 0
        %1098 = vmatpush1.bf16.msra.mxu0 %v1075
        %1099 = vmatprep.subr.bf16.mxu0 0
        %1100 = vmatpush1.bf16.msra.mxu0 %v1076
        %1101 = vmatprep.subr.bf16.mxu0 0
        %1102 = vmatpush1.bf16.msra.mxu0 0
        %1103 = vmatprep.subr.bf16.mxu0 0
        %1104 = vmatpush1.bf16.msra.mxu0 0
        %1105 = vmatprep.subr.bf16.mxu0 0
        %1106 = vmatpush1.bf16.msra.mxu0 0
        %1107 = vmatprep.subr.bf16.mxu0 0
        %1108 = vmatpush1.bf16.msra.mxu0 0
        %1109 = vmatprep.subr.bf16.mxu0 0
        %1110 = vmatpush1.bf16.msra.mxu0 0
        %1111 = vmatprep.subr.bf16.mxu0 0
        %1112 = vmatpush1.bf16.msra.mxu0 0
        %1113 = vmatprep.subr.bf16.mxu0 0
        %1114 = vmatpush1.bf16.msra.mxu0 0
        %1115 = vmatprep.subr.bf16.mxu0 0
        %1116 = vmatpush1.bf16.msra.mxu0 0
        %1117 = vmatprep.mubr.bf16.mxu0 0
        %1118 = vmatmul.mubr.bf16.gmra.mrb[0].mxu0 %v1013
        %v1119 = vpop.f32.mrb[0].mxu0
        %v1120 = vadd.f32 %v1035, %v1119
        %v1121 = vpop.f32.mrb[0].mxu0
        %v1122 = vpop.f32.mrb[0].mxu0
        %v1123 = vpop.f32.mrb[0].mxu0
        %1124 = vdwg.mxu0
        %v1125 = vrot.slane %v1120, 4
        %v1126 = vadd.f32 %v1120, %v1125
        %v1127 = vrot.slane %v1126, 2
        %v1128 = vadd.f32 %v1126, %v1127
        %v1129 = vrot.slane %v1128, 1
        %v1130 = vadd.f32 %v1128, %v1129
        %v1131 = vrcp.pop 8.0
        %v1132 = vmul.f32 %v1130, %v1131
        %v1133 = vpack.c.bf16 %v1132, %v1132
        %v1134 = vld [vmem:[#allocation14] sm:$0xf]
        %v1135 = vld [vmem:[#allocation14 + $0x4] sm:$0xf]
        %v1136 = vld [vmem:[#allocation14 + $0x8] sm:$0xf]
        %v1137 = vld [vmem:[#allocation14 + $0xc] sm:$0xf]
        %v1138 = vld [vmem:[#allocation14 + $0x10] sm:$0xf]
        %v1139 = vld [vmem:[#allocation14 + $0x14] sm:$0xf]
        %v1140 = vld [vmem:[#allocation14 + $0x18] sm:$0xf]
        %v1141 = vld [vmem:[#allocation14 + $0x1c] sm:$0xf]
        %v1142 = vld [vmem:[#allocation14 + $0x20] sm:$0xf]
        %v1143 = vld [vmem:[#allocation14 + $0x24] sm:$0xf]
        %v1144 = vld [vmem:[#allocation14 + $0x28] sm:$0xf]
        %v1145 = vld [vmem:[#allocation14 + $0x2c] sm:$0xf]
        %v1146 = vld [vmem:[#allocation14 + $0x30] sm:$0xf]
        %v1147 = vld [vmem:[#allocation14 + $0x34] sm:$0xf]
        %v1148 = vld [vmem:[#allocation14 + $0x38] sm:$0xf]
        %v1149 = vld [vmem:[#allocation14 + $0x3c] sm:$0xf]
        %v1150 = vld [vmem:[%s10] sm:$0x1]
        %v1167 = vunpack.c.l.b16 %v1134
        %v1168 = vunpack.c.l.b16 %v1135
        %v1169 = vunpack.c.l.b16 %v1136
        %v1170 = vunpack.c.l.b16 %v1137
        %v1171 = vunpack.c.l.b16 %v1138
        %v1172 = vunpack.c.l.b16 %v1139
        %v1173 = vunpack.c.l.b16 %v1140
        %v1174 = vunpack.c.l.b16 %v1141
        %v1175 = vunpack.c.l.b16 %v1142
        %v1176 = vunpack.c.l.b16 %v1143
        %v1177 = vunpack.c.l.b16 %v1144
        %v1178 = vunpack.c.l.b16 %v1145
        %v1179 = vunpack.c.l.b16 %v1146
        %v1180 = vunpack.c.l.b16 %v1147
        %v1181 = vunpack.c.l.b16 %v1148
        %v1182 = vunpack.c.l.b16 %v1149
        %v1183 = vpack.c.b16 %v1168, %v1167
        %v1184 = vpack.c.b16 %v1170, %v1169
        %v1185 = vpack.c.b16 %v1172, %v1171
        %v1186 = vpack.c.b16 %v1174, %v1173
        %v1187 = vpack.c.b16 %v1176, %v1175
        %v1188 = vpack.c.b16 %v1178, %v1177
        %v1189 = vpack.c.b16 %v1180, %v1179
        %v1190 = vpack.c.b16 %v1182, %v1181
        %1199 = vmatprep.subr.bf16.mxu0 0
        %1200 = vmatpush1.bf16.msra.mxu0 %v1183
        %1201 = vmatprep.subr.bf16.mxu0 0
        %1202 = vmatpush1.bf16.msra.mxu0 %v1184
        %1203 = vmatprep.subr.bf16.mxu0 0
        %1204 = vmatpush1.bf16.msra.mxu0 %v1185
        %1205 = vmatprep.subr.bf16.mxu0 0
        %1206 = vmatpush1.bf16.msra.mxu0 %v1186
        %1207 = vmatprep.subr.bf16.mxu0 0
        %1208 = vmatpush1.bf16.msra.mxu0 %v1187
        %1209 = vmatprep.subr.bf16.mxu0 0
        %1210 = vmatpush1.bf16.msra.mxu0 %v1188
        %1211 = vmatprep.subr.bf16.mxu0 0
        %1212 = vmatpush1.bf16.msra.mxu0 %v1189
        %1213 = vmatprep.subr.bf16.mxu0 0
        %1214 = vmatpush1.bf16.msra.mxu0 %v1190
        %1215 = vmatprep.subr.bf16.mxu0 0
        %1216 = vmatpush1.bf16.msra.mxu0 0
        %1217 = vmatprep.subr.bf16.mxu0 0
        %1218 = vmatpush1.bf16.msra.mxu0 0
        %1219 = vmatprep.subr.bf16.mxu0 0
        %1220 = vmatpush1.bf16.msra.mxu0 0
        %1221 = vmatprep.subr.bf16.mxu0 0
        %1222 = vmatpush1.bf16.msra.mxu0 0
        %1223 = vmatprep.subr.bf16.mxu0 0
        %1224 = vmatpush1.bf16.msra.mxu0 0
        %1225 = vmatprep.subr.bf16.mxu0 0
        %1226 = vmatpush1.bf16.msra.mxu0 0
        %1227 = vmatprep.subr.bf16.mxu0 0
        %1228 = vmatpush1.bf16.msra.mxu0 0
        %1229 = vmatprep.subr.bf16.mxu0 0
        %1230 = vmatpush1.bf16.msra.mxu0 0
        %1231 = vmatprep.mubr.bf16.mxu0 0
        %1232 = vmatmul.mubr.bf16.gmra.mrb[0].mxu0 %v1133
        %v1233 = vpop.f32.mrb[0].mxu0
        %v1234 = vadd.f32 %v1150, %v1233
        %v1235 = vpop.f32.mrb[0].mxu0
        %v1236 = vpop.f32.mrb[0].mxu0
        %v1237 = vpop.f32.mrb[0].mxu0
        %1238 = vdwg.mxu0
        %1239 = vst [vmem:[%s500] sm:$0x1] %v1234
        %s1240 = sand.u32 %s276, 1
        %s1241 = scalar_lea.sflag [#allocation4], %s1240
        %s1242 = sand.u32 %s276, 1
        %s1243 = scalar_lea.vmem [#allocation16], %s1242
        // Predicated region
        $region97: #{tpu_custom_call.1} parent=63 // pred_check
          %p1244 = pneg %p286
        $region98: #{tpu_custom_call.1} parent=63 // pred_check_branch
          %1246 = sbr.rel (%p1244) target = $region100
        $region99: #{tpu_custom_call.1} parent=63 // pred_region
          %s1248 = ssub.s32 16, 16
          %1249 = vsyncadd %s1241, %s1248
          %s1250 = smul.addr %s32, 16
          %s1251 = scalar_lea.hbm %s11, %s1250
          %s1253 = sshll.u32 %s1243, 4
          %s1254 = int_to_ptr.vmem [resolvable:$true] %s1253
          %1256 = dma.vmem_to_hbm [thread:$0]  %s1254, 16, %s1251, %s1241
        $region100: #{tpu_custom_call.1} parent=63 // pred_fallthru
          _
      $region64: #{tpu_custom_call.1} parent=5 // pred_fallthru
        _
      %p1257 = scmp.le.s32.totalorder 2, %s27
      // Predicated region
      $region101: #{tpu_custom_call.1} parent=5 // pred_check
        %p1258 = pneg %p1257
      $region102: #{tpu_custom_call.1} parent=5 // pred_check_branch
        %1260 = sbr.rel (%p1258) target = $region104
      $region103: #{tpu_custom_call.1} parent=5 // pred_region
        %s1261 = ssub.s32 %s27, 2
        // Predicated region
        $region105: #{tpu_custom_call.1} parent=103 // pred_check
          %p1262 = pneg %p292
        $region106: #{tpu_custom_call.1} parent=103 // pred_check_branch
          %1264 = sbr.rel (%p1262) target = $region108
        $region107: #{tpu_custom_call.1} parent=103 // pred_region
          %s1265 = sand.u32 %s277, 1
          %s1266 = scalar_lea.sflag [#allocation4], %s1265
          %s1267 = sand.u32 %s277, 1
          %s1268 = scalar_lea.vmem [#allocation16], %s1267
          %1269 = dma.done %s1266, 16
        $region108: #{tpu_custom_call.1} parent=103 // pred_fallthru
          _
      $region104: #{tpu_custom_call.1} parent=5 // pred_fallthru
        _
    $region6: #{tpu_custom_call.1} parent=1 // loop_footer
      %s31 = sadd.s32 1, %s27
    $region7: #{tpu_custom_call.1} parent=1 // loop_footer_branch
      %26 = sbr.rel target = $region3
    $region8: #{tpu_custom_call.1} parent=1 // loop_exit
      _
    %1270 = vsyncpa [#allocation3], 1
    %s1271 = scalar_lea.sflag [#allocation3], 1
    %1272 = vsyncpa %s1271, 1
    %1273 = vsyncpa [#allocation6], 1
    %1274 = vsyncpa [#allocation9], 1
    %1275 = vsyncpa [#allocation12], 1
    %1276 = vsyncpa [#allocation15], 1
    %1277 = vsyncpa [#allocation4], 1
    %s1278 = scalar_lea.sflag [#allocation4], 1
    %1279 = vsyncpa %s1278, 1

// kernel: tpu_custom_call.1
$region0: #{tpu_custom_call.1}
  #allocation0 [shape = 'u32[]', space=smem, size = 0x4, offset = 0x4, fixed_abs, tag = 'smem constant byte address 0x4 - core index']
  #allocation1 [shape = 'u32[144,128]{1,0:T(1,128)}', space=vmem, size = 0x12000, scoped, tag = 'internal scratch']
  %s0 = inlined_call_operand.hbm [shape: f32[16,128], index: 0, kind: input, shape index: {}]
  %s1 = inlined_call_operand.hbm [shape: f32[8,128], index: 1, kind: input, shape index: {}]
  %s2 = inlined_call_operand.hbm [shape: bf16[128,128], index: 2, kind: input, shape index: {}]
  %s3 = inlined_call_operand.vmem [shape: f32[1,128], index: 3, kind: input, shape index: {}]
  %s4 = inlined_call_operand.hbm [shape: bf16[128,128], index: 4, kind: input, shape index: {}]
  %s5 = inlined_call_operand.hbm [shape: bf16[128,128], index: 5, kind: input, shape index: {}]
  %s6 = inlined_call_operand.hbm [shape: bf16[128,128], index: 6, kind: input, shape index: {}]
  %s7 = inlined_call_operand.hbm [shape: bf16[128,128], index: 7, kind: input, shape index: {}]
  %s8 = inlined_call_operand.vmem [shape: f32[1,128], index: 8, kind: input, shape index: {}]
  %s9 = inlined_call_operand.hbm [shape: bf16[128,128], index: 9, kind: input, shape index: {}]
  %s10 = inlined_call_operand.vmem [shape: f32[1,128], index: 10, kind: input, shape index: {}]
  %s11 = inlined_call_operand.hbm [shape: f32[2,1,128], index: 11, kind: output, shape index: {}]
  %s12 = sld [smem:[#allocation0]]
  $region109: #{tpu_custom_call.1} parent=0
    _
  %s14 = ssub.s32 1, %s12
  %s15 = scalar_select 0, %s14, %s12
  $region1: #{tpu_custom_call.1} parent=0
    #allocation2 [shape = 'u8[8192]{0}', space=vmem, size = 0x2000, scoped, tag = 'input window, operand 0']
    #allocation3 [shape = 's32[2]{0}', space=sflag, size = 0x8, scoped, tag = 'scoped memory for tpu_custom_call.1']
    #allocation4 [shape = 's32[2]{0}', space=sflag, size = 0x8, scoped, tag = 'scoped memory for tpu_custom_call.1']
    #allocation5 [shape = 'u8[4096]{0}', space=vmem, size = 0x1000, scoped, tag = 'input window, operand 1, single buffered']
    #allocation6 [shape = 's32[1]{0}', space=sflag, size = 0x4, scoped, tag = 'scoped memory for tpu_custom_call.1']
    #allocation7 [shape = 'u8[32768]{0}', space=vmem, size = 0x8000, scoped, tag = 'input window, operand 2, single buffered']
    #allocation8 [shape = 'u8[32768]{0}', space=vmem, size = 0x8000, scoped, tag = 'input window, operand 4, single buffered']
    #allocation9 [shape = 's32[1]{0}', space=sflag, size = 0x4, scoped, tag = 'scoped memory for tpu_custom_call.1']
    #allocation10 [shape = 'u8[32768]{0}', space=vmem, size = 0x8000, scoped, tag = 'input window, operand 5, single buffered']
    #allocation11 [shape = 'u8[32768]{0}', space=vmem, size = 0x8000, scoped, tag = 'input window, operand 6, single buffered']
    #allocation12 [shape = 's32[1]{0}', space=sflag, size = 0x4, scoped, tag = 'scoped memory for tpu_custom_call.1']
    #allocation13 [shape = 'u8[32768]{0}', space=vmem, size = 0x8000, scoped, tag = 'input window, operand 7, single buffered']
    #allocation14 [shape = 'u8[32768]{0}', space=vmem, size = 0x8000, scoped, tag = 'input window, operand 9, single buffered']
    #allocation15 [shape = 's32[1]{0}', space=sflag, size = 0x4, scoped, tag = 'scoped memory for tpu_custom_call.1']
    #allocation16 [shape = 'u8[1024]{0}', space=vmem, size = 0x400, scoped, tag = 'output window, operand 0']
    %16 = vsyncpa [#allocation3], 0
    %s17 = scalar_lea.sflag [#allocation3], 1
    %18 = vsyncpa %s17, 0
    %19 = vsyncpa [#allocation6], 0
    %20 = vsyncpa [#allocation9], 0
    %21 = vsyncpa [#allocation12], 0
    %22 = vsyncpa [#allocation15], 0
    %23 = vsyncpa [#allocation4], 0
    %s24 = scalar_lea.sflag [#allocation4], 1
    %25 = vsyncpa %s24, 0
    loop: start=0, step=1, limit=4
    $region2: #{tpu_custom_call.1} parent=1 // loop_pre_header
      _
    $region3: #{tpu_custom_call.1} parent=1 // loop_header
      %s27 = sphi 0, %s31
      %p28 = scmp.ge.s32.totalorder %s27, 4
      %s37 = sphi 0, %s39
      %s40 = sphi 0, %s37
      %s41 = sphi 0, %s40
      %s57 = sphi 0, %s41
      %s61 = sphi 0, %s61
      %s63 = sphi 0, %s61
      %s64 = sphi 0, %s63
      %s78 = sphi 0, %s64
      %s82 = sphi 0, %s82
      %s84 = sphi 0, %s82
      %s85 = sphi 0, %s84
      %s99 = sphi 0, %s85
      %s103 = sphi 0, %s103
      %s105 = sphi 0, %s103
      %s106 = sphi 0, %s105
      %s120 = sphi 0, %s106
      %s124 = sphi 0, %s124
      %s126 = sphi 0, %s124
      %s127 = sphi 0, %s126
      %s141 = sphi 0, %s127
      %s145 = sphi 0, %s145
      %s147 = sphi 0, %s145
      %s148 = sphi 0, %s147
      %s162 = sphi 0, %s148
      %s166 = sphi 0, %s166
      %s168 = sphi 0, %s166
      %s169 = sphi 0, %s168
      %s183 = sphi 0, %s169
      %s187 = sphi 0, %s187
      %s189 = sphi 0, %s187
      %s190 = sphi 0, %s189
      %s204 = sphi 0, %s190
      %s208 = sphi 0, %s208
      %s210 = sphi 0, %s208
      %s211 = sphi 0, %s210
      %s225 = sphi 0, %s211
      %s229 = sphi 0, %s229
      %s231 = sphi 0, %s229
      %s232 = sphi 0, %s231
      %s246 = sphi 0, %s232
      %s250 = sphi 0, %s250
      %s252 = sphi 0, %s250
      %s253 = sphi 0, %s252
      %s267 = sphi 0, %s253
      %s273 = sphi 0, %s275
      %s276 = sphi 0, %s273
      %s277 = sphi 0, %s276
      %s293 = sphi 0, %s277
    $region4: #{tpu_custom_call.1} parent=1 // loop_header_branch
      %30 = sbr.rel (%p28) target = $region8
    $region5: #{tpu_custom_call.1} parent=1 // loop_body
      %s32 = ssub.s32 %s27, 1
      %s33 = ssub.s32 %s27, 2
      %s34 = sadd.s32 %s27, 1
      %s35 = ssub.s32 %s27, %s34
      %p36 = scmp.eq.s32.totalorder %s35, 0
      %s38 = sadd.s32 %s37, 1
      %s39 = scalar_select %p36, %s37, %s38
      %p42 = pneg %p36
      %p43 = scmp.eq.s32.totalorder %s27, 1
      %p44 = por %p42, %p43
      %p45 = scmp.ne.s32.totalorder %s37, %s40
      %p46 = scmp.eq.s32.totalorder %s27, 0
      %p47 = por %p45, %p46
      %p48 = scmp.ne.s32.totalorder %s37, %s40
      %p49 = scmp.eq.s32.totalorder %s32, 1
      %p50 = por %p48, %p49
      %p51 = scmp.ne.s32.totalorder %s40, %s41
      %p52 = scmp.eq.s32.totalorder %s32, 0
      %p53 = por %p51, %p52
      %p54 = scmp.ne.s32.totalorder %s40, %s41
      %p55 = scmp.eq.s32.totalorder %s33, 1
      %p56 = por %p54, %p55
      %p58 = scmp.ne.s32.totalorder %s41, %s57
      %p59 = scmp.eq.s32.totalorder %s33, 0
      %p60 = por %p58, %p59
      %s62 = sadd.s32 %s61, 1
      %p65 = scmp.eq.s32.totalorder %s27, 1
      %p66 = scmp.ne.s32.totalorder %s61, %s63
      %p67 = scmp.eq.s32.totalorder %s27, 0
      %p68 = por %p66, %p67
      %p69 = scmp.ne.s32.totalorder %s61, %s63
      %p70 = scmp.eq.s32.totalorder %s32, 1
      %p71 = por %p69, %p70
      %p72 = scmp.ne.s32.totalorder %s63, %s64
      %p73 = scmp.eq.s32.totalorder %s32, 0
      %p74 = por %p72, %p73
      %p75 = scmp.ne.s32.totalorder %s63, %s64
      %p76 = scmp.eq.s32.totalorder %s33, 1
      %p77 = por %p75, %p76
      %p79 = scmp.ne.s32.totalorder %s64, %s78
      %p80 = scmp.eq.s32.totalorder %s33, 0
      %p81 = por %p79, %p80
      %s83 = sadd.s32 %s82, 1
      %p86 = scmp.eq.s32.totalorder %s27, 1
      %p87 = scmp.ne.s32.totalorder %s82, %s84
      %p88 = scmp.eq.s32.totalorder %s27, 0
      %p89 = por %p87, %p88
      %p90 = scmp.ne.s32.totalorder %s82, %s84
      %p91 = scmp.eq.s32.totalorder %s32, 1
      %p92 = por %p90, %p91
      %p93 = scmp.ne.s32.totalorder %s84, %s85
      %p94 = scmp.eq.s32.totalorder %s32, 0
      %p95 = por %p93, %p94
      %p96 = scmp.ne.s32.totalorder %s84, %s85
      %p97 = scmp.eq.s32.totalorder %s33, 1
      %p98 = por %p96, %p97
      %p100 = scmp.ne.s32.totalorder %s85, %s99
      %p101 = scmp.eq.s32.totalorder %s33, 0
      %p102 = por %p100, %p101
      %s104 = sadd.s32 %s103, 1
      %p107 = scmp.eq.s32.totalorder %s27, 1
      %p108 = scmp.ne.s32.totalorder %s103, %s105
      %p109 = scmp.eq.s32.totalorder %s27, 0
      %p110 = por %p108, %p109
      %p111 = scmp.ne.s32.totalorder %s103, %s105
      %p112 = scmp.eq.s32.totalorder %s32, 1
      %p113 = por %p111, %p112
      %p114 = scmp.ne.s32.totalorder %s105, %s106
      %p115 = scmp.eq.s32.totalorder %s32, 0
      %p116 = por %p114, %p115
      %p117 = scmp.ne.s32.totalorder %s105, %s106
      %p118 = scmp.eq.s32.totalorder %s33, 1
      %p119 = por %p117, %p118
      %p121 = scmp.ne.s32.totalorder %s106, %s120
      %p122 = scmp.eq.s32.totalorder %s33, 0
      %p123 = por %p121, %p122
      %s125 = sadd.s32 %s124, 1
      %p128 = scmp.eq.s32.totalorder %s27, 1
      %p129 = scmp.ne.s32.totalorder %s124, %s126
      %p130 = scmp.eq.s32.totalorder %s27, 0
      %p131 = por %p129, %p130
      %p132 = scmp.ne.s32.totalorder %s124, %s126
      %p133 = scmp.eq.s32.totalorder %s32, 1
      %p134 = por %p132, %p133
      %p135 = scmp.ne.s32.totalorder %s126, %s127
      %p136 = scmp.eq.s32.totalorder %s32, 0
      %p137 = por %p135, %p136
      %p138 = scmp.ne.s32.totalorder %s126, %s127
      %p139 = scmp.eq.s32.totalorder %s33, 1
      %p140 = por %p138, %p139
      %p142 = scmp.ne.s32.totalorder %s127, %s141
      %p143 = scmp.eq.s32.totalorder %s33, 0
      %p144 = por %p142, %p143
      %s146 = sadd.s32 %s145, 1
      %p149 = scmp.eq.s32.totalorder %s27, 1
      %p150 = scmp.ne.s32.totalorder %s145, %s147
      %p151 = scmp.eq.s32.totalorder %s27, 0
      %p152 = por %p150, %p151
      %p153 = scmp.ne.s32.totalorder %s145, %s147
      %p154 = scmp.eq.s32.totalorder %s32, 1
      %p155 = por %p153, %p154
      %p156 = scmp.ne.s32.totalorder %s147, %s148
      %p157 = scmp.eq.s32.totalorder %s32, 0
      %p158 = por %p156, %p157
      %p159 = scmp.ne.s32.totalorder %s147, %s148
      %p160 = scmp.eq.s32.totalorder %s33, 1
      %p161 = por %p159, %p160
      %p163 = scmp.ne.s32.totalorder %s148, %s162
      %p164 = scmp.eq.s32.totalorder %s33, 0
      %p165 = por %p163, %p164
      %s167 = sadd.s32 %s166, 1
      %p170 = scmp.eq.s32.totalorder %s27, 1
      %p171 = scmp.ne.s32.totalorder %s166, %s168
      %p172 = scmp.eq.s32.totalorder %s27, 0
      %p173 = por %p171, %p172
      %p174 = scmp.ne.s32.totalorder %s166, %s168
      %p175 = scmp.eq.s32.totalorder %s32, 1
      %p176 = por %p174, %p175
      %p177 = scmp.ne.s32.totalorder %s168, %s169
      %p178 = scmp.eq.s32.totalorder %s32, 0
      %p179 = por %p177, %p178
      %p180 = scmp.ne.s32.totalorder %s168, %s169
      %p181 = scmp.eq.s32.totalorder %s33, 1
      %p182 = por %p180, %p181
      %p184 = scmp.ne.s32.totalorder %s169, %s183
      %p185 = scmp.eq.s32.totalorder %s33, 0
      %p186 = por %p184, %p185
      %s188 = sadd.s32 %s187, 1
      %p191 = scmp.eq.s32.totalorder %s27, 1
      %p192 = scmp.ne.s32.totalorder %s187, %s189
      %p193 = scmp.eq.s32.totalorder %s27, 0
      %p194 = por %p192, %p193
      %p195 = scmp.ne.s32.totalorder %s187, %s189
      %p196 = scmp.eq.s32.totalorder %s32, 1
      %p197 = por %p195, %p196
      %p198 = scmp.ne.s32.totalorder %s189, %s190
      %p199 = scmp.eq.s32.totalorder %s32, 0
      %p200 = por %p198, %p199
      %p201 = scmp.ne.s32.totalorder %s189, %s190
      %p202 = scmp.eq.s32.totalorder %s33, 1
      %p203 = por %p201, %p202
      %p205 = scmp.ne.s32.totalorder %s190, %s204
      %p206 = scmp.eq.s32.totalorder %s33, 0
      %p207 = por %p205, %p206
      %s209 = sadd.s32 %s208, 1
      %p212 = scmp.eq.s32.totalorder %s27, 1
      %p213 = scmp.ne.s32.totalorder %s208, %s210
      %p214 = scmp.eq.s32.totalorder %s27, 0
      %p215 = por %p213, %p214
      %p216 = scmp.ne.s32.totalorder %s208, %s210
      %p217 = scmp.eq.s32.totalorder %s32, 1
      %p218 = por %p216, %p217
      %p219 = scmp.ne.s32.totalorder %s210, %s211
      %p220 = scmp.eq.s32.totalorder %s32, 0
      %p221 = por %p219, %p220
      %p222 = scmp.ne.s32.totalorder %s210, %s211
      %p223 = scmp.eq.s32.totalorder %s33, 1
      %p224 = por %p222, %p223
      %p226 = scmp.ne.s32.totalorder %s211, %s225
      %p227 = scmp.eq.s32.totalorder %s33, 0
      %p228 = por %p226, %p227
      %s230 = sadd.s32 %s229, 1
      %p233 = scmp.eq.s32.totalorder %s27, 1
      %p234 = scmp.ne.s32.totalorder %s229, %s231
      %p235 = scmp.eq.s32.totalorder %s27, 0
      %p236 = por %p234, %p235
      %p237 = scmp.ne.s32.totalorder %s229, %s231
      %p238 = scmp.eq.s32.totalorder %s32, 1
      %p239 = por %p237, %p238
      %p240 = scmp.ne.s32.totalorder %s231, %s232
      %p241 = scmp.eq.s32.totalorder %s32, 0
      %p242 = por %p240, %p241
      %p243 = scmp.ne.s32.totalorder %s231, %s232
      %p244 = scmp.eq.s32.totalorder %s33, 1
      %p245 = por %p243, %p244
      %p247 = scmp.ne.s32.totalorder %s232, %s246
      %p248 = scmp.eq.s32.totalorder %s33, 0
      %p249 = por %p247, %p248
      %s251 = sadd.s32 %s250, 1
      %p254 = scmp.eq.s32.totalorder %s27, 1
      %p255 = scmp.ne.s32.totalorder %s250, %s252
      %p256 = scmp.eq.s32.totalorder %s27, 0
      %p257 = por %p255, %p256
      %p258 = scmp.ne.s32.totalorder %s250, %s252
      %p259 = scmp.eq.s32.totalorder %s32, 1
      %p260 = por %p258, %p259
      %p261 = scmp.ne.s32.totalorder %s252, %s253
      %p262 = scmp.eq.s32.totalorder %s32, 0
      %p263 = por %p261, %p262
      %p264 = scmp.ne.s32.totalorder %s252, %s253
      %p265 = scmp.eq.s32.totalorder %s33, 1
      %p266 = por %p264, %p265
      %p268 = scmp.ne.s32.totalorder %s253, %s267
      %p269 = scmp.eq.s32.totalorder %s33, 0
      %p270 = por %p268, %p269
      %s271 = ssub.s32 %s27, %s34
      %p272 = scmp.eq.s32.totalorder %s271, 0
      %s274 = sadd.s32 %s273, 1
      %s275 = scalar_select %p272, %s273, %s274
      %p278 = pneg %p272
      %p279 = scmp.eq.s32.totalorder %s27, 1
      %p280 = por %p278, %p279
      %p281 = scmp.ne.s32.totalorder %s273, %s276
      %p282 = scmp.eq.s32.totalorder %s27, 0
      %p283 = por %p281, %p282
      %p284 = scmp.ne.s32.totalorder %s273, %s276
      %p285 = scmp.eq.s32.totalorder %s32, 1
      %p286 = por %p284, %p285
      %p287 = scmp.ne.s32.totalorder %s276, %s277
      %p288 = scmp.eq.s32.totalorder %s32, 0
      %p289 = por %p287, %p288
      %p290 = scmp.ne.s32.totalorder %s276, %s277
      %p291 = scmp.eq.s32.totalorder %s33, 1
      %p292 = por %p290, %p291
      %p294 = scmp.ne.s32.totalorder %s277, %s293
      %p295 = scmp.eq.s32.totalorder %s33, 0
      %p296 = por %p294, %p295
      %p297 = scmp.le.s32.totalorder 1, %s27
      %p298 = scmp.lt.s32.totalorder %s27, 3
      %p299 = pnand %p297, %p298
      %p300 = pneg %p299
      // Predicated region
      $region9: #{tpu_custom_call.1} parent=5 // pred_check
        _
      $region10: #{tpu_custom_call.1} parent=5 // pred_check_branch
        %302 = sbr.rel (%p299) target = $region12
      $region11: #{tpu_custom_call.1} parent=5 // pred_region
        %s303 = ssub.s32 %s27, 1
        // Predicated region
        $region13: #{tpu_custom_call.1} parent=11 // pred_check
          %p304 = pneg %p74
        $region14: #{tpu_custom_call.1} parent=11 // pred_check_branch
          %306 = sbr.rel (%p304) target = $region16
        $region15: #{tpu_custom_call.1} parent=11 // pred_region
          %s308 = ssub.s32 128, 128
          %309 = vsyncadd [#allocation6], %s308
          %s311 = sshll.u32 [#allocation5], 4
          %s312 = int_to_ptr.vmem [resolvable:$true] %s311
          %314 = dma.hbm_to_vmem [thread:$0]  %s1, 128, %s312, [#allocation6]
        $region16: #{tpu_custom_call.1} parent=11 // pred_fallthru
          _
        // Predicated region
        $region17: #{tpu_custom_call.1} parent=11 // pred_check
          %p315 = pneg %p95
        $region18: #{tpu_custom_call.1} parent=11 // pred_check_branch
          %317 = sbr.rel (%p315) target = $region20
        $region19: #{tpu_custom_call.1} parent=11 // pred_region
          %s319 = ssub.s32 1024, 1024
          %320 = vsyncadd [#allocation6], %s319
          %s321 = sshll.u32 [#allocation7], 4
          %s322 = int_to_ptr.vmem [resolvable:$true] %s321
          %327 = dma.hbm_to_vmem [thread:$0]  %s2, 1024, %s322, [#allocation6], 64, 64, 4
        $region20: #{tpu_custom_call.1} parent=11 // pred_fallthru
          _
        // Predicated region
        $region21: #{tpu_custom_call.1} parent=11 // pred_check
          %p328 = pneg %p116
        $region22: #{tpu_custom_call.1} parent=11 // pred_check_branch
          %330 = sbr.rel (%p328) target = $region24
        $region23: #{tpu_custom_call.1} parent=11 // pred_region
          _
        $region24: #{tpu_custom_call.1} parent=11 // pred_fallthru
          _
        // Predicated region
        $region25: #{tpu_custom_call.1} parent=11 // pred_check
          %p331 = pneg %p137
        $region26: #{tpu_custom_call.1} parent=11 // pred_check_branch
          %333 = sbr.rel (%p331) target = $region28
        $region27: #{tpu_custom_call.1} parent=11 // pred_region
          %s335 = ssub.s32 1024, 1024
          %336 = vsyncadd [#allocation9], %s335
          %s337 = sshll.u32 [#allocation8], 4
          %s338 = int_to_ptr.vmem [resolvable:$true] %s337
          %343 = dma.hbm_to_vmem [thread:$0]  %s4, 1024, %s338, [#allocation9], 64, 64, 4
        $region28: #{tpu_custom_call.1} parent=11 // pred_fallthru
          _
        // Predicated region
        $region29: #{tpu_custom_call.1} parent=11 // pred_check
          %p344 = pneg %p158
        $region30: #{tpu_custom_call.1} parent=11 // pred_check_branch
          %346 = sbr.rel (%p344) target = $region32
        $region31: #{tpu_custom_call.1} parent=11 // pred_region
          %s348 = ssub.s32 1024, 1024
          %349 = vsyncadd [#allocation9], %s348
          %s350 = sshll.u32 [#allocation10], 4
          %s351 = int_to_ptr.vmem [resolvable:$true] %s350
          %356 = dma.hbm_to_vmem [thread:$0]  %s5, 1024, %s351, [#allocation9], 64, 64, 4
        $region32: #{tpu_custom_call.1} parent=11 // pred_fallthru
          _
        // Predicated region
        $region33: #{tpu_custom_call.1} parent=11 // pred_check
          %p357 = pneg %p179
        $region34: #{tpu_custom_call.1} parent=11 // pred_check_branch
          %359 = sbr.rel (%p357) target = $region36
        $region35: #{tpu_custom_call.1} parent=11 // pred_region
          %s361 = ssub.s32 1024, 1024
          %362 = vsyncadd [#allocation12], %s361
          %s363 = sshll.u32 [#allocation11], 4
          %s364 = int_to_ptr.vmem [resolvable:$true] %s363
          %369 = dma.hbm_to_vmem [thread:$0]  %s6, 1024, %s364, [#allocation12], 64, 64, 4
        $region36: #{tpu_custom_call.1} parent=11 // pred_fallthru
          _
        // Predicated region
        $region37: #{tpu_custom_call.1} parent=11 // pred_check
          %p370 = pneg %p200
        $region38: #{tpu_custom_call.1} parent=11 // pred_check_branch
          %372 = sbr.rel (%p370) target = $region40
        $region39: #{tpu_custom_call.1} parent=11 // pred_region
          %s374 = ssub.s32 1024, 1024
          %375 = vsyncadd [#allocation12], %s374
          %s376 = sshll.u32 [#allocation13], 4
          %s377 = int_to_ptr.vmem [resolvable:$true] %s376
          %382 = dma.hbm_to_vmem [thread:$0]  %s7, 1024, %s377, [#allocation12], 64, 64, 4
        $region40: #{tpu_custom_call.1} parent=11 // pred_fallthru
          _
        // Predicated region
        $region41: #{tpu_custom_call.1} parent=11 // pred_check
          %p383 = pneg %p221
        $region42: #{tpu_custom_call.1} parent=11 // pred_check_branch
          %385 = sbr.rel (%p383) target = $region44
        $region43: #{tpu_custom_call.1} parent=11 // pred_region
          _
        $region44: #{tpu_custom_call.1} parent=11 // pred_fallthru
          _
        // Predicated region
        $region45: #{tpu_custom_call.1} parent=11 // pred_check
          %p386 = pneg %p242
        $region46: #{tpu_custom_call.1} parent=11 // pred_check_branch
          %388 = sbr.rel (%p386) target = $region48
        $region47: #{tpu_custom_call.1} parent=11 // pred_region
          %s390 = ssub.s32 1024, 1024
          %391 = vsyncadd [#allocation15], %s390
          %s392 = sshll.u32 [#allocation14], 4
          %s393 = int_to_ptr.vmem [resolvable:$true] %s392
          %398 = dma.hbm_to_vmem [thread:$0]  %s9, 1024, %s393, [#allocation15], 64, 64, 4
        $region48: #{tpu_custom_call.1} parent=11 // pred_fallthru
          _
        // Predicated region
        $region49: #{tpu_custom_call.1} parent=11 // pred_check
          %p399 = pneg %p263
        $region50: #{tpu_custom_call.1} parent=11 // pred_check_branch
          %401 = sbr.rel (%p399) target = $region52
        $region51: #{tpu_custom_call.1} parent=11 // pred_region
          _
        $region52: #{tpu_custom_call.1} parent=11 // pred_fallthru
          _
      $region12: #{tpu_custom_call.1} parent=5 // pred_fallthru
        _
      %p402 = scmp.lt.s32.totalorder %s27, 2
      // Predicated region
      $region53: #{tpu_custom_call.1} parent=5 // pred_check
        %p403 = pneg %p402
      $region54: #{tpu_custom_call.1} parent=5 // pred_check_branch
        %405 = sbr.rel (%p403) target = $region56
      $region55: #{tpu_custom_call.1} parent=5 // pred_region
        // Predicated region
        $region57: #{tpu_custom_call.1} parent=55 // pred_check
          %p406 = pneg %p47
        $region58: #{tpu_custom_call.1} parent=55 // pred_check_branch
          %408 = sbr.rel (%p406) target = $region60
        $region59: #{tpu_custom_call.1} parent=55 // pred_region
          %s409 = sand.u32 %s37, 1
          %s410 = scalar_lea.sflag [#allocation3], %s409
          %s411 = sand.u32 %s37, 1
          %s412 = smul.addr %s411, 8
          %s413 = scalar_lea.vmem [#allocation2], %s412
          %s415 = ssub.s32 128, 128
          %416 = vsyncadd %s410, %s415
          %s417 = smul.addr %s27, 128
          %s418 = scalar_lea.hbm %s0, %s417
          %s420 = sshll.u32 %s413, 4
          %s421 = int_to_ptr.vmem [resolvable:$true] %s420
          %423 = dma.hbm_to_vmem [thread:$0]  %s418, 128, %s421, %s410
        $region60: #{tpu_custom_call.1} parent=55 // pred_fallthru
          _
      $region56: #{tpu_custom_call.1} parent=5 // pred_fallthru
        _
      %p424 = scmp.le.s32.totalorder 1, %s27
      %p425 = scmp.lt.s32.totalorder %s27, 3
      %p426 = pnand %p424, %p425
      %p427 = pneg %p426
      // Predicated region
      $region61: #{tpu_custom_call.1} parent=5 // pred_check
        _
      $region62: #{tpu_custom_call.1} parent=5 // pred_check_branch
        %429 = sbr.rel (%p426) target = $region64
      $region63: #{tpu_custom_call.1} parent=5 // pred_region
        %s430 = ssub.s32 %s27, 1
        %s431 = sand.u32 %s40, 1
        %s432 = scalar_lea.sflag [#allocation3], %s431
        %s433 = sand.u32 %s40, 1
        %s434 = smul.addr %s433, 8
        %s435 = scalar_lea.vmem [#allocation2], %s434
        // Predicated region
        $region65: #{tpu_custom_call.1} parent=63 // pred_check
          %p436 = pneg %p53
        $region66: #{tpu_custom_call.1} parent=63 // pred_check_branch
          %438 = sbr.rel (%p436) target = $region68
        $region67: #{tpu_custom_call.1} parent=63 // pred_region
          %439 = dma.done %s432, 128
        $region68: #{tpu_custom_call.1} parent=63 // pred_fallthru
          _
        // Predicated region
        $region69: #{tpu_custom_call.1} parent=63 // pred_check
          %p440 = pneg %p74
        $region70: #{tpu_custom_call.1} parent=63 // pred_check_branch
          %442 = sbr.rel (%p440) target = $region72
        $region71: #{tpu_custom_call.1} parent=63 // pred_region
          %443 = dma.done [#allocation6], 128
        $region72: #{tpu_custom_call.1} parent=63 // pred_fallthru
          _
        // Predicated region
        $region73: #{tpu_custom_call.1} parent=63 // pred_check
          %p444 = pneg %p95
        $region74: #{tpu_custom_call.1} parent=63 // pred_check_branch
          %446 = sbr.rel (%p444) target = $region76
        $region75: #{tpu_custom_call.1} parent=63 // pred_region
          %447 = dma.done [#allocation6], 1024
        $region76: #{tpu_custom_call.1} parent=63 // pred_fallthru
          _
        // Predicated region
        $region77: #{tpu_custom_call.1} parent=63 // pred_check
          %p448 = pneg %p137
        $region78: #{tpu_custom_call.1} parent=63 // pred_check_branch
          %450 = sbr.rel (%p448) target = $region80
        $region79: #{tpu_custom_call.1} parent=63 // pred_region
          %451 = dma.done [#allocation9], 1024
        $region80: #{tpu_custom_call.1} parent=63 // pred_fallthru
          _
        // Predicated region
        $region81: #{tpu_custom_call.1} parent=63 // pred_check
          %p452 = pneg %p158
        $region82: #{tpu_custom_call.1} parent=63 // pred_check_branch
          %454 = sbr.rel (%p452) target = $region84
        $region83: #{tpu_custom_call.1} parent=63 // pred_region
          %455 = dma.done [#allocation9], 1024
        $region84: #{tpu_custom_call.1} parent=63 // pred_fallthru
          _
        // Predicated region
        $region85: #{tpu_custom_call.1} parent=63 // pred_check
          %p456 = pneg %p179
        $region86: #{tpu_custom_call.1} parent=63 // pred_check_branch
          %458 = sbr.rel (%p456) target = $region88
        $region87: #{tpu_custom_call.1} parent=63 // pred_region
          %459 = dma.done [#allocation12], 1024
        $region88: #{tpu_custom_call.1} parent=63 // pred_fallthru
          _
        // Predicated region
        $region89: #{tpu_custom_call.1} parent=63 // pred_check
          %p460 = pneg %p200
        $region90: #{tpu_custom_call.1} parent=63 // pred_check_branch
          %462 = sbr.rel (%p460) target = $region92
        $region91: #{tpu_custom_call.1} parent=63 // pred_region
          %463 = dma.done [#allocation12], 1024
        $region92: #{tpu_custom_call.1} parent=63 // pred_fallthru
          _
        // Predicated region
        $region93: #{tpu_custom_call.1} parent=63 // pred_check
          %p464 = pneg %p242
        $region94: #{tpu_custom_call.1} parent=63 // pred_check_branch
          %466 = sbr.rel (%p464) target = $region96
        $region95: #{tpu_custom_call.1} parent=63 // pred_region
          %467 = dma.done [#allocation15], 1024
        $region96: #{tpu_custom_call.1} parent=63 // pred_fallthru
          _
        %s468 = sand.u32 %s40, 1
        %s469 = scalar_lea.sflag [#allocation3], %s468
        %s470 = sand.u32 %s40, 1
        %s471 = smul.addr %s470, 8
        %s472 = scalar_lea.vmem [#allocation2], %s471
        %p473 = pneg %p53
        %p474 = pneg %p50
        %p475 = pneg %p74
        %p476 = pneg %p71
        %p477 = pneg %p95
        %p478 = pneg %p92
        %p479 = pneg %p116
        %p480 = pneg %p113
        %p481 = pneg %p137
        %p482 = pneg %p134
        %p483 = pneg %p158
        %p484 = pneg %p155
        %p485 = pneg %p179
        %p486 = pneg %p176
        %p487 = pneg %p200
        %p488 = pneg %p197
        %p489 = pneg %p221
        %p490 = pneg %p218
        %p491 = pneg %p242
        %p492 = pneg %p239
        %p493 = pneg %p263
        %p494 = pneg %p260
        %p495 = pneg %p289
        %p496 = pneg %p286
        %s497 = sand.u32 %s276, 1
        %s498 = scalar_lea.sflag [#allocation4], %s497
        %s499 = sand.u32 %s276, 1
        %s500 = scalar_lea.vmem [#allocation16], %s499
        %v502 = vld [vmem:[%s435] sm:$0xff]
        %v503 = vpack.c.bf16 %v502, %v502
        %v504 = vld [vmem:[#allocation5] sm:$0xff]
        %v505 = vld [vmem:[#allocation7] sm:$0xf]
        %v506 = vld [vmem:[#allocation7 + $0x4] sm:$0xf]
        %v507 = vld [vmem:[#allocation7 + $0x8] sm:$0xf]
        %v508 = vld [vmem:[#allocation7 + $0xc] sm:$0xf]
        %v509 = vld [vmem:[#allocation7 + $0x10] sm:$0xf]
        %v510 = vld [vmem:[#allocation7 + $0x14] sm:$0xf]
        %v511 = vld [vmem:[#allocation7 + $0x18] sm:$0xf]
        %v512 = vld [vmem:[#allocation7 + $0x1c] sm:$0xf]
        %v513 = vld [vmem:[#allocation7 + $0x20] sm:$0xf]
        %v514 = vld [vmem:[#allocation7 + $0x24] sm:$0xf]
        %v515 = vld [vmem:[#allocation7 + $0x28] sm:$0xf]
        %v516 = vld [vmem:[#allocation7 + $0x2c] sm:$0xf]
        %v517 = vld [vmem:[#allocation7 + $0x30] sm:$0xf]
        %v518 = vld [vmem:[#allocation7 + $0x34] sm:$0xf]
        %v519 = vld [vmem:[#allocation7 + $0x38] sm:$0xf]
        %v520 = vld [vmem:[#allocation7 + $0x3c] sm:$0xf]
        %v521 = vld [vmem:[%s3] sm:$0x1]
        %v523 = vlaneseq
        %v524 = vshrl.u32 %v523, 7
        %v525 = vsub.s32 0, %v524
        %v526 = vrot.slane %v521, %v525
        %v544 = vunpack.c.l.b16 %v505
        %v545 = vunpack.c.l.b16 %v506
        %v546 = vunpack.c.l.b16 %v507
        %v547 = vunpack.c.l.b16 %v508
        %v548 = vunpack.c.l.b16 %v509
        %v549 = vunpack.c.l.b16 %v510
        %v550 = vunpack.c.l.b16 %v511
        %v551 = vunpack.c.l.b16 %v512
        %v552 = vunpack.c.l.b16 %v513
        %v553 = vunpack.c.l.b16 %v514
        %v554 = vunpack.c.l.b16 %v515
        %v555 = vunpack.c.l.b16 %v516
        %v556 = vunpack.c.l.b16 %v517
        %v557 = vunpack.c.l.b16 %v518
        %v558 = vunpack.c.l.b16 %v519
        %v559 = vunpack.c.l.b16 %v520
        %v560 = vpack.c.b16 %v545, %v544
        %v561 = vpack.c.b16 %v547, %v546
        %v562 = vpack.c.b16 %v549, %v548
        %v563 = vpack.c.b16 %v551, %v550
        %v564 = vpack.c.b16 %v553, %v552
        %v565 = vpack.c.b16 %v555, %v554
        %v566 = vpack.c.b16 %v557, %v556
        %v567 = vpack.c.b16 %v559, %v558
        %576 = vmatprep.subr.bf16.mxu0 0
        %577 = vmatpush1.bf16.msra.mxu0 %v560
        %578 = vmatprep.subr.bf16.mxu0 0
        %579 = vmatpush1.bf16.msra.mxu0 %v561
        %580 = vmatprep.subr.bf16.mxu0 0
        %581 = vmatpush1.bf16.msra.mxu0 %v562
        %582 = vmatprep.subr.bf16.mxu0 0
        %583 = vmatpush1.bf16.msra.mxu0 %v563
        %584 = vmatprep.subr.bf16.mxu0 0
        %585 = vmatpush1.bf16.msra.mxu0 %v564
        %586 = vmatprep.subr.bf16.mxu0 0
        %587 = vmatpush1.bf16.msra.mxu0 %v565
        %588 = vmatprep.subr.bf16.mxu0 0
        %589 = vmatpush1.bf16.msra.mxu0 %v566
        %590 = vmatprep.subr.bf16.mxu0 0
        %591 = vmatpush1.bf16.msra.mxu0 %v567
        %592 = vmatprep.subr.bf16.mxu0 0
        %593 = vmatpush1.bf16.msra.mxu0 0
        %594 = vmatprep.subr.bf16.mxu0 0
        %595 = vmatpush1.bf16.msra.mxu0 0
        %596 = vmatprep.subr.bf16.mxu0 0
        %597 = vmatpush1.bf16.msra.mxu0 0
        %598 = vmatprep.subr.bf16.mxu0 0
        %599 = vmatpush1.bf16.msra.mxu0 0
        %600 = vmatprep.subr.bf16.mxu0 0
        %601 = vmatpush1.bf16.msra.mxu0 0
        %602 = vmatprep.subr.bf16.mxu0 0
        %603 = vmatpush1.bf16.msra.mxu0 0
        %604 = vmatprep.subr.bf16.mxu0 0
        %605 = vmatpush1.bf16.msra.mxu0 0
        %606 = vmatprep.subr.bf16.mxu0 0
        %607 = vmatpush1.bf16.msra.mxu0 0
        %608 = vmatprep.mubr.bf16.mxu0 0
        %609 = vmatmul.mubr.bf16.gmra.mrb[0].mxu0 %v503
        %v610 = vpop.f32.mrb[0].mxu0
        %v611 = vadd.f32 %v526, %v610
        %v612 = vpop.f32.mrb[0].mxu0
        %v613 = vpop.f32.mrb[0].mxu0
        %v614 = vpop.f32.mrb[0].mxu0
        %615 = vdwg.mxu0
        %v616 = vadd.f32 %v611, %v504
        %v617 = vpack.c.bf16 %v616, %v616
        %v618 = vld [vmem:[#allocation8] sm:$0xf]
        %v619 = vld [vmem:[#allocation8 + $0x4] sm:$0xf]
        %v620 = vld [vmem:[#allocation8 + $0x8] sm:$0xf]
        %v621 = vld [vmem:[#allocation8 + $0xc] sm:$0xf]
        %v622 = vld [vmem:[#allocation8 + $0x10] sm:$0xf]
        %v623 = vld [vmem:[#allocation8 + $0x14] sm:$0xf]
        %v624 = vld [vmem:[#allocation8 + $0x18] sm:$0xf]
        %v625 = vld [vmem:[#allocation8 + $0x1c] sm:$0xf]
        %v626 = vld [vmem:[#allocation8 + $0x20] sm:$0xf]
        %v627 = vld [vmem:[#allocation8 + $0x24] sm:$0xf]
        %v628 = vld [vmem:[#allocation8 + $0x28] sm:$0xf]
        %v629 = vld [vmem:[#allocation8 + $0x2c] sm:$0xf]
        %v630 = vld [vmem:[#allocation8 + $0x30] sm:$0xf]
        %v631 = vld [vmem:[#allocation8 + $0x34] sm:$0xf]
        %v632 = vld [vmem:[#allocation8 + $0x38] sm:$0xf]
        %v633 = vld [vmem:[#allocation8 + $0x3c] sm:$0xf]
        %v650 = vunpack.c.l.b16 %v618
        %v651 = vunpack.c.l.b16 %v619
        %v652 = vunpack.c.l.b16 %v620
        %v653 = vunpack.c.l.b16 %v621
        %v654 = vunpack.c.l.b16 %v622
        %v655 = vunpack.c.l.b16 %v623
        %v656 = vunpack.c.l.b16 %v624
        %v657 = vunpack.c.l.b16 %v625
        %v658 = vunpack.c.l.b16 %v626
        %v659 = vunpack.c.l.b16 %v627
        %v660 = vunpack.c.l.b16 %v628
        %v661 = vunpack.c.l.b16 %v629
        %v662 = vunpack.c.l.b16 %v630
        %v663 = vunpack.c.l.b16 %v631
        %v664 = vunpack.c.l.b16 %v632
        %v665 = vunpack.c.l.b16 %v633
        %v666 = vpack.c.b16 %v651, %v650
        %v667 = vpack.c.b16 %v653, %v652
        %v668 = vpack.c.b16 %v655, %v654
        %v669 = vpack.c.b16 %v657, %v656
        %v670 = vpack.c.b16 %v659, %v658
        %v671 = vpack.c.b16 %v661, %v660
        %v672 = vpack.c.b16 %v663, %v662
        %v673 = vpack.c.b16 %v665, %v664
        %682 = vmatprep.subr.bf16.mxu0 0
        %683 = vmatpush1.bf16.msra.mxu0 %v666
        %684 = vmatprep.subr.bf16.mxu0 0
        %685 = vmatpush1.bf16.msra.mxu0 %v667
        %686 = vmatprep.subr.bf16.mxu0 0
        %687 = vmatpush1.bf16.msra.mxu0 %v668
        %688 = vmatprep.subr.bf16.mxu0 0
        %689 = vmatpush1.bf16.msra.mxu0 %v669
        %690 = vmatprep.subr.bf16.mxu0 0
        %691 = vmatpush1.bf16.msra.mxu0 %v670
        %692 = vmatprep.subr.bf16.mxu0 0
        %693 = vmatpush1.bf16.msra.mxu0 %v671
        %694 = vmatprep.subr.bf16.mxu0 0
        %695 = vmatpush1.bf16.msra.mxu0 %v672
        %696 = vmatprep.subr.bf16.mxu0 0
        %697 = vmatpush1.bf16.msra.mxu0 %v673
        %698 = vmatprep.subr.bf16.mxu0 0
        %699 = vmatpush1.bf16.msra.mxu0 0
        %700 = vmatprep.subr.bf16.mxu0 0
        %701 = vmatpush1.bf16.msra.mxu0 0
        %702 = vmatprep.subr.bf16.mxu0 0
        %703 = vmatpush1.bf16.msra.mxu0 0
        %704 = vmatprep.subr.bf16.mxu0 0
        %705 = vmatpush1.bf16.msra.mxu0 0
        %706 = vmatprep.subr.bf16.mxu0 0
        %707 = vmatpush1.bf16.msra.mxu0 0
        %708 = vmatprep.subr.bf16.mxu0 0
        %709 = vmatpush1.bf16.msra.mxu0 0
        %710 = vmatprep.subr.bf16.mxu0 0
        %711 = vmatpush1.bf16.msra.mxu0 0
        %712 = vmatprep.subr.bf16.mxu0 0
        %713 = vmatpush1.bf16.msra.mxu0 0
        %714 = vmatprep.mubr.bf16.mxu0 0
        %715 = vmatmul.mubr.bf16.gmra.mrb[0].mxu0 %v617
        %v716 = vpop.f32.mrb[0].mxu0
        %v717 = vadd.f32 0.0, %v716
        %v718 = vpop.f32.mrb[0].mxu0
        %v719 = vpop.f32.mrb[0].mxu0
        %v720 = vpop.f32.mrb[0].mxu0
        %721 = vdwg.mxu0
        %v722 = vld [vmem:[#allocation10] sm:$0xf]
        %v723 = vld [vmem:[#allocation10 + $0x4] sm:$0xf]
        %v724 = vld [vmem:[#allocation10 + $0x8] sm:$0xf]
        %v725 = vld [vmem:[#allocation10 + $0xc] sm:$0xf]
        %v726 = vld [vmem:[#allocation10 + $0x10] sm:$0xf]
        %v727 = vld [vmem:[#allocation10 + $0x14] sm:$0xf]
        %v728 = vld [vmem:[#allocation10 + $0x18] sm:$0xf]
        %v729 = vld [vmem:[#allocation10 + $0x1c] sm:$0xf]
        %v730 = vld [vmem:[#allocation10 + $0x20] sm:$0xf]
        %v731 = vld [vmem:[#allocation10 + $0x24] sm:$0xf]
        %v732 = vld [vmem:[#allocation10 + $0x28] sm:$0xf]
        %v733 = vld [vmem:[#allocation10 + $0x2c] sm:$0xf]
        %v734 = vld [vmem:[#allocation10 + $0x30] sm:$0xf]
        %v735 = vld [vmem:[#allocation10 + $0x34] sm:$0xf]
        %v736 = vld [vmem:[#allocation10 + $0x38] sm:$0xf]
        %v737 = vld [vmem:[#allocation10 + $0x3c] sm:$0xf]
        %v754 = vunpack.c.l.b16 %v722
        %v755 = vunpack.c.l.b16 %v723
        %v756 = vunpack.c.l.b16 %v724
        %v757 = vunpack.c.l.b16 %v725
        %v758 = vunpack.c.l.b16 %v726
        %v759 = vunpack.c.l.b16 %v727
        %v760 = vunpack.c.l.b16 %v728
        %v761 = vunpack.c.l.b16 %v729
        %v762 = vunpack.c.l.b16 %v730
        %v763 = vunpack.c.l.b16 %v731
        %v764 = vunpack.c.l.b16 %v732
        %v765 = vunpack.c.l.b16 %v733
        %v766 = vunpack.c.l.b16 %v734
        %v767 = vunpack.c.l.b16 %v735
        %v768 = vunpack.c.l.b16 %v736
        %v769 = vunpack.c.l.b16 %v737
        %v770 = vpack.c.b16 %v755, %v754
        %v771 = vpack.c.b16 %v757, %v756
        %v772 = vpack.c.b16 %v759, %v758
        %v773 = vpack.c.b16 %v761, %v760
        %v774 = vpack.c.b16 %v763, %v762
        %v775 = vpack.c.b16 %v765, %v764
        %v776 = vpack.c.b16 %v767, %v766
        %v777 = vpack.c.b16 %v769, %v768
        %786 = vmatprep.subr.bf16.mxu0 0
        %787 = vmatpush1.bf16.msra.mxu0 %v770
        %788 = vmatprep.subr.bf16.mxu0 0
        %789 = vmatpush1.bf16.msra.mxu0 %v771
        %790 = vmatprep.subr.bf16.mxu0 0
        %791 = vmatpush1.bf16.msra.mxu0 %v772
        %792 = vmatprep.subr.bf16.mxu0 0
        %793 = vmatpush1.bf16.msra.mxu0 %v773
        %794 = vmatprep.subr.bf16.mxu0 0
        %795 = vmatpush1.bf16.msra.mxu0 %v774
        %796 = vmatprep.subr.bf16.mxu0 0
        %797 = vmatpush1.bf16.msra.mxu0 %v775
        %798 = vmatprep.subr.bf16.mxu0 0
        %799 = vmatpush1.bf16.msra.mxu0 %v776
        %800 = vmatprep.subr.bf16.mxu0 0
        %801 = vmatpush1.bf16.msra.mxu0 %v777
        %802 = vmatprep.subr.bf16.mxu0 0
        %803 = vmatpush1.bf16.msra.mxu0 0
        %804 = vmatprep.subr.bf16.mxu0 0
        %805 = vmatpush1.bf16.msra.mxu0 0
        %806 = vmatprep.subr.bf16.mxu0 0
        %807 = vmatpush1.bf16.msra.mxu0 0
        %808 = vmatprep.subr.bf16.mxu0 0
        %809 = vmatpush1.bf16.msra.mxu0 0
        %810 = vmatprep.subr.bf16.mxu0 0
        %811 = vmatpush1.bf16.msra.mxu0 0
        %812 = vmatprep.subr.bf16.mxu0 0
        %813 = vmatpush1.bf16.msra.mxu0 0
        %814 = vmatprep.subr.bf16.mxu0 0
        %815 = vmatpush1.bf16.msra.mxu0 0
        %816 = vmatprep.subr.bf16.mxu0 0
        %817 = vmatpush1.bf16.msra.mxu0 0
        %818 = vmatprep.mubr.bf16.mxu0 0
        %819 = vmatmul.mubr.bf16.gmra.mrb[0].mxu0 %v617
        %v820 = vpop.f32.mrb[0].mxu0
        %v821 = vadd.f32 0.0, %v820
        %v822 = vpop.f32.mrb[0].mxu0
        %v823 = vpop.f32.mrb[0].mxu0
        %v824 = vpop.f32.mrb[0].mxu0
        %825 = vdwg.mxu0
        %v826 = vld [vmem:[#allocation11] sm:$0xf]
        %v827 = vld [vmem:[#allocation11 + $0x4] sm:$0xf]
        %v828 = vld [vmem:[#allocation11 + $0x8] sm:$0xf]
        %v829 = vld [vmem:[#allocation11 + $0xc] sm:$0xf]
        %v830 = vld [vmem:[#allocation11 + $0x10] sm:$0xf]
        %v831 = vld [vmem:[#allocation11 + $0x14] sm:$0xf]
        %v832 = vld [vmem:[#allocation11 + $0x18] sm:$0xf]
        %v833 = vld [vmem:[#allocation11 + $0x1c] sm:$0xf]
        %v834 = vld [vmem:[#allocation11 + $0x20] sm:$0xf]
        %v835 = vld [vmem:[#allocation11 + $0x24] sm:$0xf]
        %v836 = vld [vmem:[#allocation11 + $0x28] sm:$0xf]
        %v837 = vld [vmem:[#allocation11 + $0x2c] sm:$0xf]
        %v838 = vld [vmem:[#allocation11 + $0x30] sm:$0xf]
        %v839 = vld [vmem:[#allocation11 + $0x34] sm:$0xf]
        %v840 = vld [vmem:[#allocation11 + $0x38] sm:$0xf]
        %v841 = vld [vmem:[#allocation11 + $0x3c] sm:$0xf]
        %v858 = vunpack.c.l.b16 %v826
        %v859 = vunpack.c.l.b16 %v827
        %v860 = vunpack.c.l.b16 %v828
        %v861 = vunpack.c.l.b16 %v829
        %v862 = vunpack.c.l.b16 %v830
        %v863 = vunpack.c.l.b16 %v831
        %v864 = vunpack.c.l.b16 %v832
        %v865 = vunpack.c.l.b16 %v833
        %v866 = vunpack.c.l.b16 %v834
        %v867 = vunpack.c.l.b16 %v835
        %v868 = vunpack.c.l.b16 %v836
        %v869 = vunpack.c.l.b16 %v837
        %v870 = vunpack.c.l.b16 %v838
        %v871 = vunpack.c.l.b16 %v839
        %v872 = vunpack.c.l.b16 %v840
        %v873 = vunpack.c.l.b16 %v841
        %v874 = vpack.c.b16 %v859, %v858
        %v875 = vpack.c.b16 %v861, %v860
        %v876 = vpack.c.b16 %v863, %v862
        %v877 = vpack.c.b16 %v865, %v864
        %v878 = vpack.c.b16 %v867, %v866
        %v879 = vpack.c.b16 %v869, %v868
        %v880 = vpack.c.b16 %v871, %v870
        %v881 = vpack.c.b16 %v873, %v872
        %890 = vmatprep.subr.bf16.mxu0 0
        %891 = vmatpush1.bf16.msra.mxu0 %v874
        %892 = vmatprep.subr.bf16.mxu0 0
        %893 = vmatpush1.bf16.msra.mxu0 %v875
        %894 = vmatprep.subr.bf16.mxu0 0
        %895 = vmatpush1.bf16.msra.mxu0 %v876
        %896 = vmatprep.subr.bf16.mxu0 0
        %897 = vmatpush1.bf16.msra.mxu0 %v877
        %898 = vmatprep.subr.bf16.mxu0 0
        %899 = vmatpush1.bf16.msra.mxu0 %v878
        %900 = vmatprep.subr.bf16.mxu0 0
        %901 = vmatpush1.bf16.msra.mxu0 %v879
        %902 = vmatprep.subr.bf16.mxu0 0
        %903 = vmatpush1.bf16.msra.mxu0 %v880
        %904 = vmatprep.subr.bf16.mxu0 0
        %905 = vmatpush1.bf16.msra.mxu0 %v881
        %906 = vmatprep.subr.bf16.mxu0 0
        %907 = vmatpush1.bf16.msra.mxu0 0
        %908 = vmatprep.subr.bf16.mxu0 0
        %909 = vmatpush1.bf16.msra.mxu0 0
        %910 = vmatprep.subr.bf16.mxu0 0
        %911 = vmatpush1.bf16.msra.mxu0 0
        %912 = vmatprep.subr.bf16.mxu0 0
        %913 = vmatpush1.bf16.msra.mxu0 0
        %914 = vmatprep.subr.bf16.mxu0 0
        %915 = vmatpush1.bf16.msra.mxu0 0
        %916 = vmatprep.subr.bf16.mxu0 0
        %917 = vmatpush1.bf16.msra.mxu0 0
        %918 = vmatprep.subr.bf16.mxu0 0
        %919 = vmatpush1.bf16.msra.mxu0 0
        %920 = vmatprep.subr.bf16.mxu0 0
        %921 = vmatpush1.bf16.msra.mxu0 0
        %922 = vmatprep.mubr.bf16.mxu0 0
        %923 = vmatmul.mubr.bf16.gmra.mrb[0].mxu0 %v617
        %v924 = vpop.f32.mrb[0].mxu0
        %v925 = vadd.f32 0.0, %v924
        %v926 = vpop.f32.mrb[0].mxu0
        %v927 = vpop.f32.mrb[0].mxu0
        %v928 = vpop.f32.mrb[0].mxu0
        %929 = vdwg.mxu0
        %v931 = vrot.slane %v821, 6
        %vm933 = vcmask 1041408
        %v934 = vsel %vm933, 0.0, %v931
        %v935 = vmul.f32 %v717, %v934
        %936 = vadd.xlane.f32.xlu0 %v935
        %v937 = vpop.xlane.xlu0 %936
        %v938 = vrot.slane %v821, 7
        %vm940 = vcmask 1040384
        %v941 = vsel %vm940, 0.0, %v938
        %v942 = vmul.f32 %v717, %v941
        %943 = vadd.xlane.f32.xlu0 %v942
        %v944 = vpop.xlane.xlu0 %943
        %v945 = vmul.f32 %v717, %v821
        %946 = vadd.xlane.f32.xlu0 %v945
        %v947 = vpop.xlane.xlu0 %946
        %v948 = vrot.slane %v821, 1
        %vm950 = vcmask 1046528
        %v951 = vsel %vm950, %v948, 0.0
        %v952 = vmul.f32 %v717, %v951
        %953 = vadd.xlane.f32.xlu0 %v952
        %v954 = vpop.xlane.xlu0 %953
        %v955 = vrot.slane %v821, 2
        %vm957 = vcmask 1045504
        %v958 = vsel %vm957, %v955, 0.0
        %v959 = vmul.f32 %v717, %v958
        %960 = vadd.xlane.f32.xlu0 %v959
        %v961 = vpop.xlane.xlu0 %960
        %v962 = vmax.f32 %v937, %v944
        %v963 = vmax.f32 %v962, %v947
        %v964 = vmax.f32 %v963, %v954
        %v965 = vmax.f32 %v964, %v961
        %v966 = vsub.f32 %v937, %v965
        %v967 = vmul.f32 %v966, 1.442695
        %v968 = vpow.pop %v967
        %v969 = vsub.f32 %v944, %v965
        %v970 = vmul.f32 %v969, 1.442695
        %v971 = vpow.pop %v970
        %v972 = vsub.f32 %v947, %v965
        %v973 = vmul.f32 %v972, 1.442695
        %v974 = vpow.pop %v973
        %v975 = vsub.f32 %v954, %v965
        %v976 = vmul.f32 %v975, 1.442695
        %v977 = vpow.pop %v976
        %v978 = vsub.f32 %v961, %v965
        %v979 = vmul.f32 %v978, 1.442695
        %v980 = vpow.pop %v979
        %v981 = vadd.f32 %v968, %v971
        %v982 = vadd.f32 %v981, %v974
        %v983 = vadd.f32 %v982, %v977
        %v984 = vadd.f32 %v983, %v980
        %v985 = vrcp.pop %v984
        %v986 = vmul.f32 %v968, %v985
        %v987 = vmul.f32 %v971, %v985
        %v988 = vmul.f32 %v974, %v985
        %v989 = vmul.f32 %v977, %v985
        %v990 = vmul.f32 %v980, %v985
        %v992 = vrot.slane %v925, 6
        %v994 = vsel %vm933, 0.0, %v992
        %v995 = vmul.f32 %v986, %v994
        %v996 = vrot.slane %v925, 7
        %v998 = vsel %vm940, 0.0, %v996
        %v999 = vmul.f32 %v987, %v998
        %v1000 = vadd.f32 %v995, %v999
        %v1001 = vmul.f32 %v988, %v925
        %v1002 = vadd.f32 %v1000, %v1001
        %v1003 = vrot.slane %v925, 1
        %v1005 = vsel %vm950, %v1003, 0.0
        %v1006 = vmul.f32 %v989, %v1005
        %v1007 = vadd.f32 %v1002, %v1006
        %v1008 = vrot.slane %v925, 2
        %v1010 = vsel %vm957, %v1008, 0.0
        %v1011 = vmul.f32 %v990, %v1010
        %v1012 = vadd.f32 %v1007, %v1011
        %v1013 = vpack.c.bf16 %v1012, %v1012
        %v1014 = vld [vmem:[#allocation13] sm:$0xf]
        %v1015 = vld [vmem:[#allocation13 + $0x4] sm:$0xf]
        %v1016 = vld [vmem:[#allocation13 + $0x8] sm:$0xf]
        %v1017 = vld [vmem:[#allocation13 + $0xc] sm:$0xf]
        %v1018 = vld [vmem:[#allocation13 + $0x10] sm:$0xf]
        %v1019 = vld [vmem:[#allocation13 + $0x14] sm:$0xf]
        %v1020 = vld [vmem:[#allocation13 + $0x18] sm:$0xf]
        %v1021 = vld [vmem:[#allocation13 + $0x1c] sm:$0xf]
        %v1022 = vld [vmem:[#allocation13 + $0x20] sm:$0xf]
        %v1023 = vld [vmem:[#allocation13 + $0x24] sm:$0xf]
        %v1024 = vld [vmem:[#allocation13 + $0x28] sm:$0xf]
        %v1025 = vld [vmem:[#allocation13 + $0x2c] sm:$0xf]
        %v1026 = vld [vmem:[#allocation13 + $0x30] sm:$0xf]
        %v1027 = vld [vmem:[#allocation13 + $0x34] sm:$0xf]
        %v1028 = vld [vmem:[#allocation13 + $0x38] sm:$0xf]
        %v1029 = vld [vmem:[#allocation13 + $0x3c] sm:$0xf]
        %v1030 = vld [vmem:[%s8] sm:$0x1]
        %v1032 = vlaneseq
        %v1033 = vshrl.u32 %v1032, 7
        %v1034 = vsub.s32 0, %v1033
        %v1035 = vrot.slane %v1030, %v1034
        %v1053 = vunpack.c.l.b16 %v1014
        %v1054 = vunpack.c.l.b16 %v1015
        %v1055 = vunpack.c.l.b16 %v1016
        %v1056 = vunpack.c.l.b16 %v1017
        %v1057 = vunpack.c.l.b16 %v1018
        %v1058 = vunpack.c.l.b16 %v1019
        %v1059 = vunpack.c.l.b16 %v1020
        %v1060 = vunpack.c.l.b16 %v1021
        %v1061 = vunpack.c.l.b16 %v1022
        %v1062 = vunpack.c.l.b16 %v1023
        %v1063 = vunpack.c.l.b16 %v1024
        %v1064 = vunpack.c.l.b16 %v1025
        %v1065 = vunpack.c.l.b16 %v1026
        %v1066 = vunpack.c.l.b16 %v1027
        %v1067 = vunpack.c.l.b16 %v1028
        %v1068 = vunpack.c.l.b16 %v1029
        %v1069 = vpack.c.b16 %v1054, %v1053
        %v1070 = vpack.c.b16 %v1056, %v1055
        %v1071 = vpack.c.b16 %v1058, %v1057
        %v1072 = vpack.c.b16 %v1060, %v1059
        %v1073 = vpack.c.b16 %v1062, %v1061
        %v1074 = vpack.c.b16 %v1064, %v1063
        %v1075 = vpack.c.b16 %v1066, %v1065
        %v1076 = vpack.c.b16 %v1068, %v1067
        %1085 = vmatprep.subr.bf16.mxu0 0
        %1086 = vmatpush1.bf16.msra.mxu0 %v1069
        %1087 = vmatprep.subr.bf16.mxu0 0
        %1088 = vmatpush1.bf16.msra.mxu0 %v1070
        %1089 = vmatprep.subr.bf16.mxu0 0
        %1090 = vmatpush1.bf16.msra.mxu0 %v1071
        %1091 = vmatprep.subr.bf16.mxu0 0
        %1092 = vmatpush1.bf16.msra.mxu0 %v1072
        %1093 = vmatprep.subr.bf16.mxu0 0
        %1094 = vmatpush1.bf16.msra.mxu0 %v1073
        %1095 = vmatprep.subr.bf16.mxu0 0
        %1096 = vmatpush1.bf16.msra.mxu0 %v1074
        %1097 = vmatprep.subr.bf16.mxu0 0
        %1098 = vmatpush1.bf16.msra.mxu0 %v1075
        %1099 = vmatprep.subr.bf16.mxu0 0
        %1100 = vmatpush1.bf16.msra.mxu0 %v1076
        %1101 = vmatprep.subr.bf16.mxu0 0
        %1102 = vmatpush1.bf16.msra.mxu0 0
        %1103 = vmatprep.subr.bf16.mxu0 0
        %1104 = vmatpush1.bf16.msra.mxu0 0
        %1105 = vmatprep.subr.bf16.mxu0 0
        %1106 = vmatpush1.bf16.msra.mxu0 0
        %1107 = vmatprep.subr.bf16.mxu0 0
        %1108 = vmatpush1.bf16.msra.mxu0 0
        %1109 = vmatprep.subr.bf16.mxu0 0
        %1110 = vmatpush1.bf16.msra.mxu0 0
        %1111 = vmatprep.subr.bf16.mxu0 0
        %1112 = vmatpush1.bf16.msra.mxu0 0
        %1113 = vmatprep.subr.bf16.mxu0 0
        %1114 = vmatpush1.bf16.msra.mxu0 0
        %1115 = vmatprep.subr.bf16.mxu0 0
        %1116 = vmatpush1.bf16.msra.mxu0 0
        %1117 = vmatprep.mubr.bf16.mxu0 0
        %1118 = vmatmul.mubr.bf16.gmra.mrb[0].mxu0 %v1013
        %v1119 = vpop.f32.mrb[0].mxu0
        %v1120 = vadd.f32 %v1035, %v1119
        %v1121 = vpop.f32.mrb[0].mxu0
        %v1122 = vpop.f32.mrb[0].mxu0
        %v1123 = vpop.f32.mrb[0].mxu0
        %1124 = vdwg.mxu0
        %v1125 = vrot.slane %v1120, 4
        %v1126 = vadd.f32 %v1120, %v1125
        %v1127 = vrot.slane %v1126, 2
        %v1128 = vadd.f32 %v1126, %v1127
        %v1129 = vrot.slane %v1128, 1
        %v1130 = vadd.f32 %v1128, %v1129
        %v1131 = vrcp.pop 8.0
        %v1132 = vmul.f32 %v1130, %v1131
        %v1133 = vpack.c.bf16 %v1132, %v1132
        %v1134 = vld [vmem:[#allocation14] sm:$0xf]
        %v1135 = vld [vmem:[#allocation14 + $0x4] sm:$0xf]
        %v1136 = vld [vmem:[#allocation14 + $0x8] sm:$0xf]
        %v1137 = vld [vmem:[#allocation14 + $0xc] sm:$0xf]
        %v1138 = vld [vmem:[#allocation14 + $0x10] sm:$0xf]
        %v1139 = vld [vmem:[#allocation14 + $0x14] sm:$0xf]
        %v1140 = vld [vmem:[#allocation14 + $0x18] sm:$0xf]
        %v1141 = vld [vmem:[#allocation14 + $0x1c] sm:$0xf]
        %v1142 = vld [vmem:[#allocation14 + $0x20] sm:$0xf]
        %v1143 = vld [vmem:[#allocation14 + $0x24] sm:$0xf]
        %v1144 = vld [vmem:[#allocation14 + $0x28] sm:$0xf]
        %v1145 = vld [vmem:[#allocation14 + $0x2c] sm:$0xf]
        %v1146 = vld [vmem:[#allocation14 + $0x30] sm:$0xf]
        %v1147 = vld [vmem:[#allocation14 + $0x34] sm:$0xf]
        %v1148 = vld [vmem:[#allocation14 + $0x38] sm:$0xf]
        %v1149 = vld [vmem:[#allocation14 + $0x3c] sm:$0xf]
        %v1150 = vld [vmem:[%s10] sm:$0x1]
        %v1167 = vunpack.c.l.b16 %v1134
        %v1168 = vunpack.c.l.b16 %v1135
        %v1169 = vunpack.c.l.b16 %v1136
        %v1170 = vunpack.c.l.b16 %v1137
        %v1171 = vunpack.c.l.b16 %v1138
        %v1172 = vunpack.c.l.b16 %v1139
        %v1173 = vunpack.c.l.b16 %v1140
        %v1174 = vunpack.c.l.b16 %v1141
        %v1175 = vunpack.c.l.b16 %v1142
        %v1176 = vunpack.c.l.b16 %v1143
        %v1177 = vunpack.c.l.b16 %v1144
        %v1178 = vunpack.c.l.b16 %v1145
        %v1179 = vunpack.c.l.b16 %v1146
        %v1180 = vunpack.c.l.b16 %v1147
        %v1181 = vunpack.c.l.b16 %v1148
        %v1182 = vunpack.c.l.b16 %v1149
        %v1183 = vpack.c.b16 %v1168, %v1167
        %v1184 = vpack.c.b16 %v1170, %v1169
        %v1185 = vpack.c.b16 %v1172, %v1171
        %v1186 = vpack.c.b16 %v1174, %v1173
        %v1187 = vpack.c.b16 %v1176, %v1175
        %v1188 = vpack.c.b16 %v1178, %v1177
        %v1189 = vpack.c.b16 %v1180, %v1179
        %v1190 = vpack.c.b16 %v1182, %v1181
        %1199 = vmatprep.subr.bf16.mxu0 0
        %1200 = vmatpush1.bf16.msra.mxu0 %v1183
        %1201 = vmatprep.subr.bf16.mxu0 0
        %1202 = vmatpush1.bf16.msra.mxu0 %v1184
        %1203 = vmatprep.subr.bf16.mxu0 0
        %1204 = vmatpush1.bf16.msra.mxu0 %v1185
        %1205 = vmatprep.subr.bf16.mxu0 0
        %1206 = vmatpush1.bf16.msra.mxu0 %v1186
        %1207 = vmatprep.subr.bf16.mxu0 0
        %1208 = vmatpush1.bf16.msra.mxu0 %v1187
        %1209 = vmatprep.subr.bf16.mxu0 0
        %1210 = vmatpush1.bf16.msra.mxu0 %v1188
        %1211 = vmatprep.subr.bf16.mxu0 0
        %1212 = vmatpush1.bf16.msra.mxu0 %v1189
        %1213 = vmatprep.subr.bf16.mxu0 0
        %1214 = vmatpush1.bf16.msra.mxu0 %v1190
        %1215 = vmatprep.subr.bf16.mxu0 0
        %1216 = vmatpush1.bf16.msra.mxu0 0
        %1217 = vmatprep.subr.bf16.mxu0 0
        %1218 = vmatpush1.bf16.msra.mxu0 0
        %1219 = vmatprep.subr.bf16.mxu0 0
        %1220 = vmatpush1.bf16.msra.mxu0 0
        %1221 = vmatprep.subr.bf16.mxu0 0
        %1222 = vmatpush1.bf16.msra.mxu0 0
        %1223 = vmatprep.subr.bf16.mxu0 0
        %1224 = vmatpush1.bf16.msra.mxu0 0
        %1225 = vmatprep.subr.bf16.mxu0 0
        %1226 = vmatpush1.bf16.msra.mxu0 0
        %1227 = vmatprep.subr.bf16.mxu0 0
        %1228 = vmatpush1.bf16.msra.mxu0 0
        %1229 = vmatprep.subr.bf16.mxu0 0
        %1230 = vmatpush1.bf16.msra.mxu0 0
        %1231 = vmatprep.mubr.bf16.mxu0 0
        %1232 = vmatmul.mubr.bf16.gmra.mrb[0].mxu0 %v1133
        %v1233 = vpop.f32.mrb[0].mxu0
        %v1234 = vadd.f32 %v1150, %v1233
        %v1235 = vpop.f32.mrb[0].mxu0
        %v1236 = vpop.f32.mrb[0].mxu0
        %v1237 = vpop.f32.mrb[0].mxu0
        %1238 = vdwg.mxu0
        %1239 = vst [vmem:[%s500] sm:$0x1] %v1234
        %s1240 = sand.u32 %s276, 1
        %s1241 = scalar_lea.sflag [#allocation4], %s1240
        %s1242 = sand.u32 %s276, 1
        %s1243 = scalar_lea.vmem [#allocation16], %s1242
        // Predicated region
        $region97: #{tpu_custom_call.1} parent=63 // pred_check
          %p1244 = pneg %p286
        $region98: #{tpu_custom_call.1} parent=63 // pred_check_branch
          %1246 = sbr.rel (%p1244) target = $region100
        $region99: #{tpu_custom_call.1} parent=63 // pred_region
          %s1248 = ssub.s32 16, 16
          %1249 = vsyncadd %s1241, %s1248
          %s1250 = smul.addr %s32, 16
          %s1251 = scalar_lea.hbm %s11, %s1250
          %s1253 = sshll.u32 %s1243, 4
          %s1254 = int_to_ptr.vmem [resolvable:$true] %s1253
          %1256 = dma.vmem_to_hbm [thread:$0]  %s1254, 16, %s1251, %s1241
        $region100: #{tpu_custom_call.1} parent=63 // pred_fallthru
          _
      $region64: #{tpu_custom_call.1} parent=5 // pred_fallthru
        _
      %p1257 = scmp.le.s32.totalorder 2, %s27
      // Predicated region
      $region101: #{tpu_custom_call.1} parent=5 // pred_check
        %p1258 = pneg %p1257
      $region102: #{tpu_custom_call.1} parent=5 // pred_check_branch
        %1260 = sbr.rel (%p1258) target = $region104
      $region103: #{tpu_custom_call.1} parent=5 // pred_region
        %s1261 = ssub.s32 %s27, 2
        // Predicated region
        $region105: #{tpu_custom_call.1} parent=103 // pred_check
          %p1262 = pneg %p292
        $region106: #{tpu_custom_call.1} parent=103 // pred_check_branch
          %1264 = sbr.rel (%p1262) target = $region108
        $region107: #{tpu_custom_call.1} parent=103 // pred_region
          %s1265 = sand.u32 %s277, 1
          %s1266 = scalar_lea.sflag [#allocation4], %s1265
          %s1267 = sand.u32 %s277, 1
          %s1268 = scalar_lea.vmem [#allocation16], %s1267
          %1269 = dma.done %s1266, 16
        $region108: #{tpu_custom_call.1} parent=103 // pred_fallthru
          _
      $region104: #{tpu_custom_call.1} parent=5 // pred_fallthru
        _
    $region6: #{tpu_custom_call.1} parent=1 // loop_footer
      %s31 = sadd.s32 1, %s27
    $region7: #{tpu_custom_call.1} parent=1 // loop_footer_branch
      %26 = sbr.rel target = $region3
    $region8: #{tpu_custom_call.1} parent=1 // loop_exit
      _
    %1270 = vsyncpa [#allocation3], 1
    %s1271 = scalar_lea.sflag [#allocation3], 1
    %1272 = vsyncpa %s1271, 1
    %1273 = vsyncpa [#allocation6], 1
    %1274 = vsyncpa [#allocation9], 1
    %1275 = vsyncpa [#allocation12], 1
    %1276 = vsyncpa [#allocation15], 1
    %1277 = vsyncpa [#allocation4], 1
    %s1278 = scalar_lea.sflag [#allocation4], 1
    %1279 = vsyncpa %s1278, 1

// kernel: tpu_custom_call.1
$region0: #{tpu_custom_call.1}
  #allocation0 [shape = 'u32[]', space=smem, size = 0x4, offset = 0x4, fixed_abs, tag = 'smem constant byte address 0x4 - core index']
  #allocation1 [shape = 'u32[144,128]{1,0:T(1,128)}', space=vmem, size = 0x12000, scoped, tag = 'internal scratch']
  %s0 = inlined_call_operand.hbm [shape: f32[16,128], index: 0, kind: input, shape index: {}]
  %s1 = inlined_call_operand.hbm [shape: f32[8,128], index: 1, kind: input, shape index: {}]
  %s2 = inlined_call_operand.hbm [shape: bf16[128,128], index: 2, kind: input, shape index: {}]
  %s3 = inlined_call_operand.vmem [shape: f32[1,128], index: 3, kind: input, shape index: {}]
  %s4 = inlined_call_operand.hbm [shape: bf16[128,128], index: 4, kind: input, shape index: {}]
  %s5 = inlined_call_operand.hbm [shape: bf16[128,128], index: 5, kind: input, shape index: {}]
  %s6 = inlined_call_operand.hbm [shape: bf16[128,128], index: 6, kind: input, shape index: {}]
  %s7 = inlined_call_operand.hbm [shape: bf16[128,128], index: 7, kind: input, shape index: {}]
  %s8 = inlined_call_operand.vmem [shape: f32[1,128], index: 8, kind: input, shape index: {}]
  %s9 = inlined_call_operand.hbm [shape: bf16[128,128], index: 9, kind: input, shape index: {}]
  %s10 = inlined_call_operand.vmem [shape: f32[1,128], index: 10, kind: input, shape index: {}]
  %s11 = inlined_call_operand.hbm [shape: f32[2,1,128], index: 11, kind: output, shape index: {}]
  %s12 = sld [smem:[#allocation0]]
  $region109: #{tpu_custom_call.1} parent=0
    _
  %s14 = ssub.s32 1, %s12
  %s15 = scalar_select 0, %s14, %s12
  $region1: #{tpu_custom_call.1} parent=0
    #allocation2 [shape = 'u8[8192]{0}', space=vmem, size = 0x2000, scoped, tag = 'input window, operand 0']
    #allocation3 [shape = 's32[2]{0}', space=sflag, size = 0x8, scoped, tag = 'scoped memory for tpu_custom_call.1']
    #allocation4 [shape = 's32[2]{0}', space=sflag, size = 0x8, scoped, tag = 'scoped memory for tpu_custom_call.1']
    #allocation5 [shape = 'u8[4096]{0}', space=vmem, size = 0x1000, scoped, tag = 'input window, operand 1, single buffered']
    #allocation6 [shape = 's32[1]{0}', space=sflag, size = 0x4, scoped, tag = 'scoped memory for tpu_custom_call.1']
    #allocation7 [shape = 'u8[32768]{0}', space=vmem, size = 0x8000, scoped, tag = 'input window, operand 2, single buffered']
    #allocation8 [shape = 'u8[32768]{0}', space=vmem, size = 0x8000, scoped, tag = 'input window, operand 4, single buffered']
    #allocation9 [shape = 's32[1]{0}', space=sflag, size = 0x4, scoped, tag = 'scoped memory for tpu_custom_call.1']
    #allocation10 [shape = 'u8[32768]{0}', space=vmem, size = 0x8000, scoped, tag = 'input window, operand 5, single buffered']
    #allocation11 [shape = 'u8[32768]{0}', space=vmem, size = 0x8000, scoped, tag = 'input window, operand 6, single buffered']
    #allocation12 [shape = 's32[1]{0}', space=sflag, size = 0x4, scoped, tag = 'scoped memory for tpu_custom_call.1']
    #allocation13 [shape = 'u8[32768]{0}', space=vmem, size = 0x8000, scoped, tag = 'input window, operand 7, single buffered']
    #allocation14 [shape = 'u8[32768]{0}', space=vmem, size = 0x8000, scoped, tag = 'input window, operand 9, single buffered']
    #allocation15 [shape = 's32[1]{0}', space=sflag, size = 0x4, scoped, tag = 'scoped memory for tpu_custom_call.1']
    #allocation16 [shape = 'u8[1024]{0}', space=vmem, size = 0x400, scoped, tag = 'output window, operand 0']
    %16 = vsyncpa [#allocation3], 0
    %s17 = scalar_lea.sflag [#allocation3], 1
    %18 = vsyncpa %s17, 0
    %19 = vsyncpa [#allocation6], 0
    %20 = vsyncpa [#allocation9], 0
    %21 = vsyncpa [#allocation12], 0
    %22 = vsyncpa [#allocation15], 0
    %23 = vsyncpa [#allocation4], 0
    %s24 = scalar_lea.sflag [#allocation4], 1
    %25 = vsyncpa %s24, 0
    loop: start=0, step=1, limit=4
    $region2: #{tpu_custom_call.1} parent=1 // loop_pre_header
      _
    $region3: #{tpu_custom_call.1} parent=1 // loop_header
      %s27 = sphi 0, %s31
      %p28 = scmp.ge.s32.totalorder %s27, 4
      %s37 = sphi 0, %s39
      %s40 = sphi 0, %s37
      %s41 = sphi 0, %s40
      %s57 = sphi 0, %s41
      %s61 = sphi 0, %s61
      %s63 = sphi 0, %s61
      %s64 = sphi 0, %s63
      %s78 = sphi 0, %s64
      %s82 = sphi 0, %s82
      %s84 = sphi 0, %s82
      %s85 = sphi 0, %s84
      %s99 = sphi 0, %s85
      %s103 = sphi 0, %s103
      %s105 = sphi 0, %s103
      %s106 = sphi 0, %s105
      %s120 = sphi 0, %s106
      %s124 = sphi 0, %s124
      %s126 = sphi 0, %s124
      %s127 = sphi 0, %s126
      %s141 = sphi 0, %s127
      %s145 = sphi 0, %s145
      %s147 = sphi 0, %s145
      %s148 = sphi 0, %s147
      %s162 = sphi 0, %s148
      %s166 = sphi 0, %s166
      %s168 = sphi 0, %s166
      %s169 = sphi 0, %s168
      %s183 = sphi 0, %s169
      %s187 = sphi 0, %s187
      %s189 = sphi 0, %s187
      %s190 = sphi 0, %s189
      %s204 = sphi 0, %s190
      %s208 = sphi 0, %s208
      %s210 = sphi 0, %s208
      %s211 = sphi 0, %s210
      %s225 = sphi 0, %s211
      %s229 = sphi 0, %s229
      %s231 = sphi 0, %s229
      %s232 = sphi 0, %s231
      %s246 = sphi 0, %s232
      %s250 = sphi 0, %s250
      %s252 = sphi 0, %s250
      %s253 = sphi 0, %s252
      %s267 = sphi 0, %s253
      %s273 = sphi 0, %s275
      %s276 = sphi 0, %s273
      %s277 = sphi 0, %s276
      %s293 = sphi 0, %s277
    $region4: #{tpu_custom_call.1} parent=1 // loop_header_branch
      %30 = sbr.rel (%p28) target = $region8
    $region5: #{tpu_custom_call.1} parent=1 // loop_body
      %s32 = ssub.s32 %s27, 1
      %s33 = ssub.s32 %s27, 2
      %s34 = sadd.s32 %s27, 1
      %s35 = ssub.s32 %s27, %s34
      %p36 = scmp.eq.s32.totalorder %s35, 0
      %s38 = sadd.s32 %s37, 1
      %s39 = scalar_select %p36, %s37, %s38
      %p42 = pneg %p36
      %p43 = scmp.eq.s32.totalorder %s27, 1
      %p44 = por %p42, %p43
      %p45 = scmp.ne.s32.totalorder %s37, %s40
      %p46 = scmp.eq.s32.totalorder %s27, 0
      %p47 = por %p45, %p46
      %p48 = scmp.ne.s32.totalorder %s37, %s40
      %p49 = scmp.eq.s32.totalorder %s32, 1
      %p50 = por %p48, %p49
      %p51 = scmp.ne.s32.totalorder %s40, %s41
      %p52 = scmp.eq.s32.totalorder %s32, 0
      %p53 = por %p51, %p52
      %p54 = scmp.ne.s32.totalorder %s40, %s41
      %p55 = scmp.eq.s32.totalorder %s33, 1
      %p56 = por %p54, %p55
      %p58 = scmp.ne.s32.totalorder %s41, %s57
      %p59 = scmp.eq.s32.totalorder %s33, 0
      %p60 = por %p58, %p59
      %s62 = sadd.s32 %s61, 1
      %p65 = scmp.eq.s32.totalorder %s27, 1
      %p66 = scmp.ne.s32.totalorder %s61, %s63
      %p67 = scmp.eq.s32.totalorder %s27, 0
      %p68 = por %p66, %p67
      %p69 = scmp.ne.s32.totalorder %s61, %s63
      %p70 = scmp.eq.s32.totalorder %s32, 1
      %p71 = por %p69, %p70
      %p72 = scmp.ne.s32.totalorder %s63, %s64
      %p73 = scmp.eq.s32.totalorder %s32, 0
      %p74 = por %p72, %p73
      %p75 = scmp.ne.s32.totalorder %s63, %s64
      %p76 = scmp.eq.s32.totalorder %s33, 1
      %p77 = por %p75, %p76
      %p79 = scmp.ne.s32.totalorder %s64, %s78
      %p80 = scmp.eq.s32.totalorder %s33, 0
      %p81 = por %p79, %p80
      %s83 = sadd.s32 %s82, 1
      %p86 = scmp.eq.s32.totalorder %s27, 1
      %p87 = scmp.ne.s32.totalorder %s82, %s84
      %p88 = scmp.eq.s32.totalorder %s27, 0
      %p89 = por %p87, %p88
      %p90 = scmp.ne.s32.totalorder %s82, %s84
      %p91 = scmp.eq.s32.totalorder %s32, 1
      %p92 = por %p90, %p91
      %p93 = scmp.ne.s32.totalorder %s84, %s85
      %p94 = scmp.eq.s32.totalorder %s32, 0
      %p95 = por %p93, %p94
      %p96 = scmp.ne.s32.totalorder %s84, %s85
      %p97 = scmp.eq.s32.totalorder %s33, 1
      %p98 = por %p96, %p97
      %p100 = scmp.ne.s32.totalorder %s85, %s99
      %p101 = scmp.eq.s32.totalorder %s33, 0
      %p102 = por %p100, %p101
      %s104 = sadd.s32 %s103, 1
      %p107 = scmp.eq.s32.totalorder %s27, 1
      %p108 = scmp.ne.s32.totalorder %s103, %s105
      %p109 = scmp.eq.s32.totalorder %s27, 0
      %p110 = por %p108, %p109
      %p111 = scmp.ne.s32.totalorder %s103, %s105
      %p112 = scmp.eq.s32.totalorder %s32, 1
      %p113 = por %p111, %p112
      %p114 = scmp.ne.s32.totalorder %s105, %s106
      %p115 = scmp.eq.s32.totalorder %s32, 0
      %p116 = por %p114, %p115
      %p117 = scmp.ne.s32.totalorder %s105, %s106
      %p118 = scmp.eq.s32.totalorder %s33, 1
      %p119 = por %p117, %p118
      %p121 = scmp.ne.s32.totalorder %s106, %s120
      %p122 = scmp.eq.s32.totalorder %s33, 0
      %p123 = por %p121, %p122
      %s125 = sadd.s32 %s124, 1
      %p128 = scmp.eq.s32.totalorder %s27, 1
      %p129 = scmp.ne.s32.totalorder %s124, %s126
      %p130 = scmp.eq.s32.totalorder %s27, 0
      %p131 = por %p129, %p130
      %p132 = scmp.ne.s32.totalorder %s124, %s126
      %p133 = scmp.eq.s32.totalorder %s32, 1
      %p134 = por %p132, %p133
      %p135 = scmp.ne.s32.totalorder %s126, %s127
      %p136 = scmp.eq.s32.totalorder %s32, 0
      %p137 = por %p135, %p136
      %p138 = scmp.ne.s32.totalorder %s126, %s127
      %p139 = scmp.eq.s32.totalorder %s33, 1
      %p140 = por %p138, %p139
      %p142 = scmp.ne.s32.totalorder %s127, %s141
      %p143 = scmp.eq.s32.totalorder %s33, 0
      %p144 = por %p142, %p143
      %s146 = sadd.s32 %s145, 1
      %p149 = scmp.eq.s32.totalorder %s27, 1
      %p150 = scmp.ne.s32.totalorder %s145, %s147
      %p151 = scmp.eq.s32.totalorder %s27, 0
      %p152 = por %p150, %p151
      %p153 = scmp.ne.s32.totalorder %s145, %s147
      %p154 = scmp.eq.s32.totalorder %s32, 1
      %p155 = por %p153, %p154
      %p156 = scmp.ne.s32.totalorder %s147, %s148
      %p157 = scmp.eq.s32.totalorder %s32, 0
      %p158 = por %p156, %p157
      %p159 = scmp.ne.s32.totalorder %s147, %s148
      %p160 = scmp.eq.s32.totalorder %s33, 1
      %p161 = por %p159, %p160
      %p163 = scmp.ne.s32.totalorder %s148, %s162
      %p164 = scmp.eq.s32.totalorder %s33, 0
      %p165 = por %p163, %p164
      %s167 = sadd.s32 %s166, 1
      %p170 = scmp.eq.s32.totalorder %s27, 1
      %p171 = scmp.ne.s32.totalorder %s166, %s168
      %p172 = scmp.eq.s32.totalorder %s27, 0
      %p173 = por %p171, %p172
      %p174 = scmp.ne.s32.totalorder %s166, %s168
      %p175 = scmp.eq.s32.totalorder %s32, 1
      %p176 = por %p174, %p175
      %p177 = scmp.ne.s32.totalorder %s168, %s169
      %p178 = scmp.eq.s32.totalorder %s32, 0
      %p179 = por %p177, %p178
      %p180 = scmp.ne.s32.totalorder %s168, %s169
      %p181 = scmp.eq.s32.totalorder %s33, 1
      %p182 = por %p180, %p181
      %p184 = scmp.ne.s32.totalorder %s169, %s183
      %p185 = scmp.eq.s32.totalorder %s33, 0
      %p186 = por %p184, %p185
      %s188 = sadd.s32 %s187, 1
      %p191 = scmp.eq.s32.totalorder %s27, 1
      %p192 = scmp.ne.s32.totalorder %s187, %s189
      %p193 = scmp.eq.s32.totalorder %s27, 0
      %p194 = por %p192, %p193
      %p195 = scmp.ne.s32.totalorder %s187, %s189
      %p196 = scmp.eq.s32.totalorder %s32, 1
      %p197 = por %p195, %p196
      %p198 = scmp.ne.s32.totalorder %s189, %s190
      %p199 = scmp.eq.s32.totalorder %s32, 0
      %p200 = por %p198, %p199
      %p201 = scmp.ne.s32.totalorder %s189, %s190
      %p202 = scmp.eq.s32.totalorder %s33, 1
      %p203 = por %p201, %p202
      %p205 = scmp.ne.s32.totalorder %s190, %s204
      %p206 = scmp.eq.s32.totalorder %s33, 0
      %p207 = por %p205, %p206
      %s209 = sadd.s32 %s208, 1
      %p212 = scmp.eq.s32.totalorder %s27, 1
      %p213 = scmp.ne.s32.totalorder %s208, %s210
      %p214 = scmp.eq.s32.totalorder %s27, 0
      %p215 = por %p213, %p214
      %p216 = scmp.ne.s32.totalorder %s208, %s210
      %p217 = scmp.eq.s32.totalorder %s32, 1
      %p218 = por %p216, %p217
      %p219 = scmp.ne.s32.totalorder %s210, %s211
      %p220 = scmp.eq.s32.totalorder %s32, 0
      %p221 = por %p219, %p220
      %p222 = scmp.ne.s32.totalorder %s210, %s211
      %p223 = scmp.eq.s32.totalorder %s33, 1
      %p224 = por %p222, %p223
      %p226 = scmp.ne.s32.totalorder %s211, %s225
      %p227 = scmp.eq.s32.totalorder %s33, 0
      %p228 = por %p226, %p227
      %s230 = sadd.s32 %s229, 1
      %p233 = scmp.eq.s32.totalorder %s27, 1
      %p234 = scmp.ne.s32.totalorder %s229, %s231
      %p235 = scmp.eq.s32.totalorder %s27, 0
      %p236 = por %p234, %p235
      %p237 = scmp.ne.s32.totalorder %s229, %s231
      %p238 = scmp.eq.s32.totalorder %s32, 1
      %p239 = por %p237, %p238
      %p240 = scmp.ne.s32.totalorder %s231, %s232
      %p241 = scmp.eq.s32.totalorder %s32, 0
      %p242 = por %p240, %p241
      %p243 = scmp.ne.s32.totalorder %s231, %s232
      %p244 = scmp.eq.s32.totalorder %s33, 1
      %p245 = por %p243, %p244
      %p247 = scmp.ne.s32.totalorder %s232, %s246
      %p248 = scmp.eq.s32.totalorder %s33, 0
      %p249 = por %p247, %p248
      %s251 = sadd.s32 %s250, 1
      %p254 = scmp.eq.s32.totalorder %s27, 1
      %p255 = scmp.ne.s32.totalorder %s250, %s252
      %p256 = scmp.eq.s32.totalorder %s27, 0
      %p257 = por %p255, %p256
      %p258 = scmp.ne.s32.totalorder %s250, %s252
      %p259 = scmp.eq.s32.totalorder %s32, 1
      %p260 = por %p258, %p259
      %p261 = scmp.ne.s32.totalorder %s252, %s253
      %p262 = scmp.eq.s32.totalorder %s32, 0
      %p263 = por %p261, %p262
      %p264 = scmp.ne.s32.totalorder %s252, %s253
      %p265 = scmp.eq.s32.totalorder %s33, 1
      %p266 = por %p264, %p265
      %p268 = scmp.ne.s32.totalorder %s253, %s267
      %p269 = scmp.eq.s32.totalorder %s33, 0
      %p270 = por %p268, %p269
      %s271 = ssub.s32 %s27, %s34
      %p272 = scmp.eq.s32.totalorder %s271, 0
      %s274 = sadd.s32 %s273, 1
      %s275 = scalar_select %p272, %s273, %s274
      %p278 = pneg %p272
      %p279 = scmp.eq.s32.totalorder %s27, 1
      %p280 = por %p278, %p279
      %p281 = scmp.ne.s32.totalorder %s273, %s276
      %p282 = scmp.eq.s32.totalorder %s27, 0
      %p283 = por %p281, %p282
      %p284 = scmp.ne.s32.totalorder %s273, %s276
      %p285 = scmp.eq.s32.totalorder %s32, 1
      %p286 = por %p284, %p285
      %p287 = scmp.ne.s32.totalorder %s276, %s277
      %p288 = scmp.eq.s32.totalorder %s32, 0
      %p289 = por %p287, %p288
      %p290 = scmp.ne.s32.totalorder %s276, %s277
      %p291 = scmp.eq.s32.totalorder %s33, 1
      %p292 = por %p290, %p291
      %p294 = scmp.ne.s32.totalorder %s277, %s293
      %p295 = scmp.eq.s32.totalorder %s33, 0
      %p296 = por %p294, %p295
      %p297 = scmp.le.s32.totalorder 1, %s27
      %p298 = scmp.lt.s32.totalorder %s27, 3
      %p299 = pnand %p297, %p298
      %p300 = pneg %p299
      // Predicated region
      $region9: #{tpu_custom_call.1} parent=5 // pred_check
        _
      $region10: #{tpu_custom_call.1} parent=5 // pred_check_branch
        %302 = sbr.rel (%p299) target = $region12
      $region11: #{tpu_custom_call.1} parent=5 // pred_region
        %s303 = ssub.s32 %s27, 1
        // Predicated region
        $region13: #{tpu_custom_call.1} parent=11 // pred_check
          %p304 = pneg %p74
        $region14: #{tpu_custom_call.1} parent=11 // pred_check_branch
          %306 = sbr.rel (%p304) target = $region16
        $region15: #{tpu_custom_call.1} parent=11 // pred_region
          %s308 = ssub.s32 128, 128
          %309 = vsyncadd [#allocation6], %s308
          %s311 = sshll.u32 [#allocation5], 4
          %s312 = int_to_ptr.vmem [resolvable:$true] %s311
          %314 = dma.hbm_to_vmem [thread:$0]  %s1, 128, %s312, [#allocation6]
        $region16: #{tpu_custom_call.1} parent=11 // pred_fallthru
          _
        // Predicated region
        $region17: #{tpu_custom_call.1} parent=11 // pred_check
          %p315 = pneg %p95
        $region18: #{tpu_custom_call.1} parent=11 // pred_check_branch
          %317 = sbr.rel (%p315) target = $region20
        $region19: #{tpu_custom_call.1} parent=11 // pred_region
          %s319 = ssub.s32 1024, 1024
          %320 = vsyncadd [#allocation6], %s319
          %s321 = sshll.u32 [#allocation7], 4
          %s322 = int_to_ptr.vmem [resolvable:$true] %s321
          %327 = dma.hbm_to_vmem [thread:$0]  %s2, 1024, %s322, [#allocation6], 64, 64, 4
        $region20: #{tpu_custom_call.1} parent=11 // pred_fallthru
          _
        // Predicated region
        $region21: #{tpu_custom_call.1} parent=11 // pred_check
          %p328 = pneg %p116
        $region22: #{tpu_custom_call.1} parent=11 // pred_check_branch
          %330 = sbr.rel (%p328) target = $region24
        $region23: #{tpu_custom_call.1} parent=11 // pred_region
          _
        $region24: #{tpu_custom_call.1} parent=11 // pred_fallthru
          _
        // Predicated region
        $region25: #{tpu_custom_call.1} parent=11 // pred_check
          %p331 = pneg %p137
        $region26: #{tpu_custom_call.1} parent=11 // pred_check_branch
          %333 = sbr.rel (%p331) target = $region28
        $region27: #{tpu_custom_call.1} parent=11 // pred_region
          %s335 = ssub.s32 1024, 1024
          %336 = vsyncadd [#allocation9], %s335
          %s337 = sshll.u32 [#allocation8], 4
          %s338 = int_to_ptr.vmem [resolvable:$true] %s337
          %343 = dma.hbm_to_vmem [thread:$0]  %s4, 1024, %s338, [#allocation9], 64, 64, 4
        $region28: #{tpu_custom_call.1} parent=11 // pred_fallthru
          _
        // Predicated region
        $region29: #{tpu_custom_call.1} parent=11 // pred_check
          %p344 = pneg %p158
        $region30: #{tpu_custom_call.1} parent=11 // pred_check_branch
          %346 = sbr.rel (%p344) target = $region32
        $region31: #{tpu_custom_call.1} parent=11 // pred_region
          %s348 = ssub.s32 1024, 1024
          %349 = vsyncadd [#allocation9], %s348
          %s350 = sshll.u32 [#allocation10], 4
          %s351 = int_to_ptr.vmem [resolvable:$true] %s350
          %356 = dma.hbm_to_vmem [thread:$0]  %s5, 1024, %s351, [#allocation9], 64, 64, 4
        $region32: #{tpu_custom_call.1} parent=11 // pred_fallthru
          _
        // Predicated region
        $region33: #{tpu_custom_call.1} parent=11 // pred_check
          %p357 = pneg %p179
        $region34: #{tpu_custom_call.1} parent=11 // pred_check_branch
          %359 = sbr.rel (%p357) target = $region36
        $region35: #{tpu_custom_call.1} parent=11 // pred_region
          %s361 = ssub.s32 1024, 1024
          %362 = vsyncadd [#allocation12], %s361
          %s363 = sshll.u32 [#allocation11], 4
          %s364 = int_to_ptr.vmem [resolvable:$true] %s363
          %369 = dma.hbm_to_vmem [thread:$0]  %s6, 1024, %s364, [#allocation12], 64, 64, 4
        $region36: #{tpu_custom_call.1} parent=11 // pred_fallthru
          _
        // Predicated region
        $region37: #{tpu_custom_call.1} parent=11 // pred_check
          %p370 = pneg %p200
        $region38: #{tpu_custom_call.1} parent=11 // pred_check_branch
          %372 = sbr.rel (%p370) target = $region40
        $region39: #{tpu_custom_call.1} parent=11 // pred_region
          %s374 = ssub.s32 1024, 1024
          %375 = vsyncadd [#allocation12], %s374
          %s376 = sshll.u32 [#allocation13], 4
          %s377 = int_to_ptr.vmem [resolvable:$true] %s376
          %382 = dma.hbm_to_vmem [thread:$0]  %s7, 1024, %s377, [#allocation12], 64, 64, 4
        $region40: #{tpu_custom_call.1} parent=11 // pred_fallthru
          _
        // Predicated region
        $region41: #{tpu_custom_call.1} parent=11 // pred_check
          %p383 = pneg %p221
        $region42: #{tpu_custom_call.1} parent=11 // pred_check_branch
          %385 = sbr.rel (%p383) target = $region44
        $region43: #{tpu_custom_call.1} parent=11 // pred_region
          _
        $region44: #{tpu_custom_call.1} parent=11 // pred_fallthru
          _
        // Predicated region
        $region45: #{tpu_custom_call.1} parent=11 // pred_check
          %p386 = pneg %p242
        $region46: #{tpu_custom_call.1} parent=11 // pred_check_branch
          %388 = sbr.rel (%p386) target = $region48
        $region47: #{tpu_custom_call.1} parent=11 // pred_region
          %s390 = ssub.s32 1024, 1024
          %391 = vsyncadd [#allocation15], %s390
          %s392 = sshll.u32 [#allocation14], 4
          %s393 = int_to_ptr.vmem [resolvable:$true] %s392
          %398 = dma.hbm_to_vmem [thread:$0]  %s9, 1024, %s393, [#allocation15], 64, 64, 4
        $region48: #{tpu_custom_call.1} parent=11 // pred_fallthru
          _
        // Predicated region
        $region49: #{tpu_custom_call.1} parent=11 // pred_check
          %p399 = pneg %p263
        $region50: #{tpu_custom_call.1} parent=11 // pred_check_branch
          %401 = sbr.rel (%p399) target = $region52
        $region51: #{tpu_custom_call.1} parent=11 // pred_region
          _
        $region52: #{tpu_custom_call.1} parent=11 // pred_fallthru
          _
      $region12: #{tpu_custom_call.1} parent=5 // pred_fallthru
        _
      %p402 = scmp.lt.s32.totalorder %s27, 2
      // Predicated region
      $region53: #{tpu_custom_call.1} parent=5 // pred_check
        %p403 = pneg %p402
      $region54: #{tpu_custom_call.1} parent=5 // pred_check_branch
        %405 = sbr.rel (%p403) target = $region56
      $region55: #{tpu_custom_call.1} parent=5 // pred_region
        // Predicated region
        $region57: #{tpu_custom_call.1} parent=55 // pred_check
          %p406 = pneg %p47
        $region58: #{tpu_custom_call.1} parent=55 // pred_check_branch
          %408 = sbr.rel (%p406) target = $region60
        $region59: #{tpu_custom_call.1} parent=55 // pred_region
          %s409 = sand.u32 %s37, 1
          %s410 = scalar_lea.sflag [#allocation3], %s409
          %s411 = sand.u32 %s37, 1
          %s412 = smul.addr %s411, 8
          %s413 = scalar_lea.vmem [#allocation2], %s412
          %s415 = ssub.s32 128, 128
          %416 = vsyncadd %s410, %s415
          %s417 = smul.addr %s27, 128
          %s418 = scalar_lea.hbm %s0, %s417
          %s420 = sshll.u32 %s413, 4
          %s421 = int_to_ptr.vmem [resolvable:$true] %s420
          %423 = dma.hbm_to_vmem [thread:$0]  %s418, 128, %s421, %s410
        $region60: #{tpu_custom_call.1} parent=55 // pred_fallthru
          _
      $region56: #{tpu_custom_call.1} parent=5 // pred_fallthru
        _
      %p424 = scmp.le.s32.totalorder 1, %s27
      %p425 = scmp.lt.s32.totalorder %s27, 3
      %p426 = pnand %p424, %p425
      %p427 = pneg %p426
      // Predicated region
      $region61: #{tpu_custom_call.1} parent=5 // pred_check
        _
      $region62: #{tpu_custom_call.1} parent=5 // pred_check_branch
        %429 = sbr.rel (%p426) target = $region64
      $region63: #{tpu_custom_call.1} parent=5 // pred_region
        %s430 = ssub.s32 %s27, 1
        %s431 = sand.u32 %s40, 1
        %s432 = scalar_lea.sflag [#allocation3], %s431
        %s433 = sand.u32 %s40, 1
        %s434 = smul.addr %s433, 8
        %s435 = scalar_lea.vmem [#allocation2], %s434
        // Predicated region
        $region65: #{tpu_custom_call.1} parent=63 // pred_check
          %p436 = pneg %p53
        $region66: #{tpu_custom_call.1} parent=63 // pred_check_branch
          %438 = sbr.rel (%p436) target = $region68
        $region67: #{tpu_custom_call.1} parent=63 // pred_region
          %439 = dma.done %s432, 128
        $region68: #{tpu_custom_call.1} parent=63 // pred_fallthru
          _
        // Predicated region
        $region69: #{tpu_custom_call.1} parent=63 // pred_check
          %p440 = pneg %p74
        $region70: #{tpu_custom_call.1} parent=63 // pred_check_branch
          %442 = sbr.rel (%p440) target = $region72
        $region71: #{tpu_custom_call.1} parent=63 // pred_region
          %443 = dma.done [#allocation6], 128
        $region72: #{tpu_custom_call.1} parent=63 // pred_fallthru
          _
        // Predicated region
        $region73: #{tpu_custom_call.1} parent=63 // pred_check
          %p444 = pneg %p95
        $region74: #{tpu_custom_call.1} parent=63 // pred_check_branch
          %446 = sbr.rel (%p444) target = $region76
        $region75: #{tpu_custom_call.1} parent=63 // pred_region
          %447 = dma.done [#allocation6], 1024
        $region76: #{tpu_custom_call.1} parent=63 // pred_fallthru
          _
        // Predicated region
        $region77: #{tpu_custom_call.1} parent=63 // pred_check
          %p448 = pneg %p137
        $region78: #{tpu_custom_call.1} parent=63 // pred_check_branch
          %450 = sbr.rel (%p448) target = $region80
        $region79: #{tpu_custom_call.1} parent=63 // pred_region
          %451 = dma.done [#allocation9], 1024
        $region80: #{tpu_custom_call.1} parent=63 // pred_fallthru
          _
        // Predicated region
        $region81: #{tpu_custom_call.1} parent=63 // pred_check
          %p452 = pneg %p158
        $region82: #{tpu_custom_call.1} parent=63 // pred_check_branch
          %454 = sbr.rel (%p452) target = $region84
        $region83: #{tpu_custom_call.1} parent=63 // pred_region
          %455 = dma.done [#allocation9], 1024
        $region84: #{tpu_custom_call.1} parent=63 // pred_fallthru
          _
        // Predicated region
        $region85: #{tpu_custom_call.1} parent=63 // pred_check
          %p456 = pneg %p179
        $region86: #{tpu_custom_call.1} parent=63 // pred_check_branch
          %458 = sbr.rel (%p456) target = $region88
        $region87: #{tpu_custom_call.1} parent=63 // pred_region
          %459 = dma.done [#allocation12], 1024
        $region88: #{tpu_custom_call.1} parent=63 // pred_fallthru
          _
        // Predicated region
        $region89: #{tpu_custom_call.1} parent=63 // pred_check
          %p460 = pneg %p200
        $region90: #{tpu_custom_call.1} parent=63 // pred_check_branch
          %462 = sbr.rel (%p460) target = $region92
        $region91: #{tpu_custom_call.1} parent=63 // pred_region
          %463 = dma.done [#allocation12], 1024
        $region92: #{tpu_custom_call.1} parent=63 // pred_fallthru
          _
        // Predicated region
        $region93: #{tpu_custom_call.1} parent=63 // pred_check
          %p464 = pneg %p242
        $region94: #{tpu_custom_call.1} parent=63 // pred_check_branch
          %466 = sbr.rel (%p464) target = $region96
        $region95: #{tpu_custom_call.1} parent=63 // pred_region
          %467 = dma.done [#allocation15], 1024
        $region96: #{tpu_custom_call.1} parent=63 // pred_fallthru
          _
        %s468 = sand.u32 %s40, 1
        %s469 = scalar_lea.sflag [#allocation3], %s468
        %s470 = sand.u32 %s40, 1
        %s471 = smul.addr %s470, 8
        %s472 = scalar_lea.vmem [#allocation2], %s471
        %p473 = pneg %p53
        %p474 = pneg %p50
        %p475 = pneg %p74
        %p476 = pneg %p71
        %p477 = pneg %p95
        %p478 = pneg %p92
        %p479 = pneg %p116
        %p480 = pneg %p113
        %p481 = pneg %p137
        %p482 = pneg %p134
        %p483 = pneg %p158
        %p484 = pneg %p155
        %p485 = pneg %p179
        %p486 = pneg %p176
        %p487 = pneg %p200
        %p488 = pneg %p197
        %p489 = pneg %p221
        %p490 = pneg %p218
        %p491 = pneg %p242
        %p492 = pneg %p239
        %p493 = pneg %p263
        %p494 = pneg %p260
        %p495 = pneg %p289
        %p496 = pneg %p286
        %s497 = sand.u32 %s276, 1
        %s498 = scalar_lea.sflag [#allocation4], %s497
        %s499 = sand.u32 %s276, 1
        %s500 = scalar_lea.vmem [#allocation16], %s499
        %v502 = vld [vmem:[%s435] sm:$0xff]
        %v503 = vpack.c.bf16 %v502, %v502
        %v504 = vld [vmem:[#allocation5] sm:$0xff]
        %v505 = vld [vmem:[#allocation7] sm:$0xf]
        %v506 = vld [vmem:[#allocation7 + $0x4] sm:$0xf]
        %v507 = vld [vmem:[#allocation7 + $0x8] sm:$0xf]
        %v508 = vld [vmem:[#allocation7 + $0xc] sm:$0xf]
        %v509 = vld [vmem:[#allocation7 + $0x10] sm:$0xf]
        %v510 = vld [vmem:[#allocation7 + $0x14] sm:$0xf]
        %v511 = vld [vmem:[#allocation7 + $0x18] sm:$0xf]
        %v512 = vld [vmem:[#allocation7 + $0x1c] sm:$0xf]
        %v513 = vld [vmem:[#allocation7 + $0x20] sm:$0xf]
        %v514 = vld [vmem:[#allocation7 + $0x24] sm:$0xf]
        %v515 = vld [vmem:[#allocation7 + $0x28] sm:$0xf]
        %v516 = vld [vmem:[#allocation7 + $0x2c] sm:$0xf]
        %v517 = vld [vmem:[#allocation7 + $0x30] sm:$0xf]
        %v518 = vld [vmem:[#allocation7 + $0x34] sm:$0xf]
        %v519 = vld [vmem:[#allocation7 + $0x38] sm:$0xf]
        %v520 = vld [vmem:[#allocation7 + $0x3c] sm:$0xf]
        %v521 = vld [vmem:[%s3] sm:$0x1]
        %v523 = vlaneseq
        %v524 = vshrl.u32 %v523, 7
        %v525 = vsub.s32 0, %v524
        %v526 = vrot.slane %v521, %v525
        %v544 = vunpack.c.l.b16 %v505
        %v545 = vunpack.c.l.b16 %v506
        %v546 = vunpack.c.l.b16 %v507
        %v547 = vunpack.c.l.b16 %v508
        %v548 = vunpack.c.l.b16 %v509
        %v549 = vunpack.c.l.b16 %v510
        %v550 = vunpack.c.l.b16 %v511
        %v551 = vunpack.c.l.b16 %v512
        %v552 = vunpack.c.l.b16 %v513
        %v553 = vunpack.c.l.b16 %v514
        %v554 = vunpack.c.l.b16 %v515
        %v555 = vunpack.c.l.b16 %v516
        %v556 = vunpack.c.l.b16 %v517
        %v557 = vunpack.c.l.b16 %v518
        %v558 = vunpack.c.l.b16 %v519
        %v559 = vunpack.c.l.b16 %v520
        %v560 = vpack.c.b16 %v545, %v544
        %v561 = vpack.c.b16 %v547, %v546
        %v562 = vpack.c.b16 %v549, %v548
        %v563 = vpack.c.b16 %v551, %v550
        %v564 = vpack.c.b16 %v553, %v552
        %v565 = vpack.c.b16 %v555, %v554
        %v566 = vpack.c.b16 %v557, %v556
        %v567 = vpack.c.b16 %v559, %v558
        %576 = vmatprep.subr.bf16.mxu0 0
        %577 = vmatpush1.bf16.msra.mxu0 %v560
        %578 = vmatprep.subr.bf16.mxu0 0
        %579 = vmatpush1.bf16.msra.mxu0 %v561
        %580 = vmatprep.subr.bf16.mxu0 0
        %581 = vmatpush1.bf16.msra.mxu0 %v562
        %582 = vmatprep.subr.bf16.mxu0 0
        %583 = vmatpush1.bf16.msra.mxu0 %v563
        %584 = vmatprep.subr.bf16.mxu0 0
        %585 = vmatpush1.bf16.msra.mxu0 %v564
        %586 = vmatprep.subr.bf16.mxu0 0
        %587 = vmatpush1.bf16.msra.mxu0 %v565
        %588 = vmatprep.subr.bf16.mxu0 0
        %589 = vmatpush1.bf16.msra.mxu0 %v566
        %590 = vmatprep.subr.bf16.mxu0 0
        %591 = vmatpush1.bf16.msra.mxu0 %v567
        %592 = vmatprep.subr.bf16.mxu0 0
        %593 = vmatpush1.bf16.msra.mxu0 0
        %594 = vmatprep.subr.bf16.mxu0 0
        %595 = vmatpush1.bf16.msra.mxu0 0
        %596 = vmatprep.subr.bf16.mxu0 0
        %597 = vmatpush1.bf16.msra.mxu0 0
        %598 = vmatprep.subr.bf16.mxu0 0
        %599 = vmatpush1.bf16.msra.mxu0 0
        %600 = vmatprep.subr.bf16.mxu0 0
        %601 = vmatpush1.bf16.msra.mxu0 0
        %602 = vmatprep.subr.bf16.mxu0 0
        %603 = vmatpush1.bf16.msra.mxu0 0
        %604 = vmatprep.subr.bf16.mxu0 0
        %605 = vmatpush1.bf16.msra.mxu0 0
        %606 = vmatprep.subr.bf16.mxu0 0
        %607 = vmatpush1.bf16.msra.mxu0 0
        %608 = vmatprep.mubr.bf16.mxu0 0
        %609 = vmatmul.mubr.bf16.gmra.mrb[0].mxu0 %v503
        %v610 = vpop.f32.mrb[0].mxu0
        %v611 = vadd.f32 %v526, %v610
        %v612 = vpop.f32.mrb[0].mxu0
        %v613 = vpop.f32.mrb[0].mxu0
        %v614 = vpop.f32.mrb[0].mxu0
        %615 = vdwg.mxu0
        %v616 = vadd.f32 %v611, %v504
        %v617 = vpack.c.bf16 %v616, %v616
        %v618 = vld [vmem:[#allocation8] sm:$0xf]
        %v619 = vld [vmem:[#allocation8 + $0x4] sm:$0xf]
        %v620 = vld [vmem:[#allocation8 + $0x8] sm:$0xf]
        %v621 = vld [vmem:[#allocation8 + $0xc] sm:$0xf]
        %v622 = vld [vmem:[#allocation8 + $0x10] sm:$0xf]
        %v623 = vld [vmem:[#allocation8 + $0x14] sm:$0xf]
        %v624 = vld [vmem:[#allocation8 + $0x18] sm:$0xf]
        %v625 = vld [vmem:[#allocation8 + $0x1c] sm:$0xf]
        %v626 = vld [vmem:[#allocation8 + $0x20] sm:$0xf]
        %v627 = vld [vmem:[#allocation8 + $0x24] sm:$0xf]
        %v628 = vld [vmem:[#allocation8 + $0x28] sm:$0xf]
        %v629 = vld [vmem:[#allocation8 + $0x2c] sm:$0xf]
        %v630 = vld [vmem:[#allocation8 + $0x30] sm:$0xf]
        %v631 = vld [vmem:[#allocation8 + $0x34] sm:$0xf]
        %v632 = vld [vmem:[#allocation8 + $0x38] sm:$0xf]
        %v633 = vld [vmem:[#allocation8 + $0x3c] sm:$0xf]
        %v650 = vunpack.c.l.b16 %v618
        %v651 = vunpack.c.l.b16 %v619
        %v652 = vunpack.c.l.b16 %v620
        %v653 = vunpack.c.l.b16 %v621
        %v654 = vunpack.c.l.b16 %v622
        %v655 = vunpack.c.l.b16 %v623
        %v656 = vunpack.c.l.b16 %v624
        %v657 = vunpack.c.l.b16 %v625
        %v658 = vunpack.c.l.b16 %v626
        %v659 = vunpack.c.l.b16 %v627
        %v660 = vunpack.c.l.b16 %v628
        %v661 = vunpack.c.l.b16 %v629
        %v662 = vunpack.c.l.b16 %v630
        %v663 = vunpack.c.l.b16 %v631
        %v664 = vunpack.c.l.b16 %v632
        %v665 = vunpack.c.l.b16 %v633
        %v666 = vpack.c.b16 %v651, %v650
        %v667 = vpack.c.b16 %v653, %v652
        %v668 = vpack.c.b16 %v655, %v654
        %v669 = vpack.c.b16 %v657, %v656
        %v670 = vpack.c.b16 %v659, %v658
        %v671 = vpack.c.b16 %v661, %v660
        %v672 = vpack.c.b16 %v663, %v662
        %v673 = vpack.c.b16 %v665, %v664
        %682 = vmatprep.subr.bf16.mxu0 0
        %683 = vmatpush1.bf16.msra.mxu0 %v666
        %684 = vmatprep.subr.bf16.mxu0 0
        %685 = vmatpush1.bf16.msra.mxu0 %v667
        %686 = vmatprep.subr.bf16.mxu0 0
        %687 = vmatpush1.bf16.msra.mxu0 %v668
        %688 = vmatprep.subr.bf16.mxu0 0
        %689 = vmatpush1.bf16.msra.mxu0 %v669
        %690 = vmatprep.subr.bf16.mxu0 0
        %691 = vmatpush1.bf16.msra.mxu0 %v670
        %692 = vmatprep.subr.bf16.mxu0 0
        %693 = vmatpush1.bf16.msra.mxu0 %v671
        %694 = vmatprep.subr.bf16.mxu0 0
        %695 = vmatpush1.bf16.msra.mxu0 %v672
        %696 = vmatprep.subr.bf16.mxu0 0
        %697 = vmatpush1.bf16.msra.mxu0 %v673
        %698 = vmatprep.subr.bf16.mxu0 0
        %699 = vmatpush1.bf16.msra.mxu0 0
        %700 = vmatprep.subr.bf16.mxu0 0
        %701 = vmatpush1.bf16.msra.mxu0 0
        %702 = vmatprep.subr.bf16.mxu0 0
        %703 = vmatpush1.bf16.msra.mxu0 0
        %704 = vmatprep.subr.bf16.mxu0 0
        %705 = vmatpush1.bf16.msra.mxu0 0
        %706 = vmatprep.subr.bf16.mxu0 0
        %707 = vmatpush1.bf16.msra.mxu0 0
        %708 = vmatprep.subr.bf16.mxu0 0
        %709 = vmatpush1.bf16.msra.mxu0 0
        %710 = vmatprep.subr.bf16.mxu0 0
        %711 = vmatpush1.bf16.msra.mxu0 0
        %712 = vmatprep.subr.bf16.mxu0 0
        %713 = vmatpush1.bf16.msra.mxu0 0
        %714 = vmatprep.mubr.bf16.mxu0 0
        %715 = vmatmul.mubr.bf16.gmra.mrb[0].mxu0 %v617
        %v716 = vpop.f32.mrb[0].mxu0
        %v717 = vadd.f32 0.0, %v716
        %v718 = vpop.f32.mrb[0].mxu0
        %v719 = vpop.f32.mrb[0].mxu0
        %v720 = vpop.f32.mrb[0].mxu0
        %721 = vdwg.mxu0
        %v722 = vld [vmem:[#allocation10] sm:$0xf]
        %v723 = vld [vmem:[#allocation10 + $0x4] sm:$0xf]
        %v724 = vld [vmem:[#allocation10 + $0x8] sm:$0xf]
        %v725 = vld [vmem:[#allocation10 + $0xc] sm:$0xf]
        %v726 = vld [vmem:[#allocation10 + $0x10] sm:$0xf]
        %v727 = vld [vmem:[#allocation10 + $0x14] sm:$0xf]
        %v728 = vld [vmem:[#allocation10 + $0x18] sm:$0xf]
        %v729 = vld [vmem:[#allocation10 + $0x1c] sm:$0xf]
        %v730 = vld [vmem:[#allocation10 + $0x20] sm:$0xf]
        %v731 = vld [vmem:[#allocation10 + $0x24] sm:$0xf]
        %v732 = vld [vmem:[#allocation10 + $0x28] sm:$0xf]
        %v733 = vld [vmem:[#allocation10 + $0x2c] sm:$0xf]
        %v734 = vld [vmem:[#allocation10 + $0x30] sm:$0xf]
        %v735 = vld [vmem:[#allocation10 + $0x34] sm:$0xf]
        %v736 = vld [vmem:[#allocation10 + $0x38] sm:$0xf]
        %v737 = vld [vmem:[#allocation10 + $0x3c] sm:$0xf]
        %v754 = vunpack.c.l.b16 %v722
        %v755 = vunpack.c.l.b16 %v723
        %v756 = vunpack.c.l.b16 %v724
        %v757 = vunpack.c.l.b16 %v725
        %v758 = vunpack.c.l.b16 %v726
        %v759 = vunpack.c.l.b16 %v727
        %v760 = vunpack.c.l.b16 %v728
        %v761 = vunpack.c.l.b16 %v729
        %v762 = vunpack.c.l.b16 %v730
        %v763 = vunpack.c.l.b16 %v731
        %v764 = vunpack.c.l.b16 %v732
        %v765 = vunpack.c.l.b16 %v733
        %v766 = vunpack.c.l.b16 %v734
        %v767 = vunpack.c.l.b16 %v735
        %v768 = vunpack.c.l.b16 %v736
        %v769 = vunpack.c.l.b16 %v737
        %v770 = vpack.c.b16 %v755, %v754
        %v771 = vpack.c.b16 %v757, %v756
        %v772 = vpack.c.b16 %v759, %v758
        %v773 = vpack.c.b16 %v761, %v760
        %v774 = vpack.c.b16 %v763, %v762
        %v775 = vpack.c.b16 %v765, %v764
        %v776 = vpack.c.b16 %v767, %v766
        %v777 = vpack.c.b16 %v769, %v768
        %786 = vmatprep.subr.bf16.mxu0 0
        %787 = vmatpush1.bf16.msra.mxu0 %v770
        %788 = vmatprep.subr.bf16.mxu0 0
        %789 = vmatpush1.bf16.msra.mxu0 %v771
        %790 = vmatprep.subr.bf16.mxu0 0
        %791 = vmatpush1.bf16.msra.mxu0 %v772
        %792 = vmatprep.subr.bf16.mxu0 0
        %793 = vmatpush1.bf16.msra.mxu0 %v773
        %794 = vmatprep.subr.bf16.mxu0 0
        %795 = vmatpush1.bf16.msra.mxu0 %v774
        %796 = vmatprep.subr.bf16.mxu0 0
        %797 = vmatpush1.bf16.msra.mxu0 %v775
        %798 = vmatprep.subr.bf16.mxu0 0
        %799 = vmatpush1.bf16.msra.mxu0 %v776
        %800 = vmatprep.subr.bf16.mxu0 0
        %801 = vmatpush1.bf16.msra.mxu0 %v777
        %802 = vmatprep.subr.bf16.mxu0 0
        %803 = vmatpush1.bf16.msra.mxu0 0
        %804 = vmatprep.subr.bf16.mxu0 0
        %805 = vmatpush1.bf16.msra.mxu0 0
        %806 = vmatprep.subr.bf16.mxu0 0
        %807 = vmatpush1.bf16.msra.mxu0 0
        %808 = vmatprep.subr.bf16.mxu0 0
        %809 = vmatpush1.bf16.msra.mxu0 0
        %810 = vmatprep.subr.bf16.mxu0 0
        %811 = vmatpush1.bf16.msra.mxu0 0
        %812 = vmatprep.subr.bf16.mxu0 0
        %813 = vmatpush1.bf16.msra.mxu0 0
        %814 = vmatprep.subr.bf16.mxu0 0
        %815 = vmatpush1.bf16.msra.mxu0 0
        %816 = vmatprep.subr.bf16.mxu0 0
        %817 = vmatpush1.bf16.msra.mxu0 0
        %818 = vmatprep.mubr.bf16.mxu0 0
        %819 = vmatmul.mubr.bf16.gmra.mrb[0].mxu0 %v617
        %v820 = vpop.f32.mrb[0].mxu0
        %v821 = vadd.f32 0.0, %v820
        %v822 = vpop.f32.mrb[0].mxu0
        %v823 = vpop.f32.mrb[0].mxu0
        %v824 = vpop.f32.mrb[0].mxu0
        %825 = vdwg.mxu0
        %v826 = vld [vmem:[#allocation11] sm:$0xf]
        %v827 = vld [vmem:[#allocation11 + $0x4] sm:$0xf]
        %v828 = vld [vmem:[#allocation11 + $0x8] sm:$0xf]
        %v829 = vld [vmem:[#allocation11 + $0xc] sm:$0xf]
        %v830 = vld [vmem:[#allocation11 + $0x10] sm:$0xf]
        %v831 = vld [vmem:[#allocation11 + $0x14] sm:$0xf]
        %v832 = vld [vmem:[#allocation11 + $0x18] sm:$0xf]
        %v833 = vld [vmem:[#allocation11 + $0x1c] sm:$0xf]
        %v834 = vld [vmem:[#allocation11 + $0x20] sm:$0xf]
        %v835 = vld [vmem:[#allocation11 + $0x24] sm:$0xf]
        %v836 = vld [vmem:[#allocation11 + $0x28] sm:$0xf]
        %v837 = vld [vmem:[#allocation11 + $0x2c] sm:$0xf]
        %v838 = vld [vmem:[#allocation11 + $0x30] sm:$0xf]
        %v839 = vld [vmem:[#allocation11 + $0x34] sm:$0xf]
        %v840 = vld [vmem:[#allocation11 + $0x38] sm:$0xf]
        %v841 = vld [vmem:[#allocation11 + $0x3c] sm:$0xf]
        %v858 = vunpack.c.l.b16 %v826
        %v859 = vunpack.c.l.b16 %v827
        %v860 = vunpack.c.l.b16 %v828
        %v861 = vunpack.c.l.b16 %v829
        %v862 = vunpack.c.l.b16 %v830
        %v863 = vunpack.c.l.b16 %v831
        %v864 = vunpack.c.l.b16 %v832
        %v865 = vunpack.c.l.b16 %v833
        %v866 = vunpack.c.l.b16 %v834
        %v867 = vunpack.c.l.b16 %v835
        %v868 = vunpack.c.l.b16 %v836
        %v869 = vunpack.c.l.b16 %v837
        %v870 = vunpack.c.l.b16 %v838
        %v871 = vunpack.c.l.b16 %v839
        %v872 = vunpack.c.l.b16 %v840
        %v873 = vunpack.c.l.b16 %v841
        %v874 = vpack.c.b16 %v859, %v858
        %v875 = vpack.c.b16 %v861, %v860
        %v876 = vpack.c.b16 %v863, %v862
        %v877 = vpack.c.b16 %v865, %v864
        %v878 = vpack.c.b16 %v867, %v866
        %v879 = vpack.c.b16 %v869, %v868
        %v880 = vpack.c.b16 %v871, %v870
        %v881 = vpack.c.b16 %v873, %v872
        %890 = vmatprep.subr.bf16.mxu0 0
        %891 = vmatpush1.bf16.msra.mxu0 %v874
        %892 = vmatprep.subr.bf16.mxu0 0
        %893 = vmatpush1.bf16.msra.mxu0 %v875
        %894 = vmatprep.subr.bf16.mxu0 0
        %895 = vmatpush1.bf16.msra.mxu0 %v876
        %896 = vmatprep.subr.bf16.mxu0 0
        %897 = vmatpush1.bf16.msra.mxu0 %v877
        %898 = vmatprep.subr.bf16.mxu0 0
        %899 = vmatpush1.bf16.msra.mxu0 %v878
        %900 = vmatprep.subr.bf16.mxu0 0
        %901 = vmatpush1.bf16.msra.mxu0 %v879
        %902 = vmatprep.subr.bf16.mxu0 0
        %903 = vmatpush1.bf16.msra.mxu0 %v880
        %904 = vmatprep.subr.bf16.mxu0 0
        %905 = vmatpush1.bf16.msra.mxu0 %v881
        %906 = vmatprep.subr.bf16.mxu0 0
        %907 = vmatpush1.bf16.msra.mxu0 0
        %908 = vmatprep.subr.bf16.mxu0 0
        %909 = vmatpush1.bf16.msra.mxu0 0
        %910 = vmatprep.subr.bf16.mxu0 0
        %911 = vmatpush1.bf16.msra.mxu0 0
        %912 = vmatprep.subr.bf16.mxu0 0
        %913 = vmatpush1.bf16.msra.mxu0 0
        %914 = vmatprep.subr.bf16.mxu0 0
        %915 = vmatpush1.bf16.msra.mxu0 0
        %916 = vmatprep.subr.bf16.mxu0 0
        %917 = vmatpush1.bf16.msra.mxu0 0
        %918 = vmatprep.subr.bf16.mxu0 0
        %919 = vmatpush1.bf16.msra.mxu0 0
        %920 = vmatprep.subr.bf16.mxu0 0
        %921 = vmatpush1.bf16.msra.mxu0 0
        %922 = vmatprep.mubr.bf16.mxu0 0
        %923 = vmatmul.mubr.bf16.gmra.mrb[0].mxu0 %v617
        %v924 = vpop.f32.mrb[0].mxu0
        %v925 = vadd.f32 0.0, %v924
        %v926 = vpop.f32.mrb[0].mxu0
        %v927 = vpop.f32.mrb[0].mxu0
        %v928 = vpop.f32.mrb[0].mxu0
        %929 = vdwg.mxu0
        %v930 = vlaneseq
        %v931 = vshrl.u32 %v930, 7
        %v932 = vlaneseq
        %v933 = vand.u32 %v932, 127
        %v934 = vsub.s32 %v933, %v931
        %vm935 = vcmp.lt.s32.totalorder %v934, 0
        %v936 = vsub.s32 0, %v934
        %v937 = vsel %vm935, %v936, %v934
        %vm938 = vcmp.le.s32.totalorder %v937, 2
        %v939 = vsel %vm938, 0.0, -1e+30
        %v940 = vsel %vm938, 1, 0
        %v941 = vcvt.s32.f32 %v940
        %vm942 = vcmask 64512
        %v943 = vsel %vm942, %v941, 0.0
        %944 = vadd.xlane.f32.xlu0 %v943
        %v945 = vpop.xlane.xlu0 %944
        %v946 = vsub.f32 5.0, %v945
        %v947 = vpack.c.bf16 %v717, %v717
        %v948 = vpack.c.bf16 %v821, %v821
        %949 = vmatprep.subr.bf16.mxu0 0
        %950 = vmatpush1.bf16.xpose.msra.mxu0 %v948
        %951 = vmatprep.subr.bf16.mxu0 0
        %952 = vmatpush1.bf16.xpose.msra.mxu0 0
        %953 = vmatprep.subr.bf16.mxu0 0
        %954 = vmatpush1.bf16.xpose.msra.mxu0 0
        %955 = vmatprep.subr.bf16.mxu0 0
        %956 = vmatpush1.bf16.xpose.msra.mxu0 0
        %957 = vmatprep.subr.bf16.mxu0 0
        %958 = vmatpush1.bf16.xpose.msra.mxu0 0
        %959 = vmatprep.subr.bf16.mxu0 0
        %960 = vmatpush1.bf16.xpose.msra.mxu0 0
        %961 = vmatprep.subr.bf16.mxu0 0
        %962 = vmatpush1.bf16.xpose.msra.mxu0 0
        %963 = vmatprep.subr.bf16.mxu0 0
        %964 = vmatpush1.bf16.xpose.msra.mxu0 0
        %965 = vmatprep.subr.bf16.mxu0 0
        %966 = vmatpush1.bf16.xpose.msra.mxu0 0
        %967 = vmatprep.subr.bf16.mxu0 0
        %968 = vmatpush1.bf16.xpose.msra.mxu0 0
        %969 = vmatprep.subr.bf16.mxu0 0
        %970 = vmatpush1.bf16.xpose.msra.mxu0 0
        %971 = vmatprep.subr.bf16.mxu0 0
        %972 = vmatpush1.bf16.xpose.msra.mxu0 0
        %973 = vmatprep.subr.bf16.mxu0 0
        %974 = vmatpush1.bf16.xpose.msra.mxu0 0
        %975 = vmatprep.subr.bf16.mxu0 0
        %976 = vmatpush1.bf16.xpose.msra.mxu0 0
        %977 = vmatprep.subr.bf16.mxu0 0
        %978 = vmatpush1.bf16.xpose.msra.mxu0 0
        %979 = vmatprep.subr.bf16.mxu0 0
        %980 = vmatpush1.bf16.xpose.msra.mxu0 0
        %981 = vmatprep.mubr.bf16.mxu0 0
        %982 = vmatmul.mubr.bf16.gmra.mrb[0].mxu0 %v947
        %v983 = vpop.f32.mrb[0].mxu0
        %v984 = vadd.f32 %v939, %v983
        %v985 = vpop.f32.mrb[0].mxu0
        %v986 = vpop.f32.mrb[0].mxu0
        %v987 = vpop.f32.mrb[0].mxu0
        %988 = vdwg.mxu0
        %v989 = vsel %vm942, %v984, -inf
        %990 = vmax.xlane.f32.xlu0 %v989
        %v991 = vpop.xlane.xlu0 %990
        %vm992 = vcmp.gt.f32.partialorder %v946, 0.0
        %v993 = vmax.f32 %v991, 0.0
        %v994 = vsel %vm992, %v993, %v991
        %v995 = vsub.f32 %v984, %v994
        %v996 = vmul.f32 %v995, 1.442695
        %v997 = vpow.pop %v996
        %v998 = vsel %vm942, %v997, 0.0
        %999 = vadd.xlane.f32.xlu0 %v998
        %v1000 = vpop.xlane.xlu0 %999
        %v1001 = vsub.f32 0.0, %v994
        %v1002 = vmul.f32 %v1001, 1.442695
        %v1003 = vpow.pop %v1002
        %v1004 = vmul.f32 %v946, %v1003
        %v1005 = vadd.f32 %v1000, %v1004
        %v1006 = vrcp.pop %v1005
        %v1007 = vmul.f32 %v997, %v1006
        %v1008 = vpack.c.bf16 %v1007, %v1007
        %v1009 = vpack.c.bf16 %v925, %v925
        %v1011 = vsel %vm942, %v1008, 0
        %vm1013 = vcmask 1043456
        %v1015 = vsel %vm1013, %v1009, 0
        %1017 = vmatprep.subr.bf16.mxu0 0
        %1018 = vmatpush1.bf16.msra.mxu0 %v1015
        %1019 = vmatprep.subr.bf16.mxu0 0
        %1020 = vmatpush1.bf16.msra.mxu0 0
        %1021 = vmatprep.subr.bf16.mxu0 0
        %1022 = vmatpush1.bf16.msra.mxu0 0
        %1023 = vmatprep.subr.bf16.mxu0 0
        %1024 = vmatpush1.bf16.msra.mxu0 0
        %1025 = vmatprep.subr.bf16.mxu0 0
        %1026 = vmatpush1.bf16.msra.mxu0 0
        %1027 = vmatprep.subr.bf16.mxu0 0
        %1028 = vmatpush1.bf16.msra.mxu0 0
        %1029 = vmatprep.subr.bf16.mxu0 0
        %1030 = vmatpush1.bf16.msra.mxu0 0
        %1031 = vmatprep.subr.bf16.mxu0 0
        %1032 = vmatpush1.bf16.msra.mxu0 0
        %1033 = vmatprep.subr.bf16.mxu0 0
        %1034 = vmatpush1.bf16.msra.mxu0 0
        %1035 = vmatprep.subr.bf16.mxu0 0
        %1036 = vmatpush1.bf16.msra.mxu0 0
        %1037 = vmatprep.subr.bf16.mxu0 0
        %1038 = vmatpush1.bf16.msra.mxu0 0
        %1039 = vmatprep.subr.bf16.mxu0 0
        %1040 = vmatpush1.bf16.msra.mxu0 0
        %1041 = vmatprep.subr.bf16.mxu0 0
        %1042 = vmatpush1.bf16.msra.mxu0 0
        %1043 = vmatprep.subr.bf16.mxu0 0
        %1044 = vmatpush1.bf16.msra.mxu0 0
        %1045 = vmatprep.subr.bf16.mxu0 0
        %1046 = vmatpush1.bf16.msra.mxu0 0
        %1047 = vmatprep.subr.bf16.mxu0 0
        %1048 = vmatpush1.bf16.msra.mxu0 0
        %1049 = vmatprep.mubr.bf16.mxu0 0
        %1050 = vmatmul.mubr.bf16.gmra.mrb[0].mxu0 %v1011
        %v1051 = vpop.f32.mrb[0].mxu0
        %v1052 = vadd.f32 0.0, %v1051
        %v1053 = vpop.f32.mrb[0].mxu0
        %v1054 = vpop.f32.mrb[0].mxu0
        %v1055 = vpop.f32.mrb[0].mxu0
        %1056 = vdwg.mxu0
        %v1057 = vpack.c.bf16 %v1052, %v1052
        %v1058 = vld [vmem:[#allocation13] sm:$0xf]
        %v1059 = vld [vmem:[#allocation13 + $0x4] sm:$0xf]
        %v1060 = vld [vmem:[#allocation13 + $0x8] sm:$0xf]
        %v1061 = vld [vmem:[#allocation13 + $0xc] sm:$0xf]
        %v1062 = vld [vmem:[#allocation13 + $0x10] sm:$0xf]
        %v1063 = vld [vmem:[#allocation13 + $0x14] sm:$0xf]
        %v1064 = vld [vmem:[#allocation13 + $0x18] sm:$0xf]
        %v1065 = vld [vmem:[#allocation13 + $0x1c] sm:$0xf]
        %v1066 = vld [vmem:[#allocation13 + $0x20] sm:$0xf]
        %v1067 = vld [vmem:[#allocation13 + $0x24] sm:$0xf]
        %v1068 = vld [vmem:[#allocation13 + $0x28] sm:$0xf]
        %v1069 = vld [vmem:[#allocation13 + $0x2c] sm:$0xf]
        %v1070 = vld [vmem:[#allocation13 + $0x30] sm:$0xf]
        %v1071 = vld [vmem:[#allocation13 + $0x34] sm:$0xf]
        %v1072 = vld [vmem:[#allocation13 + $0x38] sm:$0xf]
        %v1073 = vld [vmem:[#allocation13 + $0x3c] sm:$0xf]
        %v1074 = vld [vmem:[%s8] sm:$0x1]
        %v1076 = vlaneseq
        %v1077 = vshrl.u32 %v1076, 7
        %v1078 = vsub.s32 0, %v1077
        %v1079 = vrot.slane %v1074, %v1078
        %v1097 = vunpack.c.l.b16 %v1058
        %v1098 = vunpack.c.l.b16 %v1059
        %v1099 = vunpack.c.l.b16 %v1060
        %v1100 = vunpack.c.l.b16 %v1061
        %v1101 = vunpack.c.l.b16 %v1062
        %v1102 = vunpack.c.l.b16 %v1063
        %v1103 = vunpack.c.l.b16 %v1064
        %v1104 = vunpack.c.l.b16 %v1065
        %v1105 = vunpack.c.l.b16 %v1066
        %v1106 = vunpack.c.l.b16 %v1067
        %v1107 = vunpack.c.l.b16 %v1068
        %v1108 = vunpack.c.l.b16 %v1069
        %v1109 = vunpack.c.l.b16 %v1070
        %v1110 = vunpack.c.l.b16 %v1071
        %v1111 = vunpack.c.l.b16 %v1072
        %v1112 = vunpack.c.l.b16 %v1073
        %v1113 = vpack.c.b16 %v1098, %v1097
        %v1114 = vpack.c.b16 %v1100, %v1099
        %v1115 = vpack.c.b16 %v1102, %v1101
        %v1116 = vpack.c.b16 %v1104, %v1103
        %v1117 = vpack.c.b16 %v1106, %v1105
        %v1118 = vpack.c.b16 %v1108, %v1107
        %v1119 = vpack.c.b16 %v1110, %v1109
        %v1120 = vpack.c.b16 %v1112, %v1111
        %1129 = vmatprep.subr.bf16.mxu0 0
        %1130 = vmatpush1.bf16.msra.mxu0 %v1113
        %1131 = vmatprep.subr.bf16.mxu0 0
        %1132 = vmatpush1.bf16.msra.mxu0 %v1114
        %1133 = vmatprep.subr.bf16.mxu0 0
        %1134 = vmatpush1.bf16.msra.mxu0 %v1115
        %1135 = vmatprep.subr.bf16.mxu0 0
        %1136 = vmatpush1.bf16.msra.mxu0 %v1116
        %1137 = vmatprep.subr.bf16.mxu0 0
        %1138 = vmatpush1.bf16.msra.mxu0 %v1117
        %1139 = vmatprep.subr.bf16.mxu0 0
        %1140 = vmatpush1.bf16.msra.mxu0 %v1118
        %1141 = vmatprep.subr.bf16.mxu0 0
        %1142 = vmatpush1.bf16.msra.mxu0 %v1119
        %1143 = vmatprep.subr.bf16.mxu0 0
        %1144 = vmatpush1.bf16.msra.mxu0 %v1120
        %1145 = vmatprep.subr.bf16.mxu0 0
        %1146 = vmatpush1.bf16.msra.mxu0 0
        %1147 = vmatprep.subr.bf16.mxu0 0
        %1148 = vmatpush1.bf16.msra.mxu0 0
        %1149 = vmatprep.subr.bf16.mxu0 0
        %1150 = vmatpush1.bf16.msra.mxu0 0
        %1151 = vmatprep.subr.bf16.mxu0 0
        %1152 = vmatpush1.bf16.msra.mxu0 0
        %1153 = vmatprep.subr.bf16.mxu0 0
        %1154 = vmatpush1.bf16.msra.mxu0 0
        %1155 = vmatprep.subr.bf16.mxu0 0
        %1156 = vmatpush1.bf16.msra.mxu0 0
        %1157 = vmatprep.subr.bf16.mxu0 0
        %1158 = vmatpush1.bf16.msra.mxu0 0
        %1159 = vmatprep.subr.bf16.mxu0 0
        %1160 = vmatpush1.bf16.msra.mxu0 0
        %1161 = vmatprep.mubr.bf16.mxu0 0
        %1162 = vmatmul.mubr.bf16.gmra.mrb[0].mxu0 %v1057
        %v1163 = vpop.f32.mrb[0].mxu0
        %v1164 = vadd.f32 %v1079, %v1163
        %v1165 = vpop.f32.mrb[0].mxu0
        %v1166 = vpop.f32.mrb[0].mxu0
        %v1167 = vpop.f32.mrb[0].mxu0
        %1168 = vdwg.mxu0
        %v1169 = vrot.slane %v1164, 4
        %v1170 = vadd.f32 %v1164, %v1169
        %v1171 = vrot.slane %v1170, 2
        %v1172 = vadd.f32 %v1170, %v1171
        %v1173 = vrot.slane %v1172, 1
        %v1174 = vadd.f32 %v1172, %v1173
        %v1175 = vrcp.pop 8.0
        %v1176 = vmul.f32 %v1174, %v1175
        %v1177 = vpack.c.bf16 %v1176, %v1176
        %v1178 = vld [vmem:[#allocation14] sm:$0xf]
        %v1179 = vld [vmem:[#allocation14 + $0x4] sm:$0xf]
        %v1180 = vld [vmem:[#allocation14 + $0x8] sm:$0xf]
        %v1181 = vld [vmem:[#allocation14 + $0xc] sm:$0xf]
        %v1182 = vld [vmem:[#allocation14 + $0x10] sm:$0xf]
        %v1183 = vld [vmem:[#allocation14 + $0x14] sm:$0xf]
        %v1184 = vld [vmem:[#allocation14 + $0x18] sm:$0xf]
        %v1185 = vld [vmem:[#allocation14 + $0x1c] sm:$0xf]
        %v1186 = vld [vmem:[#allocation14 + $0x20] sm:$0xf]
        %v1187 = vld [vmem:[#allocation14 + $0x24] sm:$0xf]
        %v1188 = vld [vmem:[#allocation14 + $0x28] sm:$0xf]
        %v1189 = vld [vmem:[#allocation14 + $0x2c] sm:$0xf]
        %v1190 = vld [vmem:[#allocation14 + $0x30] sm:$0xf]
        %v1191 = vld [vmem:[#allocation14 + $0x34] sm:$0xf]
        %v1192 = vld [vmem:[#allocation14 + $0x38] sm:$0xf]
        %v1193 = vld [vmem:[#allocation14 + $0x3c] sm:$0xf]
        %v1194 = vld [vmem:[%s10] sm:$0x1]
        %v1211 = vunpack.c.l.b16 %v1178
        %v1212 = vunpack.c.l.b16 %v1179
        %v1213 = vunpack.c.l.b16 %v1180
        %v1214 = vunpack.c.l.b16 %v1181
        %v1215 = vunpack.c.l.b16 %v1182
        %v1216 = vunpack.c.l.b16 %v1183
        %v1217 = vunpack.c.l.b16 %v1184
        %v1218 = vunpack.c.l.b16 %v1185
        %v1219 = vunpack.c.l.b16 %v1186
        %v1220 = vunpack.c.l.b16 %v1187
        %v1221 = vunpack.c.l.b16 %v1188
        %v1222 = vunpack.c.l.b16 %v1189
        %v1223 = vunpack.c.l.b16 %v1190
        %v1224 = vunpack.c.l.b16 %v1191
        %v1225 = vunpack.c.l.b16 %v1192
        %v1226 = vunpack.c.l.b16 %v1193
        %v1227 = vpack.c.b16 %v1212, %v1211
        %v1228 = vpack.c.b16 %v1214, %v1213
        %v1229 = vpack.c.b16 %v1216, %v1215
        %v1230 = vpack.c.b16 %v1218, %v1217
        %v1231 = vpack.c.b16 %v1220, %v1219
        %v1232 = vpack.c.b16 %v1222, %v1221
        %v1233 = vpack.c.b16 %v1224, %v1223
        %v1234 = vpack.c.b16 %v1226, %v1225
        %1243 = vmatprep.subr.bf16.mxu0 0
        %1244 = vmatpush1.bf16.msra.mxu0 %v1227
        %1245 = vmatprep.subr.bf16.mxu0 0
        %1246 = vmatpush1.bf16.msra.mxu0 %v1228
        %1247 = vmatprep.subr.bf16.mxu0 0
        %1248 = vmatpush1.bf16.msra.mxu0 %v1229
        %1249 = vmatprep.subr.bf16.mxu0 0
        %1250 = vmatpush1.bf16.msra.mxu0 %v1230
        %1251 = vmatprep.subr.bf16.mxu0 0
        %1252 = vmatpush1.bf16.msra.mxu0 %v1231
        %1253 = vmatprep.subr.bf16.mxu0 0
        %1254 = vmatpush1.bf16.msra.mxu0 %v1232
        %1255 = vmatprep.subr.bf16.mxu0 0
        %1256 = vmatpush1.bf16.msra.mxu0 %v1233
        %1257 = vmatprep.subr.bf16.mxu0 0
        %1258 = vmatpush1.bf16.msra.mxu0 %v1234
        %1259 = vmatprep.subr.bf16.mxu0 0
        %1260 = vmatpush1.bf16.msra.mxu0 0
        %1261 = vmatprep.subr.bf16.mxu0 0
        %1262 = vmatpush1.bf16.msra.mxu0 0
        %1263 = vmatprep.subr.bf16.mxu0 0
        %1264 = vmatpush1.bf16.msra.mxu0 0
        %1265 = vmatprep.subr.bf16.mxu0 0
        %1266 = vmatpush1.bf16.msra.mxu0 0
        %1267 = vmatprep.subr.bf16.mxu0 0
        %1268 = vmatpush1.bf16.msra.mxu0 0
        %1269 = vmatprep.subr.bf16.mxu0 0
        %1270 = vmatpush1.bf16.msra.mxu0 0
        %1271 = vmatprep.subr.bf16.mxu0 0
        %1272 = vmatpush1.bf16.msra.mxu0 0
        %1273 = vmatprep.subr.bf16.mxu0 0
        %1274 = vmatpush1.bf16.msra.mxu0 0
        %1275 = vmatprep.mubr.bf16.mxu0 0
        %1276 = vmatmul.mubr.bf16.gmra.mrb[0].mxu0 %v1177
        %v1277 = vpop.f32.mrb[0].mxu0
        %v1278 = vadd.f32 %v1194, %v1277
        %v1279 = vpop.f32.mrb[0].mxu0
        %v1280 = vpop.f32.mrb[0].mxu0
        %v1281 = vpop.f32.mrb[0].mxu0
        %1282 = vdwg.mxu0
        %1283 = vst [vmem:[%s500] sm:$0x1] %v1278
        %s1284 = sand.u32 %s276, 1
        %s1285 = scalar_lea.sflag [#allocation4], %s1284
        %s1286 = sand.u32 %s276, 1
        %s1287 = scalar_lea.vmem [#allocation16], %s1286
        // Predicated region
        $region97: #{tpu_custom_call.1} parent=63 // pred_check
          %p1288 = pneg %p286
        $region98: #{tpu_custom_call.1} parent=63 // pred_check_branch
          %1290 = sbr.rel (%p1288) target = $region100
        $region99: #{tpu_custom_call.1} parent=63 // pred_region
          %s1292 = ssub.s32 16, 16
          %1293 = vsyncadd %s1285, %s1292
          %s1294 = smul.addr %s32, 16
          %s1295 = scalar_lea.hbm %s11, %s1294
          %s1297 = sshll.u32 %s1287, 4
          %s1298 = int_to_ptr.vmem [resolvable:$true] %s1297
          %1300 = dma.vmem_to_hbm [thread:$0]  %s1298, 16, %s1295, %s1285
        $region100: #{tpu_custom_call.1} parent=63 // pred_fallthru
          _
      $region64: #{tpu_custom_call.1} parent=5 // pred_fallthru
        _
      %p1301 = scmp.le.s32.totalorder 2, %s27
      // Predicated region
      $region101: #{tpu_custom_call.1} parent=5 // pred_check
        %p1302 = pneg %p1301
      $region102: #{tpu_custom_call.1} parent=5 // pred_check_branch
        %1304 = sbr.rel (%p1302) target = $region104
      $region103: #{tpu_custom_call.1} parent=5 // pred_region
        %s1305 = ssub.s32 %s27, 2
        // Predicated region
        $region105: #{tpu_custom_call.1} parent=103 // pred_check
          %p1306 = pneg %p292
        $region106: #{tpu_custom_call.1} parent=103 // pred_check_branch
          %1308 = sbr.rel (%p1306) target = $region108
        $region107: #{tpu_custom_call.1} parent=103 // pred_region
          %s1309 = sand.u32 %s277, 1
          %s1310 = scalar_lea.sflag [#allocation4], %s1309
          %s1311 = sand.u32 %s277, 1
          %s1312 = scalar_lea.vmem [#allocation16], %s1311
          %1313 = dma.done %s1310, 16
        $region108: #{tpu_custom_call.1} parent=103 // pred_fallthru
          _
      $region104: #{tpu_custom_call.1} parent=5 // pred_fallthru
        _
    $region6: #{tpu_custom_call.1} parent=1 // loop_footer
      %s31 = sadd.s32 1, %s27
    $region7: #{tpu_custom_call.1} parent=1 // loop_footer_branch
      %26 = sbr.rel target = $region3
    $region8: #{tpu_custom_call.1} parent=1 // loop_exit
      _
    %1314 = vsyncpa [#allocation3], 1
    %s1315 = scalar_lea.sflag [#allocation3], 1
    %1316 = vsyncpa %s1315, 1
    %1317 = vsyncpa [#allocation6], 1
    %1318 = vsyncpa [#allocation9], 1
    %1319 = vsyncpa [#allocation12], 1
    %1320 = vsyncpa [#allocation15], 1
    %1321 = vsyncpa [#allocation4], 1
    %s1322 = scalar_lea.sflag [#allocation4], 1
    %1323 = vsyncpa %s1322, 1

</llo_original>
